<compile_context>
chip_gen: v7x
topology: tpu7x:2x2x1
jax: 0.10.0
libtpu: 0.0.40
codegen_flags: <defaults>
</compile_context>

<pallas_src>
import jax
import jax.numpy as jnp
from jax import lax
from jax.experimental import pallas as pl
from jax.experimental.pallas import tpu as pltpu

K = 3            # conv3x3
PAD = K // 2     # padding = 1
BN_EPS = 1e-5    # PyTorch BatchNorm2d default


# ----------------------------------------------------------------------------
# Kernel
# ----------------------------------------------------------------------------
def _basic_block_kernel(x_ref, w1_ref, b1_ref, w2_ref, b2_ref, o_ref, pad_ref):
    # x_ref : (1, H, W, C)   f32   one NHWC image
    # w*_ref: (K*K*C, C)     bf16  im2col-packed conv weights, BN folded in
    # b*_ref: (1, C)         f32   folded BN bias
    # o_ref : (1, H, W, C)   f32
    # pad_ref: (H+2, W+2, C) bf16  VMEM scratch with zero halo, reused by both convs
    _, H, W, C = x_ref.shape
    HW = H * W
    Hp = H + 2 * PAD
    Wp = W + 2 * PAD
    pdt = pad_ref.dtype

    # Zero ONLY the 1-px halo border strips; the interior is fully overwritten
    # below.  Done every grid step (cheap) rather than @pl.when(pid==0) so a
    # core that never executes grid step 0 still sees a zeroed halo.
    pad_ref[0:PAD, :, :] = jnp.zeros((PAD, Wp, C), pdt)
    pad_ref[PAD + H:Hp, :, :] = jnp.zeros((PAD, Wp, C), pdt)
    pad_ref[:, 0:PAD, :] = jnp.zeros((Hp, PAD, C), pdt)
    pad_ref[:, PAD + W:Wp, :] = jnp.zeros((Hp, PAD, C), pdt)

    def conv3x3_bias(w_ref, b_ref):
        # im2col built once -> a single MXU matmul with contraction depth 9*C
        # (instead of 9 depth-C matmuls); bf16 operands, f32 accumulation.
        cols = []
        for kh in range(K):
            for kw in range(K):
                cols.append(pad_ref[kh:kh + H, kw:kw + W, :].reshape(HW, C))
        col = jnp.concatenate(cols, axis=-1)                    # (HW, 9C) bf16
        acc = jnp.dot(col, w_ref[...], preferred_element_type=jnp.float32)
        return acc + b_ref[...]                                 # (HW, C) f32

    # ---- conv1 + bn1 (folded) + relu ----------------------------------------
    pad_ref[PAD:PAD + H, PAD:PAD + W, :] = x_ref[0].astype(pdt)
    h1 = jnp.maximum(conv3x3_bias(w1_ref, b1_ref), 0.0)

    # ---- conv2 + bn2 (folded) + residual + relu ------------------------------
    pad_ref[PAD:PAD + H, PAD:PAD + W, :] = h1.reshape(H, W, C).astype(pdt)
    residual = x_ref[0].astype(jnp.float32).reshape(HW, C)      # f32 residual
    out = jnp.maximum(conv3x3_bias(w2_ref, b2_ref) + residual, 0.0)
    o_ref[0] = out.reshape(H, W, C).astype(o_ref.dtype)


# ----------------------------------------------------------------------------
# Wrapper
# ----------------------------------------------------------------------------
def _fold_bn(w, gamma, beta, mean, var, eps=BN_EPS):
    """Fold eval-mode BatchNorm into the preceding conv: returns (w', bias)."""
    inv = gamma / jnp.sqrt(var + eps)                     # (Cout,)
    w_f = w * inv[:, None, None, None]                    # per-out-channel scale
    b_f = beta - mean * inv
    return w_f, b_f


def _pack_weight_im2col(w_f):
    # (Cout, Cin, K, K) -> (K*K*Cin, Cout); row order (kh, kw, cin) matches the
    # kernel's im2col column order.
    cout, cin = w_f.shape[0], w_f.shape[1]
    return jnp.transpose(w_f, (2, 3, 1, 0)).reshape(K * K * cin, cout)


def basic_block_nhwc(x_nhwc, params):
    """BasicBlock forward, NHWC in / NHWC out (stride=1, identity residual)."""
    x_nhwc = x_nhwc.astype(jnp.float32)
    N, H, W, C = x_nhwc.shape

    w1f, b1f = _fold_bn(params["conv1_w"], params["bn1_gamma"], params["bn1_beta"],
                        params["bn1_mean"], params["bn1_var"])
    w2f, b2f = _fold_bn(params["conv2_w"], params["bn2_gamma"], params["bn2_beta"],
                        params["bn2_mean"], params["bn2_var"])
    # bf16 weights feed the MXU at native rate; biases stay f32.
    w1p = _pack_weight_im2col(w1f).astype(jnp.bfloat16)   # (9C, C)
    w2p = _pack_weight_im2col(w2f).astype(jnp.bfloat16)
    b1p = b1f.reshape(1, C).astype(jnp.float32)
    b2p = b2f.reshape(1, C).astype(jnp.float32)

    Hp, Wp = H + 2 * PAD, W + 2 * PAD
    kcc = K * K * C

    return pl.pallas_call(
        _basic_block_kernel,
        out_shape=jax.ShapeDtypeStruct((N, H, W, C), jnp.float32),
        grid=(N,),
        in_specs=[
            pl.BlockSpec((1, H, W, C), lambda n: (n, 0, 0, 0)),   # x
            pl.BlockSpec((kcc, C), lambda n: (0, 0)),             # w1 (folded)
            pl.BlockSpec((1, C), lambda n: (0, 0)),               # b1
            pl.BlockSpec((kcc, C), lambda n: (0, 0)),             # w2 (folded)
            pl.BlockSpec((1, C), lambda n: (0, 0)),               # b2
        ],
        out_specs=pl.BlockSpec((1, H, W, C), lambda n: (n, 0, 0, 0)),
        scratch_shapes=[
            pltpu.VMEM((Hp, Wp, C), jnp.bfloat16),   # shared padded plane
        ],
        compiler_params=pltpu.CompilerParams(
            dimension_semantics=("parallel",),        # only matters on 2-TC chips
            vmem_limit_bytes=32 * 1024 * 1024),
    )(x_nhwc, w1p, b1p, w2p, b2p)


@jax.jit
def basic_block(x, params):
    """Drop-in NCHW BasicBlock forward matching the PyTorch module.

    x: (N, C, H, W) f32 -> (N, C, H, W) f32.  Prefer `basic_block_nhwc` inside
    an NHWC network to avoid the layout round trips.
    """
    x_nhwc = jnp.transpose(x, (0, 2, 3, 1))
    out_nhwc = basic_block_nhwc(x_nhwc, params)
    return jnp.transpose(out_nhwc, (0, 3, 1, 2))


# ----------------------------------------------------------------------------
# Pure-JAX reference mirroring the PyTorch forward (eval-mode BN, f32)
# ----------------------------------------------------------------------------
def basic_block_reference(x, params):
    def bn(y, g, b, m, v):
        inv = g / jnp.sqrt(v + BN_EPS)
        return y * inv[None, :, None, None] + (b - m * inv)[None, :, None, None]

    def conv(y, w):
        return lax.conv_general_dilated(
            y, w, window_strides=(1, 1),
            padding=[(PAD, PAD), (PAD, PAD)],
            dimension_numbers=("NCHW", "OIHW", "NCHW"),
            precision=lax.Precision.HIGHEST)

    out = jax.nn.relu(bn(conv(x, params["conv1_w"]),
                         params["bn1_gamma"], params["bn1_beta"],
                         params["bn1_mean"], params["bn1_var"]))
    out = bn(conv(out, params["conv2_w"]),
             params["bn2_gamma"], params["bn2_beta"],
             params["bn2_mean"], params["bn2_var"])
    return jax.nn.relu(out + x)


# ----------------------------------------------------------------------------
if __name__ == "__main__":
    key = jax.random.PRNGKey(0)
    keys = jax.random.split(key, 12)

    N, C, H, W = 2, 4, 16, 16
    x = jax.random.normal(keys[0], (N, C, H, W), dtype=jnp.float32)

    # Deterministic Conv2d(C, C, 3, bias=False)-like weights and BN stats.
    fan_in = C * K * K
    bound = 1.0 / (fan_in ** 0.5)
    params = {
        "conv1_w": jax.random.uniform(keys[1], (C, C, K, K), jnp.float32, -bound, bound),
        "conv2_w": jax.random.uniform(keys[2], (C, C, K, K), jnp.float32, -bound, bound),
        "bn1_gamma": jax.random.uniform(keys[3], (C,), jnp.float32, 0.5, 1.5),
        "bn1_beta": 0.1 * jax.random.normal(keys[4], (C,), jnp.float32),
        "bn1_mean": 0.1 * jax.random.normal(keys[5], (C,), jnp.float32),
        "bn1_var": jax.random.uniform(keys[6], (C,), jnp.float32, 0.5, 1.5),
        "bn2_gamma": jax.random.uniform(keys[7], (C,), jnp.float32, 0.5, 1.5),
        "bn2_beta": 0.1 * jax.random.normal(keys[8], (C,), jnp.float32),
        "bn2_mean": 0.1 * jax.random.normal(keys[9], (C,), jnp.float32),
        "bn2_var": jax.random.uniform(keys[10], (C,), jnp.float32, 0.5, 1.5),
    }

    out = basic_block(x, params)
    out = jax.block_until_ready(out)

    ref = basic_block_reference(x, params)
    assert out.shape == (N, C, H, W)
    err = float(jnp.max(jnp.abs(out - ref)))
    # bf16 MXU operands (f32 accumulation) vs. the f32-HIGHEST reference:
    # tolerance loosened accordingly (see review's correctness note).
    assert jnp.allclose(out, ref, atol=3e-2, rtol=3e-2), \
        f"mismatch vs reference, max abs err {err}"

    print("KERNEL_OK")
</pallas_src>

<mosaic_0001>
module attributes {stable_mosaic.version = 11 : i64} {
  func.func @_basic_block_kernel(%arg0: i32, %arg1: memref<1x16x16x4xf32, #tpu.memory_space<vmem>>, %arg2: memref<36x4xbf16, #tpu.memory_space<vmem>>, %arg3: memref<1x4xf32, #tpu.memory_space<vmem>>, %arg4: memref<36x4xbf16, #tpu.memory_space<vmem>>, %arg5: memref<1x4xf32, #tpu.memory_space<vmem>>, %arg6: memref<1x16x16x4xf32, #tpu.memory_space<vmem>>, %arg7: memref<18x18x4xbf16, #tpu.memory_space<vmem>>) attributes {dimension_semantics = [#tpu.dimension_semantics<parallel>], iteration_bounds = array<i64: 2>, scalar_prefetch = 0 : i64, scratch_operands = 1 : i64, tpu.core_type = #tpu.core_type<tc>, window_params = [{transform_indices = @transform_0, window_bounds = array<i64: 1, 16, 16, 4>}, {pipeline_mode = #tpu.pipeline_mode<synchronous>, transform_indices = @transform_1, window_bounds = array<i64: 36, 4>}, {pipeline_mode = #tpu.pipeline_mode<synchronous>, transform_indices = @transform_2, window_bounds = array<i64: 1, 4>}, {pipeline_mode = #tpu.pipeline_mode<synchronous>, transform_indices = @transform_3, window_bounds = array<i64: 36, 4>}, {pipeline_mode = #tpu.pipeline_mode<synchronous>, transform_indices = @transform_4, window_bounds = array<i64: 1, 4>}, {transform_indices = @transform_5, window_bounds = array<i64: 1, 16, 16, 4>}]} {
    %cst = arith.constant 0.000000e+00 : bf16
    %0 = vector.broadcast %cst : bf16 to vector<1x18x4xbf16>
    %c0 = arith.constant 0 : index
    %c0_0 = arith.constant 0 : index
    %c0_1 = arith.constant 0 : index
    %1 = vector.load %arg7[%c0, %c0_0, %c0_1] : memref<18x18x4xbf16, #tpu.memory_space<vmem>>, vector<1x18x4xbf16>
    tpu.vector_store %arg7[%c0, %c0_0, %c0_1], %0 {strides = array<i32>} : memref<18x18x4xbf16, #tpu.memory_space<vmem>>, vector<1x18x4xbf16>,
    %cst_2 = arith.constant 0.000000e+00 : bf16
    %2 = vector.broadcast %cst_2 : bf16 to vector<1x18x4xbf16>
    %c17 = arith.constant 17 : index
    %c0_3 = arith.constant 0 : index
    %c0_4 = arith.constant 0 : index
    %3 = vector.load %arg7[%c17, %c0_3, %c0_4] : memref<18x18x4xbf16, #tpu.memory_space<vmem>>, vector<1x18x4xbf16>
    tpu.vector_store %arg7[%c17, %c0_3, %c0_4], %2 {strides = array<i32>} : memref<18x18x4xbf16, #tpu.memory_space<vmem>>, vector<1x18x4xbf16>,
    %cst_5 = arith.constant 0.000000e+00 : bf16
    %4 = vector.broadcast %cst_5 : bf16 to vector<18x1x4xbf16>
    %c0_6 = arith.constant 0 : index
    %c0_7 = arith.constant 0 : index
    %c0_8 = arith.constant 0 : index
    %5 = vector.load %arg7[%c0_6, %c0_7, %c0_8] : memref<18x18x4xbf16, #tpu.memory_space<vmem>>, vector<18x1x4xbf16>
    tpu.vector_store %arg7[%c0_6, %c0_7, %c0_8], %4 {strides = array<i32>} : memref<18x18x4xbf16, #tpu.memory_space<vmem>>, vector<18x1x4xbf16>,
    %cst_9 = arith.constant 0.000000e+00 : bf16
    %6 = vector.broadcast %cst_9 : bf16 to vector<18x1x4xbf16>
    %c0_10 = arith.constant 0 : index
    %c17_11 = arith.constant 17 : index
    %c0_12 = arith.constant 0 : index
    %7 = vector.load %arg7[%c0_10, %c17_11, %c0_12] : memref<18x18x4xbf16, #tpu.memory_space<vmem>>, vector<18x1x4xbf16>
    tpu.vector_store %arg7[%c0_10, %c17_11, %c0_12], %6 {strides = array<i32>} : memref<18x18x4xbf16, #tpu.memory_space<vmem>>, vector<18x1x4xbf16>,
    %c0_13 = arith.constant 0 : index
    %c0_14 = arith.constant 0 : index
    %c0_15 = arith.constant 0 : index
    %c0_16 = arith.constant 0 : index
    %8 = vector.load %arg1[%c0_13, %c0_14, %c0_15, %c0_16] : memref<1x16x16x4xf32, #tpu.memory_space<vmem>>, vector<1x16x16x4xf32>
    %9 = vector.shape_cast %8 : vector<1x16x16x4xf32> to vector<16x16x4xf32>
    %10 = arith.truncf %9 : vector<16x16x4xf32> to vector<16x16x4xbf16>
    %c1 = arith.constant 1 : index
    %c1_17 = arith.constant 1 : index
    %c0_18 = arith.constant 0 : index
    %11 = vector.load %arg7[%c1, %c1_17, %c0_18] : memref<18x18x4xbf16, #tpu.memory_space<vmem>>, vector<16x16x4xbf16>
    tpu.vector_store %arg7[%c1, %c1_17, %c0_18], %10 {strides = array<i32>} : memref<18x18x4xbf16, #tpu.memory_space<vmem>>, vector<16x16x4xbf16>,
    %c0_19 = arith.constant 0 : index
    %c0_20 = arith.constant 0 : index
    %c0_21 = arith.constant 0 : index
    %12 = vector.load %arg7[%c0_19, %c0_20, %c0_21] : memref<18x18x4xbf16, #tpu.memory_space<vmem>>, vector<16x16x4xbf16>
    %13 = vector.shape_cast %12 : vector<16x16x4xbf16> to vector<256x4xbf16>
    %c0_22 = arith.constant 0 : index
    %c1_23 = arith.constant 1 : index
    %c0_24 = arith.constant 0 : index
    %14 = vector.load %arg7[%c0_22, %c1_23, %c0_24] : memref<18x18x4xbf16, #tpu.memory_space<vmem>>, vector<16x16x4xbf16>
    %15 = vector.shape_cast %14 : vector<16x16x4xbf16> to vector<256x4xbf16>
    %c0_25 = arith.constant 0 : index
    %c2 = arith.constant 2 : index
    %c0_26 = arith.constant 0 : index
    %16 = vector.load %arg7[%c0_25, %c2, %c0_26] : memref<18x18x4xbf16, #tpu.memory_space<vmem>>, vector<16x16x4xbf16>
    %17 = vector.shape_cast %16 : vector<16x16x4xbf16> to vector<256x4xbf16>
    %c1_27 = arith.constant 1 : index
    %c0_28 = arith.constant 0 : index
    %c0_29 = arith.constant 0 : index
    %18 = vector.load %arg7[%c1_27, %c0_28, %c0_29] : memref<18x18x4xbf16, #tpu.memory_space<vmem>>, vector<16x16x4xbf16>
    %19 = vector.shape_cast %18 : vector<16x16x4xbf16> to vector<256x4xbf16>
    %c1_30 = arith.constant 1 : index
    %c1_31 = arith.constant 1 : index
    %c0_32 = arith.constant 0 : index
    %20 = vector.load %arg7[%c1_30, %c1_31, %c0_32] : memref<18x18x4xbf16, #tpu.memory_space<vmem>>, vector<16x16x4xbf16>
    %21 = vector.shape_cast %20 : vector<16x16x4xbf16> to vector<256x4xbf16>
    %c1_33 = arith.constant 1 : index
    %c2_34 = arith.constant 2 : index
    %c0_35 = arith.constant 0 : index
    %22 = vector.load %arg7[%c1_33, %c2_34, %c0_35] : memref<18x18x4xbf16, #tpu.memory_space<vmem>>, vector<16x16x4xbf16>
    %23 = vector.shape_cast %22 : vector<16x16x4xbf16> to vector<256x4xbf16>
    %c2_36 = arith.constant 2 : index
    %c0_37 = arith.constant 0 : index
    %c0_38 = arith.constant 0 : index
    %24 = vector.load %arg7[%c2_36, %c0_37, %c0_38] : memref<18x18x4xbf16, #tpu.memory_space<vmem>>, vector<16x16x4xbf16>
    %25 = vector.shape_cast %24 : vector<16x16x4xbf16> to vector<256x4xbf16>
    %c2_39 = arith.constant 2 : index
    %c1_40 = arith.constant 1 : index
    %c0_41 = arith.constant 0 : index
    %26 = vector.load %arg7[%c2_39, %c1_40, %c0_41] : memref<18x18x4xbf16, #tpu.memory_space<vmem>>, vector<16x16x4xbf16>
    %27 = vector.shape_cast %26 : vector<16x16x4xbf16> to vector<256x4xbf16>
    %c2_42 = arith.constant 2 : index
    %c2_43 = arith.constant 2 : index
    %c0_44 = arith.constant 0 : index
    %28 = vector.load %arg7[%c2_42, %c2_43, %c0_44] : memref<18x18x4xbf16, #tpu.memory_space<vmem>>, vector<16x16x4xbf16>
    %29 = vector.shape_cast %28 : vector<16x16x4xbf16> to vector<256x4xbf16>
    %30 = tpu.concatenate %13, %15, %17, %19, %21, %23, %25, %27, %29 in 1 : vector<256x4xbf16>, vector<256x4xbf16>, vector<256x4xbf16>, vector<256x4xbf16>, vector<256x4xbf16>, vector<256x4xbf16>, vector<256x4xbf16>, vector<256x4xbf16>, vector<256x4xbf16> -> vector<256x36xbf16>
    %c0_45 = arith.constant 0 : index
    %c0_46 = arith.constant 0 : index
    %31 = vector.load %arg2[%c0_45, %c0_46] : memref<36x4xbf16, #tpu.memory_space<vmem>>, vector<36x4xbf16>
    %cst_47 = arith.constant dense<0.000000e+00> : vector<256x4xf32>
    %32 = tpu.matmul %30, %31, %cst_47 {dimension_numbers = #tpu.dot_dimension_numbers<[1], [0], [0], [1], [0, 0, 1, 1], [], []>} : vector<256x36xbf16>, vector<36x4xbf16>, vector<256x4xf32> -> vector<256x4xf32>
    %c0_48 = arith.constant 0 : index
    %c0_49 = arith.constant 0 : index
    %33 = vector.load %arg3[%c0_48, %c0_49] : memref<1x4xf32, #tpu.memory_space<vmem>>, vector<1x4xf32>
    %34 = vector.broadcast %33 : vector<1x4xf32> to vector<256x4xf32>
    %35 = arith.addf %32, %34 : vector<256x4xf32>
    %cst_50 = arith.constant 0.000000e+00 : f32
    %36 = vector.broadcast %cst_50 : f32 to vector<256x4xf32>
    %37 = arith.maximumf %35, %36 : vector<256x4xf32>
    %38 = vector.shape_cast %37 : vector<256x4xf32> to vector<16x16x4xf32>
    %39 = arith.truncf %38 : vector<16x16x4xf32> to vector<16x16x4xbf16>
    %c1_51 = arith.constant 1 : index
    %c1_52 = arith.constant 1 : index
    %c0_53 = arith.constant 0 : index
    %40 = vector.load %arg7[%c1_51, %c1_52, %c0_53] : memref<18x18x4xbf16, #tpu.memory_space<vmem>>, vector<16x16x4xbf16>
    tpu.vector_store %arg7[%c1_51, %c1_52, %c0_53], %39 {strides = array<i32>} : memref<18x18x4xbf16, #tpu.memory_space<vmem>>, vector<16x16x4xbf16>,
    %c0_54 = arith.constant 0 : index
    %c0_55 = arith.constant 0 : index
    %c0_56 = arith.constant 0 : index
    %c0_57 = arith.constant 0 : index
    %41 = vector.load %arg1[%c0_54, %c0_55, %c0_56, %c0_57] : memref<1x16x16x4xf32, #tpu.memory_space<vmem>>, vector<1x16x16x4xf32>
    %42 = vector.shape_cast %41 : vector<1x16x16x4xf32> to vector<16x16x4xf32>
    %43 = vector.shape_cast %42 : vector<16x16x4xf32> to vector<256x4xf32>
    %c0_58 = arith.constant 0 : index
    %c0_59 = arith.constant 0 : index
    %c0_60 = arith.constant 0 : index
    %44 = vector.load %arg7[%c0_58, %c0_59, %c0_60] : memref<18x18x4xbf16, #tpu.memory_space<vmem>>, vector<16x16x4xbf16>
    %45 = vector.shape_cast %44 : vector<16x16x4xbf16> to vector<256x4xbf16>
    %c0_61 = arith.constant 0 : index
    %c1_62 = arith.constant 1 : index
    %c0_63 = arith.constant 0 : index
    %46 = vector.load %arg7[%c0_61, %c1_62, %c0_63] : memref<18x18x4xbf16, #tpu.memory_space<vmem>>, vector<16x16x4xbf16>
    %47 = vector.shape_cast %46 : vector<16x16x4xbf16> to vector<256x4xbf16>
    %c0_64 = arith.constant 0 : index
    %c2_65 = arith.constant 2 : index
    %c0_66 = arith.constant 0 : index
    %48 = vector.load %arg7[%c0_64, %c2_65, %c0_66] : memref<18x18x4xbf16, #tpu.memory_space<vmem>>, vector<16x16x4xbf16>
    %49 = vector.shape_cast %48 : vector<16x16x4xbf16> to vector<256x4xbf16>
    %c1_67 = arith.constant 1 : index
    %c0_68 = arith.constant 0 : index
    %c0_69 = arith.constant 0 : index
    %50 = vector.load %arg7[%c1_67, %c0_68, %c0_69] : memref<18x18x4xbf16, #tpu.memory_space<vmem>>, vector<16x16x4xbf16>
    %51 = vector.shape_cast %50 : vector<16x16x4xbf16> to vector<256x4xbf16>
    %c1_70 = arith.constant 1 : index
    %c1_71 = arith.constant 1 : index
    %c0_72 = arith.constant 0 : index
    %52 = vector.load %arg7[%c1_70, %c1_71, %c0_72] : memref<18x18x4xbf16, #tpu.memory_space<vmem>>, vector<16x16x4xbf16>
    %53 = vector.shape_cast %52 : vector<16x16x4xbf16> to vector<256x4xbf16>
    %c1_73 = arith.constant 1 : index
    %c2_74 = arith.constant 2 : index
    %c0_75 = arith.constant 0 : index
    %54 = vector.load %arg7[%c1_73, %c2_74, %c0_75] : memref<18x18x4xbf16, #tpu.memory_space<vmem>>, vector<16x16x4xbf16>
    %55 = vector.shape_cast %54 : vector<16x16x4xbf16> to vector<256x4xbf16>
    %c2_76 = arith.constant 2 : index
    %c0_77 = arith.constant 0 : index
    %c0_78 = arith.constant 0 : index
    %56 = vector.load %arg7[%c2_76, %c0_77, %c0_78] : memref<18x18x4xbf16, #tpu.memory_space<vmem>>, vector<16x16x4xbf16>
    %57 = vector.shape_cast %56 : vector<16x16x4xbf16> to vector<256x4xbf16>
    %c2_79 = arith.constant 2 : index
    %c1_80 = arith.constant 1 : index
    %c0_81 = arith.constant 0 : index
    %58 = vector.load %arg7[%c2_79, %c1_80, %c0_81] : memref<18x18x4xbf16, #tpu.memory_space<vmem>>, vector<16x16x4xbf16>
    %59 = vector.shape_cast %58 : vector<16x16x4xbf16> to vector<256x4xbf16>
    %c2_82 = arith.constant 2 : index
    %c2_83 = arith.constant 2 : index
    %c0_84 = arith.constant 0 : index
    %60 = vector.load %arg7[%c2_82, %c2_83, %c0_84] : memref<18x18x4xbf16, #tpu.memory_space<vmem>>, vector<16x16x4xbf16>
    %61 = vector.shape_cast %60 : vector<16x16x4xbf16> to vector<256x4xbf16>
    %62 = tpu.concatenate %45, %47, %49, %51, %53, %55, %57, %59, %61 in 1 : vector<256x4xbf16>, vector<256x4xbf16>, vector<256x4xbf16>, vector<256x4xbf16>, vector<256x4xbf16>, vector<256x4xbf16>, vector<256x4xbf16>, vector<256x4xbf16>, vector<256x4xbf16> -> vector<256x36xbf16>
    %c0_85 = arith.constant 0 : index
    %c0_86 = arith.constant 0 : index
    %63 = vector.load %arg4[%c0_85, %c0_86] : memref<36x4xbf16, #tpu.memory_space<vmem>>, vector<36x4xbf16>
    %cst_87 = arith.constant dense<0.000000e+00> : vector<256x4xf32>
    %64 = tpu.matmul %62, %63, %cst_87 {dimension_numbers = #tpu.dot_dimension_numbers<[1], [0], [0], [1], [0, 0, 1, 1], [], []>} : vector<256x36xbf16>, vector<36x4xbf16>, vector<256x4xf32> -> vector<256x4xf32>
    %c0_88 = arith.constant 0 : index
    %c0_89 = arith.constant 0 : index
    %65 = vector.load %arg5[%c0_88, %c0_89] : memref<1x4xf32, #tpu.memory_space<vmem>>, vector<1x4xf32>
    %66 = vector.broadcast %65 : vector<1x4xf32> to vector<256x4xf32>
    %67 = arith.addf %64, %66 : vector<256x4xf32>
    %68 = arith.addf %67, %43 : vector<256x4xf32>
    %cst_90 = arith.constant 0.000000e+00 : f32
    %69 = vector.broadcast %cst_90 : f32 to vector<256x4xf32>
    %70 = arith.maximumf %68, %69 : vector<256x4xf32>
    %71 = vector.shape_cast %70 : vector<256x4xf32> to vector<16x16x4xf32>
    %c0_91 = arith.constant 0 : index
    %c0_92 = arith.constant 0 : index
    %c0_93 = arith.constant 0 : index
    %c0_94 = arith.constant 0 : index
    %72 = vector.load %arg6[%c0_91, %c0_92, %c0_93, %c0_94] : memref<1x16x16x4xf32, #tpu.memory_space<vmem>>, vector<1x16x16x4xf32>
    %73 = vector.shape_cast %72 : vector<1x16x16x4xf32> to vector<16x16x4xf32>
    %74 = vector.shape_cast %71 : vector<16x16x4xf32> to vector<1x16x16x4xf32>
    tpu.vector_store %arg6[%c0_91, %c0_92, %c0_93, %c0_94], %74 {strides = array<i32>} : memref<1x16x16x4xf32, #tpu.memory_space<vmem>>, vector<1x16x16x4xf32>,
    return
  }
  func.func @transform_0(%arg0: i32) -> (i32, i32, i32, i32) {
    %c0_i32 = arith.constant 0 : i32
    %c0_i32_0 = arith.constant 0 : i32
    %c0_i32_1 = arith.constant 0 : i32
    %c0_i32_2 = arith.constant 0 : i32
    return %arg0, %c0_i32, %c0_i32_0, %c0_i32_1 : i32, i32, i32, i32
  }
  func.func @transform_1(%arg0: i32) -> (i32, i32) {
    %c0_i32 = arith.constant 0 : i32
    %c0_i32_0 = arith.constant 0 : i32
    %c0_i32_1 = arith.constant 0 : i32
    return %c0_i32, %c0_i32_0 : i32, i32
  }
  func.func @transform_2(%arg0: i32) -> (i32, i32) {
    %c0_i32 = arith.constant 0 : i32
    %c0_i32_0 = arith.constant 0 : i32
    %c0_i32_1 = arith.constant 0 : i32
    return %c0_i32, %c0_i32_0 : i32, i32
  }
  func.func @transform_3(%arg0: i32) -> (i32, i32) {
    %c0_i32 = arith.constant 0 : i32
    %c0_i32_0 = arith.constant 0 : i32
    %c0_i32_1 = arith.constant 0 : i32
    return %c0_i32, %c0_i32_0 : i32, i32
  }
  func.func @transform_4(%arg0: i32) -> (i32, i32) {
    %c0_i32 = arith.constant 0 : i32
    %c0_i32_0 = arith.constant 0 : i32
    %c0_i32_1 = arith.constant 0 : i32
    return %c0_i32, %c0_i32_0 : i32, i32
  }
  func.func @transform_5(%arg0: i32) -> (i32, i32, i32, i32) {
    %c0_i32 = arith.constant 0 : i32
    %c0_i32_0 = arith.constant 0 : i32
    %c0_i32_1 = arith.constant 0 : i32
    %c0_i32_2 = arith.constant 0 : i32
    return %arg0, %c0_i32, %c0_i32_0, %c0_i32_1 : i32, i32, i32, i32
  }
}

</mosaic_0001>

<llo_original>
// kernel: basic_block.1
$region0: #{basic_block.1}
  #allocation0 [shape = 'u32[]', space=smem, size = 0x4, offset = 0x4, fixed_abs, tag = 'smem constant byte address 0x4 - core index']
  #allocation1 [shape = 'u32[144,128]{1,0:T(1,128)}', space=vmem, size = 0x12000, scoped, tag = 'internal scratch']
  #allocation2 [shape = 'bf16[18,18,4]{2,1,0:T(8,128)(2,1)}', space=vmem, size = 0x1b000, scoped, tag = 'scratch operand']
  %s0 = inlined_call_operand.vmem [shape: f32[2,16,16,4], index: 0, kind: input, shape index: {}]
  %s1 = inlined_call_operand.vmem [shape: bf16[36,4], index: 1, kind: input, shape index: {}]
  %s2 = inlined_call_operand.vmem [shape: f32[1,4], index: 2, kind: input, shape index: {}]
  %s3 = inlined_call_operand.vmem [shape: bf16[36,4], index: 3, kind: input, shape index: {}]
  %s4 = inlined_call_operand.vmem [shape: f32[1,4], index: 4, kind: input, shape index: {}]
  %s5 = inlined_call_operand.vmem [shape: f32[2,16,16,4], index: 5, kind: output, shape index: {}]
  %s6 = sld [smem:[#allocation0]]
  $region53: #{basic_block.1} parent=0
    _
  %s8 = ssub.s32 1, %s6
  %s9 = scalar_select 0, %s8, %s6
  loop: start=0, step=1, limit=4
  $region2: #{basic_block.1} parent=0 // loop_pre_header
    _
  $region3: #{basic_block.1} parent=0 // loop_header
    %s11 = sphi 0, %s15
    %p12 = scmp.ge.s32.totalorder %s11, 4
    %s21 = sphi 0, %s23
    %s24 = sphi 0, %s21
    %s25 = sphi 0, %s24
    %s41 = sphi 0, %s25
    %s45 = sphi 0, %s45
    %s47 = sphi 0, %s45
    %s48 = sphi 0, %s47
    %s62 = sphi 0, %s48
    %s66 = sphi 0, %s66
    %s68 = sphi 0, %s66
    %s69 = sphi 0, %s68
    %s83 = sphi 0, %s69
    %s87 = sphi 0, %s87
    %s89 = sphi 0, %s87
    %s90 = sphi 0, %s89
    %s104 = sphi 0, %s90
    %s108 = sphi 0, %s108
    %s110 = sphi 0, %s108
    %s111 = sphi 0, %s110
    %s125 = sphi 0, %s111
    %s131 = sphi 0, %s133
    %s134 = sphi 0, %s131
    %s135 = sphi 0, %s134
    %s151 = sphi 0, %s135
  $region4: #{basic_block.1} parent=0 // loop_header_branch
    %14 = sbr.rel (%p12) target = $region8
  $region5: #{basic_block.1} parent=0 // loop_body
    %s16 = ssub.s32 %s11, 1
    %s17 = ssub.s32 %s11, 2
    %s18 = sadd.s32 %s11, 1
    %s19 = ssub.s32 %s11, %s18
    %p20 = scmp.eq.s32.totalorder %s19, 0
    %s22 = sadd.s32 %s21, 1
    %s23 = scalar_select %p20, %s21, %s22
    %p26 = pneg %p20
    %p27 = scmp.eq.s32.totalorder %s11, 1
    %p28 = por %p26, %p27
    %p29 = scmp.ne.s32.totalorder %s21, %s24
    %p30 = scmp.eq.s32.totalorder %s11, 0
    %p31 = por %p29, %p30
    %p32 = scmp.ne.s32.totalorder %s21, %s24
    %p33 = scmp.eq.s32.totalorder %s16, 1
    %p34 = por %p32, %p33
    %p35 = scmp.ne.s32.totalorder %s24, %s25
    %p36 = scmp.eq.s32.totalorder %s16, 0
    %p37 = por %p35, %p36
    %p38 = scmp.ne.s32.totalorder %s24, %s25
    %p39 = scmp.eq.s32.totalorder %s17, 1
    %p40 = por %p38, %p39
    %p42 = scmp.ne.s32.totalorder %s25, %s41
    %p43 = scmp.eq.s32.totalorder %s17, 0
    %p44 = por %p42, %p43
    %s46 = sadd.s32 %s45, 1
    %p49 = scmp.eq.s32.totalorder %s11, 1
    %p50 = scmp.ne.s32.totalorder %s45, %s47
    %p51 = scmp.eq.s32.totalorder %s11, 0
    %p52 = por %p50, %p51
    %p53 = scmp.ne.s32.totalorder %s45, %s47
    %p54 = scmp.eq.s32.totalorder %s16, 1
    %p55 = por %p53, %p54
    %p56 = scmp.ne.s32.totalorder %s47, %s48
    %p57 = scmp.eq.s32.totalorder %s16, 0
    %p58 = por %p56, %p57
    %p59 = scmp.ne.s32.totalorder %s47, %s48
    %p60 = scmp.eq.s32.totalorder %s17, 1
    %p61 = por %p59, %p60
    %p63 = scmp.ne.s32.totalorder %s48, %s62
    %p64 = scmp.eq.s32.totalorder %s17, 0
    %p65 = por %p63, %p64
    %s67 = sadd.s32 %s66, 1
    %p70 = scmp.eq.s32.totalorder %s11, 1
    %p71 = scmp.ne.s32.totalorder %s66, %s68
    %p72 = scmp.eq.s32.totalorder %s11, 0
    %p73 = por %p71, %p72
    %p74 = scmp.ne.s32.totalorder %s66, %s68
    %p75 = scmp.eq.s32.totalorder %s16, 1
    %p76 = por %p74, %p75
    %p77 = scmp.ne.s32.totalorder %s68, %s69
    %p78 = scmp.eq.s32.totalorder %s16, 0
    %p79 = por %p77, %p78
    %p80 = scmp.ne.s32.totalorder %s68, %s69
    %p81 = scmp.eq.s32.totalorder %s17, 1
    %p82 = por %p80, %p81
    %p84 = scmp.ne.s32.totalorder %s69, %s83
    %p85 = scmp.eq.s32.totalorder %s17, 0
    %p86 = por %p84, %p85
    %s88 = sadd.s32 %s87, 1
    %p91 = scmp.eq.s32.totalorder %s11, 1
    %p92 = scmp.ne.s32.totalorder %s87, %s89
    %p93 = scmp.eq.s32.totalorder %s11, 0
    %p94 = por %p92, %p93
    %p95 = scmp.ne.s32.totalorder %s87, %s89
    %p96 = scmp.eq.s32.totalorder %s16, 1
    %p97 = por %p95, %p96
    %p98 = scmp.ne.s32.totalorder %s89, %s90
    %p99 = scmp.eq.s32.totalorder %s16, 0
    %p100 = por %p98, %p99
    %p101 = scmp.ne.s32.totalorder %s89, %s90
    %p102 = scmp.eq.s32.totalorder %s17, 1
    %p103 = por %p101, %p102
    %p105 = scmp.ne.s32.totalorder %s90, %s104
    %p106 = scmp.eq.s32.totalorder %s17, 0
    %p107 = por %p105, %p106
    %s109 = sadd.s32 %s108, 1
    %p112 = scmp.eq.s32.totalorder %s11, 1
    %p113 = scmp.ne.s32.totalorder %s108, %s110
    %p114 = scmp.eq.s32.totalorder %s11, 0
    %p115 = por %p113, %p114
    %p116 = scmp.ne.s32.totalorder %s108, %s110
    %p117 = scmp.eq.s32.totalorder %s16, 1
    %p118 = por %p116, %p117
    %p119 = scmp.ne.s32.totalorder %s110, %s111
    %p120 = scmp.eq.s32.totalorder %s16, 0
    %p121 = por %p119, %p120
    %p122 = scmp.ne.s32.totalorder %s110, %s111
    %p123 = scmp.eq.s32.totalorder %s17, 1
    %p124 = por %p122, %p123
    %p126 = scmp.ne.s32.totalorder %s111, %s125
    %p127 = scmp.eq.s32.totalorder %s17, 0
    %p128 = por %p126, %p127
    %s129 = ssub.s32 %s11, %s18
    %p130 = scmp.eq.s32.totalorder %s129, 0
    %s132 = sadd.s32 %s131, 1
    %s133 = scalar_select %p130, %s131, %s132
    %p136 = pneg %p130
    %p137 = scmp.eq.s32.totalorder %s11, 1
    %p138 = por %p136, %p137
    %p139 = scmp.ne.s32.totalorder %s131, %s134
    %p140 = scmp.eq.s32.totalorder %s11, 0
    %p141 = por %p139, %p140
    %p142 = scmp.ne.s32.totalorder %s131, %s134
    %p143 = scmp.eq.s32.totalorder %s16, 1
    %p144 = por %p142, %p143
    %p145 = scmp.ne.s32.totalorder %s134, %s135
    %p146 = scmp.eq.s32.totalorder %s16, 0
    %p147 = por %p145, %p146
    %p148 = scmp.ne.s32.totalorder %s134, %s135
    %p149 = scmp.eq.s32.totalorder %s17, 1
    %p150 = por %p148, %p149
    %p152 = scmp.ne.s32.totalorder %s135, %s151
    %p153 = scmp.eq.s32.totalorder %s17, 0
    %p154 = por %p152, %p153
    %p155 = scmp.le.s32.totalorder 1, %s11
    %p156 = scmp.lt.s32.totalorder %s11, 3
    %p157 = pnand %p155, %p156
    %p158 = pneg %p157
    // Predicated region
    $region9: #{basic_block.1} parent=5 // pred_check
      _
    $region10: #{basic_block.1} parent=5 // pred_check_branch
      %160 = sbr.rel (%p157) target = $region12
    $region11: #{basic_block.1} parent=5 // pred_region
      %s161 = ssub.s32 %s11, 1
      // Predicated region
      $region13: #{basic_block.1} parent=11 // pred_check
        %p162 = pneg %p58
      $region14: #{basic_block.1} parent=11 // pred_check_branch
        %164 = sbr.rel (%p162) target = $region16
      $region15: #{basic_block.1} parent=11 // pred_region
        _
      $region16: #{basic_block.1} parent=11 // pred_fallthru
        _
      // Predicated region
      $region17: #{basic_block.1} parent=11 // pred_check
        %p165 = pneg %p79
      $region18: #{basic_block.1} parent=11 // pred_check_branch
        %167 = sbr.rel (%p165) target = $region20
      $region19: #{basic_block.1} parent=11 // pred_region
        _
      $region20: #{basic_block.1} parent=11 // pred_fallthru
        _
      // Predicated region
      $region21: #{basic_block.1} parent=11 // pred_check
        %p168 = pneg %p100
      $region22: #{basic_block.1} parent=11 // pred_check_branch
        %170 = sbr.rel (%p168) target = $region24
      $region23: #{basic_block.1} parent=11 // pred_region
        _
      $region24: #{basic_block.1} parent=11 // pred_fallthru
        _
      // Predicated region
      $region25: #{basic_block.1} parent=11 // pred_check
        %p171 = pneg %p121
      $region26: #{basic_block.1} parent=11 // pred_check_branch
        %173 = sbr.rel (%p171) target = $region28
      $region27: #{basic_block.1} parent=11 // pred_region
        _
      $region28: #{basic_block.1} parent=11 // pred_fallthru
        _
    $region12: #{basic_block.1} parent=5 // pred_fallthru
      _
    %p174 = scmp.lt.s32.totalorder %s11, 2
    // Predicated region
    $region29: #{basic_block.1} parent=5 // pred_check
      %p175 = pneg %p174
    $region30: #{basic_block.1} parent=5 // pred_check_branch
      %177 = sbr.rel (%p175) target = $region32
    $region31: #{basic_block.1} parent=5 // pred_region
      // Predicated region
      $region33: #{basic_block.1} parent=31 // pred_check
        %p178 = pneg %p31
      $region34: #{basic_block.1} parent=31 // pred_check_branch
        %180 = sbr.rel (%p178) target = $region36
      $region35: #{basic_block.1} parent=31 // pred_region
        %p181 = scmp.lt.s32.totalorder %s11, 1
        %s182 = scalar_select %p181, %s11, 1
        %s183 = smul.addr %s182, 32
        %s184 = smul.addr %s183, 8
        %s185 = scalar_lea.vmem %s0, %s184
      $region36: #{basic_block.1} parent=31 // pred_fallthru
        _
    $region32: #{basic_block.1} parent=5 // pred_fallthru
      _
    %p186 = scmp.le.s32.totalorder 1, %s11
    %p187 = scmp.lt.s32.totalorder %s11, 3
    %p188 = pnand %p186, %p187
    %p189 = pneg %p188
    // Predicated region
    $region37: #{basic_block.1} parent=5 // pred_check
      _
    $region38: #{basic_block.1} parent=5 // pred_check_branch
      %191 = sbr.rel (%p188) target = $region40
    $region39: #{basic_block.1} parent=5 // pred_region
      %s192 = ssub.s32 %s11, 1
      %p193 = scmp.lt.s32.totalorder %s16, 1
      %s194 = scalar_select %p193, %s16, 1
      %s195 = smul.addr %s194, 32
      %s196 = smul.addr %s195, 8
      %s197 = scalar_lea.vmem %s0, %s196
      %p198 = pneg %p37
      %p199 = pneg %p34
      %p200 = pneg %p58
      %p201 = pneg %p55
      %p202 = pneg %p79
      %p203 = pneg %p76
      %p204 = pneg %p100
      %p205 = pneg %p97
      %p206 = pneg %p121
      %p207 = pneg %p118
      %p208 = pneg %p147
      %p209 = pneg %p144
      %p210 = scmp.lt.s32.totalorder %s16, 1
      %s211 = scalar_select %p210, %s16, 1
      %s212 = smul.addr %s211, 32
      %s213 = smul.addr %s212, 8
      %s214 = scalar_lea.vmem %s5, %s213
      %p215 = scmp.lt.s32.totalorder %s16, 1
      %s216 = scalar_select %p215, %s16, 1
      %s217 = smul.addr %s216, 32
      %s218 = smul.addr %s217, 8
      %s219 = scalar_lea.vmem %s0, %s218
      %p220 = scmp.lt.s32.totalorder %s16, 1
      %s221 = scalar_select %p220, %s16, 1
      %s222 = smul.addr %s221, 32
      %s223 = smul.addr %s222, 8
      %s224 = scalar_lea.vmem %s5, %s223
      %vm226 = vcmask 27648
      %227 = vst.msk [vmem:[#allocation2] sm:$0xf] %vm226, 0
      %228 = vst.msk [vmem:[#allocation2 + $0x4] sm:$0xf] %vm226, 0
      %vm229 = vcmask 24576
      %230 = vst.msk [vmem:[#allocation2 + $0x8] sm:$0x1] %vm229, 0
      %s231 = scalar_lea.vmem [#allocation2], 204
      %232 = vst.msk [vmem:[%s231] sm:$0xf] %vm226, 0
      %233 = vst.msk [vmem:[%s231 + $0x4] sm:$0xf] %vm226, 0
      %234 = vst.msk [vmem:[%s231 + $0x8] sm:$0x1] %vm229, 0
      %vm235 = vcmask 24576
      %vm236 = vsmask.f32 256
      %vm237 = vmand %vm235, %vm236
      %v238 = vld [vmem:[#allocation2] sm:$0x1]
      %v239 = vsel %vm237, 0, %v238
      %240 = vst [vmem:[#allocation2] sm:$0x1] %v239
      %v241 = vld [vmem:[#allocation2 + $0xc] sm:$0x1]
      %v242 = vsel %vm237, 0, %v241
      %243 = vst [vmem:[#allocation2 + $0xc] sm:$0x1] %v242
      %v244 = vld [vmem:[#allocation2 + $0x18] sm:$0x1]
      %v245 = vsel %vm237, 0, %v244
      %246 = vst [vmem:[#allocation2 + $0x18] sm:$0x1] %v245
      %v247 = vld [vmem:[#allocation2 + $0x24] sm:$0x1]
      %v248 = vsel %vm237, 0, %v247
      %249 = vst [vmem:[#allocation2 + $0x24] sm:$0x1] %v248
      %v250 = vld [vmem:[#allocation2 + $0x30] sm:$0x1]
      %v251 = vsel %vm237, 0, %v250
      %252 = vst [vmem:[#allocation2 + $0x30] sm:$0x1] %v251
      %v253 = vld [vmem:[#allocation2 + $0x3c] sm:$0x1]
      %v254 = vsel %vm237, 0, %v253
      %255 = vst [vmem:[#allocation2 + $0x3c] sm:$0x1] %v254
      %v256 = vld [vmem:[#allocation2 + $0x48] sm:$0x1]
      %v257 = vsel %vm237, 0, %v256
      %258 = vst [vmem:[#allocation2 + $0x48] sm:$0x1] %v257
      %v259 = vld [vmem:[#allocation2 + $0x54] sm:$0x1]
      %v260 = vsel %vm237, 0, %v259
      %261 = vst [vmem:[#allocation2 + $0x54] sm:$0x1] %v260
      %v262 = vld [vmem:[#allocation2 + $0x60] sm:$0x1]
      %v263 = vsel %vm237, 0, %v262
      %264 = vst [vmem:[#allocation2 + $0x60] sm:$0x1] %v263
      %v265 = vld [vmem:[#allocation2 + $0x6c] sm:$0x1]
      %v266 = vsel %vm237, 0, %v265
      %267 = vst [vmem:[#allocation2 + $0x6c] sm:$0x1] %v266
      %v268 = vld [vmem:[#allocation2 + $0x78] sm:$0x1]
      %v269 = vsel %vm237, 0, %v268
      %270 = vst [vmem:[#allocation2 + $0x78] sm:$0x1] %v269
      %v271 = vld [vmem:[#allocation2 + $0x84] sm:$0x1]
      %v272 = vsel %vm237, 0, %v271
      %273 = vst [vmem:[#allocation2 + $0x84] sm:$0x1] %v272
      %v274 = vld [vmem:[#allocation2 + $0x90] sm:$0x1]
      %v275 = vsel %vm237, 0, %v274
      %276 = vst [vmem:[#allocation2 + $0x90] sm:$0x1] %v275
      %v277 = vld [vmem:[#allocation2 + $0x9c] sm:$0x1]
      %v278 = vsel %vm237, 0, %v277
      %279 = vst [vmem:[#allocation2 + $0x9c] sm:$0x1] %v278
      %v280 = vld [vmem:[#allocation2 + $0xa8] sm:$0x1]
      %v281 = vsel %vm237, 0, %v280
      %282 = vst [vmem:[#allocation2 + $0xa8] sm:$0x1] %v281
      %v283 = vld [vmem:[#allocation2 + $0xb4] sm:$0x1]
      %v284 = vsel %vm237, 0, %v283
      %285 = vst [vmem:[#allocation2 + $0xb4] sm:$0x1] %v284
      %v286 = vld [vmem:[#allocation2 + $0xc0] sm:$0x1]
      %v287 = vsel %vm237, 0, %v286
      %288 = vst [vmem:[#allocation2 + $0xc0] sm:$0x1] %v287
      %v289 = vld [vmem:[#allocation2 + $0xcc] sm:$0x1]
      %v290 = vsel %vm237, 0, %v289
      %291 = vst [vmem:[#allocation2 + $0xcc] sm:$0x1] %v290
      %vm292 = vsmask.f32 7938
      %vm293 = vmand %vm235, %vm292
      %v294 = vld [vmem:[#allocation2 + $0x8] sm:$0x1]
      %v295 = vsel %vm293, 0, %v294
      %296 = vst [vmem:[#allocation2 + $0x8] sm:$0x1] %v295
      %v297 = vld [vmem:[#allocation2 + $0x14] sm:$0x1]
      %v298 = vsel %vm293, 0, %v297
      %299 = vst [vmem:[#allocation2 + $0x14] sm:$0x1] %v298
      %v300 = vld [vmem:[#allocation2 + $0x20] sm:$0x1]
      %v301 = vsel %vm293, 0, %v300
      %302 = vst [vmem:[#allocation2 + $0x20] sm:$0x1] %v301
      %v303 = vld [vmem:[#allocation2 + $0x2c] sm:$0x1]
      %v304 = vsel %vm293, 0, %v303
      %305 = vst [vmem:[#allocation2 + $0x2c] sm:$0x1] %v304
      %v306 = vld [vmem:[#allocation2 + $0x38] sm:$0x1]
      %v307 = vsel %vm293, 0, %v306
      %308 = vst [vmem:[#allocation2 + $0x38] sm:$0x1] %v307
      %v309 = vld [vmem:[#allocation2 + $0x44] sm:$0x1]
      %v310 = vsel %vm293, 0, %v309
      %311 = vst [vmem:[#allocation2 + $0x44] sm:$0x1] %v310
      %v312 = vld [vmem:[#allocation2 + $0x50] sm:$0x1]
      %v313 = vsel %vm293, 0, %v312
      %314 = vst [vmem:[#allocation2 + $0x50] sm:$0x1] %v313
      %v315 = vld [vmem:[#allocation2 + $0x5c] sm:$0x1]
      %v316 = vsel %vm293, 0, %v315
      %317 = vst [vmem:[#allocation2 + $0x5c] sm:$0x1] %v316
      %v318 = vld [vmem:[#allocation2 + $0x68] sm:$0x1]
      %v319 = vsel %vm293, 0, %v318
      %320 = vst [vmem:[#allocation2 + $0x68] sm:$0x1] %v319
      %v321 = vld [vmem:[#allocation2 + $0x74] sm:$0x1]
      %v322 = vsel %vm293, 0, %v321
      %323 = vst [vmem:[#allocation2 + $0x74] sm:$0x1] %v322
      %v324 = vld [vmem:[#allocation2 + $0x80] sm:$0x1]
      %v325 = vsel %vm293, 0, %v324
      %326 = vst [vmem:[#allocation2 + $0x80] sm:$0x1] %v325
      %v327 = vld [vmem:[#allocation2 + $0x8c] sm:$0x1]
      %v328 = vsel %vm293, 0, %v327
      %329 = vst [vmem:[#allocation2 + $0x8c] sm:$0x1] %v328
      %v330 = vld [vmem:[#allocation2 + $0x98] sm:$0x1]
      %v331 = vsel %vm293, 0, %v330
      %332 = vst [vmem:[#allocation2 + $0x98] sm:$0x1] %v331
      %v333 = vld [vmem:[#allocation2 + $0xa4] sm:$0x1]
      %v334 = vsel %vm293, 0, %v333
      %335 = vst [vmem:[#allocation2 + $0xa4] sm:$0x1] %v334
      %v336 = vld [vmem:[#allocation2 + $0xb0] sm:$0x1]
      %v337 = vsel %vm293, 0, %v336
      %338 = vst [vmem:[#allocation2 + $0xb0] sm:$0x1] %v337
      %v339 = vld [vmem:[#allocation2 + $0xbc] sm:$0x1]
      %v340 = vsel %vm293, 0, %v339
      %341 = vst [vmem:[#allocation2 + $0xbc] sm:$0x1] %v340
      %v342 = vld [vmem:[#allocation2 + $0xc8] sm:$0x1]
      %v343 = vsel %vm293, 0, %v342
      %344 = vst [vmem:[#allocation2 + $0xc8] sm:$0x1] %v343
      %v345 = vld [vmem:[#allocation2 + $0xd4] sm:$0x1]
      %v346 = vsel %vm293, 0, %v345
      %347 = vst [vmem:[#allocation2 + $0xd4] sm:$0x1] %v346
      %v348 = vld [vmem:[%s219] sm:$0xff]
      %v349 = vld [vmem:[%s219 + $0x8] sm:$0xff]
      %v350 = vld [vmem:[%s219 + $0x10] sm:$0xff]
      %v351 = vld [vmem:[%s219 + $0x18] sm:$0xff]
      %v352 = vld [vmem:[%s219 + $0x20] sm:$0xff]
      %v353 = vld [vmem:[%s219 + $0x28] sm:$0xff]
      %v354 = vld [vmem:[%s219 + $0x30] sm:$0xff]
      %v355 = vld [vmem:[%s219 + $0x38] sm:$0xff]
      %v356 = vld [vmem:[%s219 + $0x40] sm:$0xff]
      %v357 = vld [vmem:[%s219 + $0x48] sm:$0xff]
      %v358 = vld [vmem:[%s219 + $0x50] sm:$0xff]
      %v359 = vld [vmem:[%s219 + $0x58] sm:$0xff]
      %v360 = vld [vmem:[%s219 + $0x60] sm:$0xff]
      %v361 = vld [vmem:[%s219 + $0x68] sm:$0xff]
      %v362 = vld [vmem:[%s219 + $0x70] sm:$0xff]
      %v363 = vld [vmem:[%s219 + $0x78] sm:$0xff]
      %v364 = vld [vmem:[%s219 + $0x80] sm:$0xff]
      %v365 = vld [vmem:[%s219 + $0x88] sm:$0xff]
      %v366 = vld [vmem:[%s219 + $0x90] sm:$0xff]
      %v367 = vld [vmem:[%s219 + $0x98] sm:$0xff]
      %v368 = vld [vmem:[%s219 + $0xa0] sm:$0xff]
      %v369 = vld [vmem:[%s219 + $0xa8] sm:$0xff]
      %v370 = vld [vmem:[%s219 + $0xb0] sm:$0xff]
      %v371 = vld [vmem:[%s219 + $0xb8] sm:$0xff]
      %v372 = vld [vmem:[%s219 + $0xc0] sm:$0xff]
      %v373 = vld [vmem:[%s219 + $0xc8] sm:$0xff]
      %v374 = vld [vmem:[%s219 + $0xd0] sm:$0xff]
      %v375 = vld [vmem:[%s219 + $0xd8] sm:$0xff]
      %v376 = vld [vmem:[%s219 + $0xe0] sm:$0xff]
      %v377 = vld [vmem:[%s219 + $0xe8] sm:$0xff]
      %v378 = vld [vmem:[%s219 + $0xf0] sm:$0xff]
      %v379 = vld [vmem:[%s219 + $0xf8] sm:$0xff]
      %v380 = vpack.c.bf16 %v349, %v348
      %v381 = vpack.c.bf16 %v351, %v350
      %v382 = vpack.c.bf16 %v353, %v352
      %v383 = vpack.c.bf16 %v355, %v354
      %v384 = vpack.c.bf16 %v357, %v356
      %v385 = vpack.c.bf16 %v359, %v358
      %v386 = vpack.c.bf16 %v361, %v360
      %v387 = vpack.c.bf16 %v363, %v362
      %v388 = vpack.c.bf16 %v365, %v364
      %v389 = vpack.c.bf16 %v367, %v366
      %v390 = vpack.c.bf16 %v369, %v368
      %v391 = vpack.c.bf16 %v371, %v370
      %v392 = vpack.c.bf16 %v373, %v372
      %v393 = vpack.c.bf16 %v375, %v374
      %v394 = vpack.c.bf16 %v377, %v376
      %v395 = vpack.c.bf16 %v379, %v378
      %v412 = vunpack.c.l.b16 %v380
      %v413 = vunpack.c.h.b16 %v380
      %v414 = vunpack.c.l.b16 %v381
      %v415 = vunpack.c.h.b16 %v381
      %v416 = vunpack.c.l.b16 %v382
      %v417 = vunpack.c.h.b16 %v382
      %v418 = vunpack.c.l.b16 %v383
      %v419 = vunpack.c.h.b16 %v383
      %v420 = vunpack.c.l.b16 %v384
      %v421 = vunpack.c.h.b16 %v384
      %v422 = vunpack.c.l.b16 %v385
      %v423 = vunpack.c.h.b16 %v385
      %v424 = vunpack.c.l.b16 %v386
      %v425 = vunpack.c.h.b16 %v386
      %v426 = vunpack.c.l.b16 %v387
      %v427 = vunpack.c.h.b16 %v387
      %v428 = vunpack.c.l.b16 %v388
      %v429 = vunpack.c.h.b16 %v388
      %v430 = vunpack.c.l.b16 %v389
      %v431 = vunpack.c.h.b16 %v389
      %v432 = vunpack.c.l.b16 %v390
      %v433 = vunpack.c.h.b16 %v390
      %v434 = vunpack.c.l.b16 %v391
      %v435 = vunpack.c.h.b16 %v391
      %v436 = vunpack.c.l.b16 %v392
      %v437 = vunpack.c.h.b16 %v392
      %v438 = vunpack.c.l.b16 %v393
      %v439 = vunpack.c.h.b16 %v393
      %v440 = vunpack.c.l.b16 %v394
      %v441 = vunpack.c.h.b16 %v394
      %v442 = vunpack.c.l.b16 %v395
      %v443 = vunpack.c.h.b16 %v395
      %v444 = vpack.c.b16 %v412, %v412
      %v445 = vpack.c.b16 %v413, %v413
      %v446 = vpack.c.b16 %v414, %v414
      %v447 = vpack.c.b16 %v415, %v415
      %v448 = vpack.c.b16 %v416, %v416
      %v449 = vpack.c.b16 %v417, %v417
      %v450 = vpack.c.b16 %v418, %v418
      %v451 = vpack.c.b16 %v419, %v419
      %v452 = vpack.c.b16 %v420, %v420
      %v453 = vpack.c.b16 %v421, %v421
      %v454 = vpack.c.b16 %v422, %v422
      %v455 = vpack.c.b16 %v423, %v423
      %v456 = vpack.c.b16 %v424, %v424
      %v457 = vpack.c.b16 %v425, %v425
      %v458 = vpack.c.b16 %v426, %v426
      %v459 = vpack.c.b16 %v427, %v427
      %v460 = vpack.c.b16 %v428, %v428
      %v461 = vpack.c.b16 %v429, %v429
      %v462 = vpack.c.b16 %v430, %v430
      %v463 = vpack.c.b16 %v431, %v431
      %v464 = vpack.c.b16 %v432, %v432
      %v465 = vpack.c.b16 %v433, %v433
      %v466 = vpack.c.b16 %v434, %v434
      %v467 = vpack.c.b16 %v435, %v435
      %v468 = vpack.c.b16 %v436, %v436
      %v469 = vpack.c.b16 %v437, %v437
      %v470 = vpack.c.b16 %v438, %v438
      %v471 = vpack.c.b16 %v439, %v439
      %v472 = vpack.c.b16 %v440, %v440
      %v473 = vpack.c.b16 %v441, %v441
      %v474 = vpack.c.b16 %v442, %v442
      %v475 = vpack.c.b16 %v443, %v443
      %vm476 = vsmask.f32 4368
      %vm477 = vmor %vm236, %vm476
      %v479 = vshrl.u32 %v444, 16
      %v481 = vrot.slane %v479, 7
      %v482 = vshll.u32 %v444, 16
      %v484 = vor.u32 %v481, %v482
      %v485 = vrot.slane %v481, 4
      %v487 = vshrl.u32 %v445, 16
      %v489 = vrot.slane %v487, 7
      %v490 = vshll.u32 %v445, 16
      %v492 = vor.u32 %v489, %v490
      %v493 = vsel %vm477, %v485, %v492
      %v494 = vrot.slane %v489, 4
      %v496 = vshrl.u32 %v446, 16
      %v498 = vrot.slane %v496, 7
      %v499 = vshll.u32 %v446, 16
      %v501 = vor.u32 %v498, %v499
      %v502 = vrot.slane %v498, 4
      %v504 = vshrl.u32 %v447, 16
      %v506 = vrot.slane %v504, 7
      %v507 = vshll.u32 %v447, 16
      %v509 = vor.u32 %v506, %v507
      %v510 = vsel %vm477, %v502, %v509
      %v511 = vrot.slane %v506, 4
      %v513 = vshrl.u32 %v448, 16
      %v515 = vrot.slane %v513, 7
      %v516 = vshll.u32 %v448, 16
      %v518 = vor.u32 %v515, %v516
      %v519 = vrot.slane %v515, 4
      %v521 = vshrl.u32 %v449, 16
      %v523 = vrot.slane %v521, 7
      %v524 = vshll.u32 %v449, 16
      %v526 = vor.u32 %v523, %v524
      %v527 = vsel %vm477, %v519, %v526
      %v528 = vrot.slane %v523, 4
      %v530 = vshrl.u32 %v450, 16
      %v532 = vrot.slane %v530, 7
      %v533 = vshll.u32 %v450, 16
      %v535 = vor.u32 %v532, %v533
      %v536 = vrot.slane %v532, 4
      %v538 = vshrl.u32 %v451, 16
      %v540 = vrot.slane %v538, 7
      %v541 = vshll.u32 %v451, 16
      %v543 = vor.u32 %v540, %v541
      %v544 = vsel %vm477, %v536, %v543
      %v545 = vrot.slane %v540, 4
      %v547 = vshrl.u32 %v452, 16
      %v549 = vrot.slane %v547, 7
      %v550 = vshll.u32 %v452, 16
      %v552 = vor.u32 %v549, %v550
      %v553 = vrot.slane %v549, 4
      %v555 = vshrl.u32 %v453, 16
      %v557 = vrot.slane %v555, 7
      %v558 = vshll.u32 %v453, 16
      %v560 = vor.u32 %v557, %v558
      %v561 = vsel %vm477, %v553, %v560
      %v562 = vrot.slane %v557, 4
      %v564 = vshrl.u32 %v454, 16
      %v566 = vrot.slane %v564, 7
      %v567 = vshll.u32 %v454, 16
      %v569 = vor.u32 %v566, %v567
      %v570 = vrot.slane %v566, 4
      %v572 = vshrl.u32 %v455, 16
      %v574 = vrot.slane %v572, 7
      %v575 = vshll.u32 %v455, 16
      %v577 = vor.u32 %v574, %v575
      %v578 = vsel %vm477, %v570, %v577
      %v579 = vrot.slane %v574, 4
      %v581 = vshrl.u32 %v456, 16
      %v583 = vrot.slane %v581, 7
      %v584 = vshll.u32 %v456, 16
      %v586 = vor.u32 %v583, %v584
      %v587 = vrot.slane %v583, 4
      %v589 = vshrl.u32 %v457, 16
      %v591 = vrot.slane %v589, 7
      %v592 = vshll.u32 %v457, 16
      %v594 = vor.u32 %v591, %v592
      %v595 = vsel %vm477, %v587, %v594
      %v596 = vrot.slane %v591, 4
      %v598 = vshrl.u32 %v458, 16
      %v600 = vrot.slane %v598, 7
      %v601 = vshll.u32 %v458, 16
      %v603 = vor.u32 %v600, %v601
      %v604 = vrot.slane %v600, 4
      %v606 = vshrl.u32 %v459, 16
      %v608 = vrot.slane %v606, 7
      %v609 = vshll.u32 %v459, 16
      %v611 = vor.u32 %v608, %v609
      %v612 = vsel %vm477, %v604, %v611
      %v613 = vrot.slane %v608, 4
      %v615 = vshrl.u32 %v460, 16
      %v617 = vrot.slane %v615, 7
      %v618 = vshll.u32 %v460, 16
      %v620 = vor.u32 %v617, %v618
      %v621 = vrot.slane %v617, 4
      %v623 = vshrl.u32 %v461, 16
      %v625 = vrot.slane %v623, 7
      %v626 = vshll.u32 %v461, 16
      %v628 = vor.u32 %v625, %v626
      %v629 = vsel %vm477, %v621, %v628
      %v630 = vrot.slane %v625, 4
      %v632 = vshrl.u32 %v462, 16
      %v634 = vrot.slane %v632, 7
      %v635 = vshll.u32 %v462, 16
      %v637 = vor.u32 %v634, %v635
      %v638 = vrot.slane %v634, 4
      %v640 = vshrl.u32 %v463, 16
      %v642 = vrot.slane %v640, 7
      %v643 = vshll.u32 %v463, 16
      %v645 = vor.u32 %v642, %v643
      %v646 = vsel %vm477, %v638, %v645
      %v647 = vrot.slane %v642, 4
      %v649 = vshrl.u32 %v464, 16
      %v651 = vrot.slane %v649, 7
      %v652 = vshll.u32 %v464, 16
      %v654 = vor.u32 %v651, %v652
      %v655 = vrot.slane %v651, 4
      %v657 = vshrl.u32 %v465, 16
      %v659 = vrot.slane %v657, 7
      %v660 = vshll.u32 %v465, 16
      %v662 = vor.u32 %v659, %v660
      %v663 = vsel %vm477, %v655, %v662
      %v664 = vrot.slane %v659, 4
      %v666 = vshrl.u32 %v466, 16
      %v668 = vrot.slane %v666, 7
      %v669 = vshll.u32 %v466, 16
      %v671 = vor.u32 %v668, %v669
      %v672 = vrot.slane %v668, 4
      %v674 = vshrl.u32 %v467, 16
      %v676 = vrot.slane %v674, 7
      %v677 = vshll.u32 %v467, 16
      %v679 = vor.u32 %v676, %v677
      %v680 = vsel %vm477, %v672, %v679
      %v681 = vrot.slane %v676, 4
      %v683 = vshrl.u32 %v468, 16
      %v685 = vrot.slane %v683, 7
      %v686 = vshll.u32 %v468, 16
      %v688 = vor.u32 %v685, %v686
      %v689 = vrot.slane %v685, 4
      %v691 = vshrl.u32 %v469, 16
      %v693 = vrot.slane %v691, 7
      %v694 = vshll.u32 %v469, 16
      %v696 = vor.u32 %v693, %v694
      %v697 = vsel %vm477, %v689, %v696
      %v698 = vrot.slane %v693, 4
      %v700 = vshrl.u32 %v470, 16
      %v702 = vrot.slane %v700, 7
      %v703 = vshll.u32 %v470, 16
      %v705 = vor.u32 %v702, %v703
      %v706 = vrot.slane %v702, 4
      %v708 = vshrl.u32 %v471, 16
      %v710 = vrot.slane %v708, 7
      %v711 = vshll.u32 %v471, 16
      %v713 = vor.u32 %v710, %v711
      %v714 = vsel %vm477, %v706, %v713
      %v715 = vrot.slane %v710, 4
      %v717 = vshrl.u32 %v472, 16
      %v719 = vrot.slane %v717, 7
      %v720 = vshll.u32 %v472, 16
      %v722 = vor.u32 %v719, %v720
      %v723 = vrot.slane %v719, 4
      %v725 = vshrl.u32 %v473, 16
      %v727 = vrot.slane %v725, 7
      %v728 = vshll.u32 %v473, 16
      %v730 = vor.u32 %v727, %v728
      %v731 = vsel %vm477, %v723, %v730
      %v732 = vrot.slane %v727, 4
      %v734 = vshrl.u32 %v474, 16
      %v736 = vrot.slane %v734, 7
      %v737 = vshll.u32 %v474, 16
      %v739 = vor.u32 %v736, %v737
      %v740 = vrot.slane %v736, 4
      %v742 = vshrl.u32 %v475, 16
      %v744 = vrot.slane %v742, 7
      %v745 = vshll.u32 %v475, 16
      %v747 = vor.u32 %v744, %v745
      %v748 = vsel %vm477, %v740, %v747
      %v749 = vrot.slane %v744, 4
      %s798 = scalar_lea.vmem [#allocation2], 12
      %vm799 = vcmask 27648
      %vm800 = vmand %vm799, %vm292
      %v801 = vld [vmem:[%s798] sm:$0xf]
      %v802 = vsel %vm800, %v484, %v801
      %803 = vst [vmem:[%s798] sm:$0xf] %v802
      %804 = vst.msk [vmem:[%s798 + $0x4] sm:$0xf] %vm226, %v493
      %v805 = vld [vmem:[%s798 + $0x8] sm:$0x1]
      %v806 = vsel %vm237, %v494, %v805
      %807 = vst [vmem:[%s798 + $0x8] sm:$0x1] %v806
      %v808 = vld [vmem:[%s798 + $0xc] sm:$0xf]
      %v809 = vsel %vm800, %v501, %v808
      %810 = vst [vmem:[%s798 + $0xc] sm:$0xf] %v809
      %811 = vst.msk [vmem:[%s798 + $0x10] sm:$0xf] %vm226, %v510
      %v812 = vld [vmem:[%s798 + $0x14] sm:$0x1]
      %v813 = vsel %vm237, %v511, %v812
      %814 = vst [vmem:[%s798 + $0x14] sm:$0x1] %v813
      %v815 = vld [vmem:[%s798 + $0x18] sm:$0xf]
      %v816 = vsel %vm800, %v518, %v815
      %817 = vst [vmem:[%s798 + $0x18] sm:$0xf] %v816
      %818 = vst.msk [vmem:[%s798 + $0x1c] sm:$0xf] %vm226, %v527
      %v819 = vld [vmem:[%s798 + $0x20] sm:$0x1]
      %v820 = vsel %vm237, %v528, %v819
      %821 = vst [vmem:[%s798 + $0x20] sm:$0x1] %v820
      %v822 = vld [vmem:[%s798 + $0x24] sm:$0xf]
      %v823 = vsel %vm800, %v535, %v822
      %824 = vst [vmem:[%s798 + $0x24] sm:$0xf] %v823
      %825 = vst.msk [vmem:[%s798 + $0x28] sm:$0xf] %vm226, %v544
      %v826 = vld [vmem:[%s798 + $0x2c] sm:$0x1]
      %v827 = vsel %vm237, %v545, %v826
      %828 = vst [vmem:[%s798 + $0x2c] sm:$0x1] %v827
      %v829 = vld [vmem:[%s798 + $0x30] sm:$0xf]
      %v830 = vsel %vm800, %v552, %v829
      %831 = vst [vmem:[%s798 + $0x30] sm:$0xf] %v830
      %832 = vst.msk [vmem:[%s798 + $0x34] sm:$0xf] %vm226, %v561
      %v833 = vld [vmem:[%s798 + $0x38] sm:$0x1]
      %v834 = vsel %vm237, %v562, %v833
      %835 = vst [vmem:[%s798 + $0x38] sm:$0x1] %v834
      %v836 = vld [vmem:[%s798 + $0x3c] sm:$0xf]
      %v837 = vsel %vm800, %v569, %v836
      %838 = vst [vmem:[%s798 + $0x3c] sm:$0xf] %v837
      %839 = vst.msk [vmem:[%s798 + $0x40] sm:$0xf] %vm226, %v578
      %v840 = vld [vmem:[%s798 + $0x44] sm:$0x1]
      %v841 = vsel %vm237, %v579, %v840
      %842 = vst [vmem:[%s798 + $0x44] sm:$0x1] %v841
      %v843 = vld [vmem:[%s798 + $0x48] sm:$0xf]
      %v844 = vsel %vm800, %v586, %v843
      %845 = vst [vmem:[%s798 + $0x48] sm:$0xf] %v844
      %846 = vst.msk [vmem:[%s798 + $0x4c] sm:$0xf] %vm226, %v595
      %v847 = vld [vmem:[%s798 + $0x50] sm:$0x1]
      %v848 = vsel %vm237, %v596, %v847
      %849 = vst [vmem:[%s798 + $0x50] sm:$0x1] %v848
      %v850 = vld [vmem:[%s798 + $0x54] sm:$0xf]
      %v851 = vsel %vm800, %v603, %v850
      %852 = vst [vmem:[%s798 + $0x54] sm:$0xf] %v851
      %853 = vst.msk [vmem:[%s798 + $0x58] sm:$0xf] %vm226, %v612
      %v854 = vld [vmem:[%s798 + $0x5c] sm:$0x1]
      %v855 = vsel %vm237, %v613, %v854
      %856 = vst [vmem:[%s798 + $0x5c] sm:$0x1] %v855
      %v857 = vld [vmem:[%s798 + $0x60] sm:$0xf]
      %v858 = vsel %vm800, %v620, %v857
      %859 = vst [vmem:[%s798 + $0x60] sm:$0xf] %v858
      %860 = vst.msk [vmem:[%s798 + $0x64] sm:$0xf] %vm226, %v629
      %v861 = vld [vmem:[%s798 + $0x68] sm:$0x1]
      %v862 = vsel %vm237, %v630, %v861
      %863 = vst [vmem:[%s798 + $0x68] sm:$0x1] %v862
      %v864 = vld [vmem:[%s798 + $0x6c] sm:$0xf]
      %v865 = vsel %vm800, %v637, %v864
      %866 = vst [vmem:[%s798 + $0x6c] sm:$0xf] %v865
      %867 = vst.msk [vmem:[%s798 + $0x70] sm:$0xf] %vm226, %v646
      %v868 = vld [vmem:[%s798 + $0x74] sm:$0x1]
      %v869 = vsel %vm237, %v647, %v868
      %870 = vst [vmem:[%s798 + $0x74] sm:$0x1] %v869
      %v871 = vld [vmem:[%s798 + $0x78] sm:$0xf]
      %v872 = vsel %vm800, %v654, %v871
      %873 = vst [vmem:[%s798 + $0x78] sm:$0xf] %v872
      %874 = vst.msk [vmem:[%s798 + $0x7c] sm:$0xf] %vm226, %v663
      %v875 = vld [vmem:[%s798 + $0x80] sm:$0x1]
      %v876 = vsel %vm237, %v664, %v875
      %877 = vst [vmem:[%s798 + $0x80] sm:$0x1] %v876
      %v878 = vld [vmem:[%s798 + $0x84] sm:$0xf]
      %v879 = vsel %vm800, %v671, %v878
      %880 = vst [vmem:[%s798 + $0x84] sm:$0xf] %v879
      %881 = vst.msk [vmem:[%s798 + $0x88] sm:$0xf] %vm226, %v680
      %v882 = vld [vmem:[%s798 + $0x8c] sm:$0x1]
      %v883 = vsel %vm237, %v681, %v882
      %884 = vst [vmem:[%s798 + $0x8c] sm:$0x1] %v883
      %v885 = vld [vmem:[%s798 + $0x90] sm:$0xf]
      %v886 = vsel %vm800, %v688, %v885
      %887 = vst [vmem:[%s798 + $0x90] sm:$0xf] %v886
      %888 = vst.msk [vmem:[%s798 + $0x94] sm:$0xf] %vm226, %v697
      %v889 = vld [vmem:[%s798 + $0x98] sm:$0x1]
      %v890 = vsel %vm237, %v698, %v889
      %891 = vst [vmem:[%s798 + $0x98] sm:$0x1] %v890
      %v892 = vld [vmem:[%s798 + $0x9c] sm:$0xf]
      %v893 = vsel %vm800, %v705, %v892
      %894 = vst [vmem:[%s798 + $0x9c] sm:$0xf] %v893
      %895 = vst.msk [vmem:[%s798 + $0xa0] sm:$0xf] %vm226, %v714
      %v896 = vld [vmem:[%s798 + $0xa4] sm:$0x1]
      %v897 = vsel %vm237, %v715, %v896
      %898 = vst [vmem:[%s798 + $0xa4] sm:$0x1] %v897
      %v899 = vld [vmem:[%s798 + $0xa8] sm:$0xf]
      %v900 = vsel %vm800, %v722, %v899
      %901 = vst [vmem:[%s798 + $0xa8] sm:$0xf] %v900
      %902 = vst.msk [vmem:[%s798 + $0xac] sm:$0xf] %vm226, %v731
      %v903 = vld [vmem:[%s798 + $0xb0] sm:$0x1]
      %v904 = vsel %vm237, %v732, %v903
      %905 = vst [vmem:[%s798 + $0xb0] sm:$0x1] %v904
      %v906 = vld [vmem:[%s798 + $0xb4] sm:$0xf]
      %v907 = vsel %vm800, %v739, %v906
      %908 = vst [vmem:[%s798 + $0xb4] sm:$0xf] %v907
      %909 = vst.msk [vmem:[%s798 + $0xb8] sm:$0xf] %vm226, %v748
      %v910 = vld [vmem:[%s798 + $0xbc] sm:$0x1]
      %v911 = vsel %vm237, %v749, %v910
      %912 = vst [vmem:[%s798 + $0xbc] sm:$0x1] %v911
      %v913 = vld [vmem:[#allocation2] sm:$0xf]
      %v914 = vld [vmem:[#allocation2 + $0x4] sm:$0xf]
      %v915 = vld [vmem:[#allocation2 + $0xc] sm:$0xf]
      %v916 = vld [vmem:[#allocation2 + $0x10] sm:$0xf]
      %v917 = vld [vmem:[#allocation2 + $0x18] sm:$0xf]
      %v918 = vld [vmem:[#allocation2 + $0x1c] sm:$0xf]
      %v919 = vld [vmem:[#allocation2 + $0x24] sm:$0xf]
      %v920 = vld [vmem:[#allocation2 + $0x28] sm:$0xf]
      %v921 = vld [vmem:[#allocation2 + $0x30] sm:$0xf]
      %v922 = vld [vmem:[#allocation2 + $0x34] sm:$0xf]
      %v923 = vld [vmem:[#allocation2 + $0x3c] sm:$0xf]
      %v924 = vld [vmem:[#allocation2 + $0x40] sm:$0xf]
      %v925 = vld [vmem:[#allocation2 + $0x48] sm:$0xf]
      %v926 = vld [vmem:[#allocation2 + $0x4c] sm:$0xf]
      %v927 = vld [vmem:[#allocation2 + $0x54] sm:$0xf]
      %v928 = vld [vmem:[#allocation2 + $0x58] sm:$0xf]
      %v929 = vld [vmem:[#allocation2 + $0x60] sm:$0xf]
      %v930 = vld [vmem:[#allocation2 + $0x64] sm:$0xf]
      %v931 = vld [vmem:[#allocation2 + $0x6c] sm:$0xf]
      %v932 = vld [vmem:[#allocation2 + $0x70] sm:$0xf]
      %v933 = vld [vmem:[#allocation2 + $0x78] sm:$0xf]
      %v934 = vld [vmem:[#allocation2 + $0x7c] sm:$0xf]
      %v935 = vld [vmem:[#allocation2 + $0x84] sm:$0xf]
      %v936 = vld [vmem:[#allocation2 + $0x88] sm:$0xf]
      %v937 = vld [vmem:[#allocation2 + $0x90] sm:$0xf]
      %v938 = vld [vmem:[#allocation2 + $0x94] sm:$0xf]
      %v939 = vld [vmem:[#allocation2 + $0x9c] sm:$0xf]
      %v940 = vld [vmem:[#allocation2 + $0xa0] sm:$0xf]
      %v941 = vld [vmem:[#allocation2 + $0xa8] sm:$0xf]
      %v942 = vld [vmem:[#allocation2 + $0xac] sm:$0xf]
      %v943 = vld [vmem:[#allocation2 + $0xb4] sm:$0xf]
      %v944 = vld [vmem:[#allocation2 + $0xb8] sm:$0xf]
      %v945 = vld [vmem:[#allocation2 + $0x8] sm:$0x1]
      %v946 = vld [vmem:[#allocation2 + $0x14] sm:$0x1]
      %v947 = vld [vmem:[#allocation2 + $0x20] sm:$0x1]
      %v948 = vld [vmem:[#allocation2 + $0x2c] sm:$0x1]
      %v949 = vld [vmem:[#allocation2 + $0x38] sm:$0x1]
      %v950 = vld [vmem:[#allocation2 + $0x44] sm:$0x1]
      %v951 = vld [vmem:[#allocation2 + $0x50] sm:$0x1]
      %v952 = vld [vmem:[#allocation2 + $0x5c] sm:$0x1]
      %v953 = vld [vmem:[#allocation2 + $0x68] sm:$0x1]
      %v954 = vld [vmem:[#allocation2 + $0x74] sm:$0x1]
      %v955 = vld [vmem:[#allocation2 + $0x80] sm:$0x1]
      %v956 = vld [vmem:[#allocation2 + $0x8c] sm:$0x1]
      %v957 = vld [vmem:[#allocation2 + $0x98] sm:$0x1]
      %v958 = vld [vmem:[#allocation2 + $0xa4] sm:$0x1]
      %v959 = vld [vmem:[#allocation2 + $0xb0] sm:$0x1]
      %v960 = vld [vmem:[#allocation2 + $0xbc] sm:$0x1]
      %vm961 = vsmask.f32 3328
      %vm962 = vsmask.f32 7440
      %vm963 = vmor %vm961, %vm962
      %v965 = vshrl.u32 %v913, 16
      %v967 = vrot.slane %v965, 4
      %v968 = vshll.u32 %v913, 16
      %v970 = vrot.slane %v968, 5
      %v971 = vor.u32 %v967, %v970
      %v972 = vrot.slane %v971, 4
      %v974 = vshll.u32 %v914, 16
      %v976 = vrot.slane %v974, 5
      %v977 = vsel %vm963, %v972, %v976
      %v978 = vshrl.u32 %v914, 16
      %v980 = vrot.slane %v978, 4
      %v981 = vor.u32 %v980, %v976
      %v982 = vrot.slane %v981, 4
      %v984 = vshll.u32 %v945, 16
      %v986 = vrot.slane %v984, 5
      %v987 = vsel %vm963, %v982, %v986
      %v989 = vshrl.u32 %v915, 16
      %v991 = vrot.slane %v989, 4
      %v992 = vshll.u32 %v915, 16
      %v994 = vrot.slane %v992, 5
      %v995 = vor.u32 %v991, %v994
      %v996 = vrot.slane %v995, 4
      %v998 = vshll.u32 %v916, 16
      %v1000 = vrot.slane %v998, 5
      %v1001 = vsel %vm963, %v996, %v1000
      %v1002 = vshrl.u32 %v916, 16
      %v1004 = vrot.slane %v1002, 4
      %v1005 = vor.u32 %v1004, %v1000
      %v1006 = vrot.slane %v1005, 4
      %v1008 = vshll.u32 %v946, 16
      %v1010 = vrot.slane %v1008, 5
      %v1011 = vsel %vm963, %v1006, %v1010
      %v1013 = vshrl.u32 %v917, 16
      %v1015 = vrot.slane %v1013, 4
      %v1016 = vshll.u32 %v917, 16
      %v1018 = vrot.slane %v1016, 5
      %v1019 = vor.u32 %v1015, %v1018
      %v1020 = vrot.slane %v1019, 4
      %v1022 = vshll.u32 %v918, 16
      %v1024 = vrot.slane %v1022, 5
      %v1025 = vsel %vm963, %v1020, %v1024
      %v1026 = vshrl.u32 %v918, 16
      %v1028 = vrot.slane %v1026, 4
      %v1029 = vor.u32 %v1028, %v1024
      %v1030 = vrot.slane %v1029, 4
      %v1032 = vshll.u32 %v947, 16
      %v1034 = vrot.slane %v1032, 5
      %v1035 = vsel %vm963, %v1030, %v1034
      %v1037 = vshrl.u32 %v919, 16
      %v1039 = vrot.slane %v1037, 4
      %v1040 = vshll.u32 %v919, 16
      %v1042 = vrot.slane %v1040, 5
      %v1043 = vor.u32 %v1039, %v1042
      %v1044 = vrot.slane %v1043, 4
      %v1046 = vshll.u32 %v920, 16
      %v1048 = vrot.slane %v1046, 5
      %v1049 = vsel %vm963, %v1044, %v1048
      %v1050 = vshrl.u32 %v920, 16
      %v1052 = vrot.slane %v1050, 4
      %v1053 = vor.u32 %v1052, %v1048
      %v1054 = vrot.slane %v1053, 4
      %v1056 = vshll.u32 %v948, 16
      %v1058 = vrot.slane %v1056, 5
      %v1059 = vsel %vm963, %v1054, %v1058
      %v1061 = vshrl.u32 %v921, 16
      %v1063 = vrot.slane %v1061, 4
      %v1064 = vshll.u32 %v921, 16
      %v1066 = vrot.slane %v1064, 5
      %v1067 = vor.u32 %v1063, %v1066
      %v1068 = vrot.slane %v1067, 4
      %v1070 = vshll.u32 %v922, 16
      %v1072 = vrot.slane %v1070, 5
      %v1073 = vsel %vm963, %v1068, %v1072
      %v1074 = vshrl.u32 %v922, 16
      %v1076 = vrot.slane %v1074, 4
      %v1077 = vor.u32 %v1076, %v1072
      %v1078 = vrot.slane %v1077, 4
      %v1080 = vshll.u32 %v949, 16
      %v1082 = vrot.slane %v1080, 5
      %v1083 = vsel %vm963, %v1078, %v1082
      %v1085 = vshrl.u32 %v923, 16
      %v1087 = vrot.slane %v1085, 4
      %v1088 = vshll.u32 %v923, 16
      %v1090 = vrot.slane %v1088, 5
      %v1091 = vor.u32 %v1087, %v1090
      %v1092 = vrot.slane %v1091, 4
      %v1094 = vshll.u32 %v924, 16
      %v1096 = vrot.slane %v1094, 5
      %v1097 = vsel %vm963, %v1092, %v1096
      %v1098 = vshrl.u32 %v924, 16
      %v1100 = vrot.slane %v1098, 4
      %v1101 = vor.u32 %v1100, %v1096
      %v1102 = vrot.slane %v1101, 4
      %v1104 = vshll.u32 %v950, 16
      %v1106 = vrot.slane %v1104, 5
      %v1107 = vsel %vm963, %v1102, %v1106
      %v1109 = vshrl.u32 %v925, 16
      %v1111 = vrot.slane %v1109, 4
      %v1112 = vshll.u32 %v925, 16
      %v1114 = vrot.slane %v1112, 5
      %v1115 = vor.u32 %v1111, %v1114
      %v1116 = vrot.slane %v1115, 4
      %v1118 = vshll.u32 %v926, 16
      %v1120 = vrot.slane %v1118, 5
      %v1121 = vsel %vm963, %v1116, %v1120
      %v1122 = vshrl.u32 %v926, 16
      %v1124 = vrot.slane %v1122, 4
      %v1125 = vor.u32 %v1124, %v1120
      %v1126 = vrot.slane %v1125, 4
      %v1128 = vshll.u32 %v951, 16
      %v1130 = vrot.slane %v1128, 5
      %v1131 = vsel %vm963, %v1126, %v1130
      %v1133 = vshrl.u32 %v927, 16
      %v1135 = vrot.slane %v1133, 4
      %v1136 = vshll.u32 %v927, 16
      %v1138 = vrot.slane %v1136, 5
      %v1139 = vor.u32 %v1135, %v1138
      %v1140 = vrot.slane %v1139, 4
      %v1142 = vshll.u32 %v928, 16
      %v1144 = vrot.slane %v1142, 5
      %v1145 = vsel %vm963, %v1140, %v1144
      %v1146 = vshrl.u32 %v928, 16
      %v1148 = vrot.slane %v1146, 4
      %v1149 = vor.u32 %v1148, %v1144
      %v1150 = vrot.slane %v1149, 4
      %v1152 = vshll.u32 %v952, 16
      %v1154 = vrot.slane %v1152, 5
      %v1155 = vsel %vm963, %v1150, %v1154
      %v1157 = vshrl.u32 %v929, 16
      %v1159 = vrot.slane %v1157, 4
      %v1160 = vshll.u32 %v929, 16
      %v1162 = vrot.slane %v1160, 5
      %v1163 = vor.u32 %v1159, %v1162
      %v1164 = vrot.slane %v1163, 4
      %v1166 = vshll.u32 %v930, 16
      %v1168 = vrot.slane %v1166, 5
      %v1169 = vsel %vm963, %v1164, %v1168
      %v1170 = vshrl.u32 %v930, 16
      %v1172 = vrot.slane %v1170, 4
      %v1173 = vor.u32 %v1172, %v1168
      %v1174 = vrot.slane %v1173, 4
      %v1176 = vshll.u32 %v953, 16
      %v1178 = vrot.slane %v1176, 5
      %v1179 = vsel %vm963, %v1174, %v1178
      %v1181 = vshrl.u32 %v931, 16
      %v1183 = vrot.slane %v1181, 4
      %v1184 = vshll.u32 %v931, 16
      %v1186 = vrot.slane %v1184, 5
      %v1187 = vor.u32 %v1183, %v1186
      %v1188 = vrot.slane %v1187, 4
      %v1190 = vshll.u32 %v932, 16
      %v1192 = vrot.slane %v1190, 5
      %v1193 = vsel %vm963, %v1188, %v1192
      %v1194 = vshrl.u32 %v932, 16
      %v1196 = vrot.slane %v1194, 4
      %v1197 = vor.u32 %v1196, %v1192
      %v1198 = vrot.slane %v1197, 4
      %v1200 = vshll.u32 %v954, 16
      %v1202 = vrot.slane %v1200, 5
      %v1203 = vsel %vm963, %v1198, %v1202
      %v1205 = vshrl.u32 %v933, 16
      %v1207 = vrot.slane %v1205, 4
      %v1208 = vshll.u32 %v933, 16
      %v1210 = vrot.slane %v1208, 5
      %v1211 = vor.u32 %v1207, %v1210
      %v1212 = vrot.slane %v1211, 4
      %v1214 = vshll.u32 %v934, 16
      %v1216 = vrot.slane %v1214, 5
      %v1217 = vsel %vm963, %v1212, %v1216
      %v1218 = vshrl.u32 %v934, 16
      %v1220 = vrot.slane %v1218, 4
      %v1221 = vor.u32 %v1220, %v1216
      %v1222 = vrot.slane %v1221, 4
      %v1224 = vshll.u32 %v955, 16
      %v1226 = vrot.slane %v1224, 5
      %v1227 = vsel %vm963, %v1222, %v1226
      %v1229 = vshrl.u32 %v935, 16
      %v1231 = vrot.slane %v1229, 4
      %v1232 = vshll.u32 %v935, 16
      %v1234 = vrot.slane %v1232, 5
      %v1235 = vor.u32 %v1231, %v1234
      %v1236 = vrot.slane %v1235, 4
      %v1238 = vshll.u32 %v936, 16
      %v1240 = vrot.slane %v1238, 5
      %v1241 = vsel %vm963, %v1236, %v1240
      %v1242 = vshrl.u32 %v936, 16
      %v1244 = vrot.slane %v1242, 4
      %v1245 = vor.u32 %v1244, %v1240
      %v1246 = vrot.slane %v1245, 4
      %v1248 = vshll.u32 %v956, 16
      %v1250 = vrot.slane %v1248, 5
      %v1251 = vsel %vm963, %v1246, %v1250
      %v1253 = vshrl.u32 %v937, 16
      %v1255 = vrot.slane %v1253, 4
      %v1256 = vshll.u32 %v937, 16
      %v1258 = vrot.slane %v1256, 5
      %v1259 = vor.u32 %v1255, %v1258
      %v1260 = vrot.slane %v1259, 4
      %v1262 = vshll.u32 %v938, 16
      %v1264 = vrot.slane %v1262, 5
      %v1265 = vsel %vm963, %v1260, %v1264
      %v1266 = vshrl.u32 %v938, 16
      %v1268 = vrot.slane %v1266, 4
      %v1269 = vor.u32 %v1268, %v1264
      %v1270 = vrot.slane %v1269, 4
      %v1272 = vshll.u32 %v957, 16
      %v1274 = vrot.slane %v1272, 5
      %v1275 = vsel %vm963, %v1270, %v1274
      %v1277 = vshrl.u32 %v939, 16
      %v1279 = vrot.slane %v1277, 4
      %v1280 = vshll.u32 %v939, 16
      %v1282 = vrot.slane %v1280, 5
      %v1283 = vor.u32 %v1279, %v1282
      %v1284 = vrot.slane %v1283, 4
      %v1286 = vshll.u32 %v940, 16
      %v1288 = vrot.slane %v1286, 5
      %v1289 = vsel %vm963, %v1284, %v1288
      %v1290 = vshrl.u32 %v940, 16
      %v1292 = vrot.slane %v1290, 4
      %v1293 = vor.u32 %v1292, %v1288
      %v1294 = vrot.slane %v1293, 4
      %v1296 = vshll.u32 %v958, 16
      %v1298 = vrot.slane %v1296, 5
      %v1299 = vsel %vm963, %v1294, %v1298
      %v1301 = vshrl.u32 %v941, 16
      %v1303 = vrot.slane %v1301, 4
      %v1304 = vshll.u32 %v941, 16
      %v1306 = vrot.slane %v1304, 5
      %v1307 = vor.u32 %v1303, %v1306
      %v1308 = vrot.slane %v1307, 4
      %v1310 = vshll.u32 %v942, 16
      %v1312 = vrot.slane %v1310, 5
      %v1313 = vsel %vm963, %v1308, %v1312
      %v1314 = vshrl.u32 %v942, 16
      %v1316 = vrot.slane %v1314, 4
      %v1317 = vor.u32 %v1316, %v1312
      %v1318 = vrot.slane %v1317, 4
      %v1320 = vshll.u32 %v959, 16
      %v1322 = vrot.slane %v1320, 5
      %v1323 = vsel %vm963, %v1318, %v1322
      %v1325 = vshrl.u32 %v943, 16
      %v1327 = vrot.slane %v1325, 4
      %v1328 = vshll.u32 %v943, 16
      %v1330 = vrot.slane %v1328, 5
      %v1331 = vor.u32 %v1327, %v1330
      %v1332 = vrot.slane %v1331, 4
      %v1334 = vshll.u32 %v944, 16
      %v1336 = vrot.slane %v1334, 5
      %v1337 = vsel %vm963, %v1332, %v1336
      %v1338 = vshrl.u32 %v944, 16
      %v1340 = vrot.slane %v1338, 4
      %v1341 = vor.u32 %v1340, %v1336
      %v1342 = vrot.slane %v1341, 4
      %v1344 = vshll.u32 %v960, 16
      %v1346 = vrot.slane %v1344, 5
      %v1347 = vsel %vm963, %v1342, %v1346
      %v1348 = vld [vmem:[#allocation2] sm:$0xe]
      %v1349 = vld [vmem:[#allocation2 + $0xc] sm:$0xe]
      %v1350 = vld [vmem:[#allocation2 + $0x18] sm:$0xe]
      %v1351 = vld [vmem:[#allocation2 + $0x24] sm:$0xe]
      %v1352 = vld [vmem:[#allocation2 + $0x30] sm:$0xe]
      %v1353 = vld [vmem:[#allocation2 + $0x3c] sm:$0xe]
      %v1354 = vld [vmem:[#allocation2 + $0x48] sm:$0xe]
      %v1355 = vld [vmem:[#allocation2 + $0x54] sm:$0xe]
      %v1356 = vld [vmem:[#allocation2 + $0x60] sm:$0xe]
      %v1357 = vld [vmem:[#allocation2 + $0x6c] sm:$0xe]
      %v1358 = vld [vmem:[#allocation2 + $0x78] sm:$0xe]
      %v1359 = vld [vmem:[#allocation2 + $0x84] sm:$0xe]
      %v1360 = vld [vmem:[#allocation2 + $0x90] sm:$0xe]
      %v1361 = vld [vmem:[#allocation2 + $0x9c] sm:$0xe]
      %v1362 = vld [vmem:[#allocation2 + $0xa8] sm:$0xe]
      %v1363 = vld [vmem:[#allocation2 + $0xb4] sm:$0xe]
      %vm1412 = vcmask 1042432
      %vm1413 = vcmask 1046532
      %vm1414 = vmor %vm1412, %vm1413
      %v1415 = vrot.slane %v1348, 5
      %v1416 = vrot.slane %v1415, 4
      %v1417 = vrot.slane %v914, 5
      %v1418 = vsel %vm1414, %v1416, %v1417
      %v1419 = vrot.slane %v1417, 4
      %v1420 = vrot.slane %v945, 5
      %v1421 = vsel %vm1414, %v1419, %v1420
      %v1422 = vrot.slane %v1349, 5
      %v1423 = vrot.slane %v1422, 4
      %v1424 = vrot.slane %v916, 5
      %v1425 = vsel %vm1414, %v1423, %v1424
      %v1426 = vrot.slane %v1424, 4
      %v1427 = vrot.slane %v946, 5
      %v1428 = vsel %vm1414, %v1426, %v1427
      %v1429 = vrot.slane %v1350, 5
      %v1430 = vrot.slane %v1429, 4
      %v1431 = vrot.slane %v918, 5
      %v1432 = vsel %vm1414, %v1430, %v1431
      %v1433 = vrot.slane %v1431, 4
      %v1434 = vrot.slane %v947, 5
      %v1435 = vsel %vm1414, %v1433, %v1434
      %v1436 = vrot.slane %v1351, 5
      %v1437 = vrot.slane %v1436, 4
      %v1438 = vrot.slane %v920, 5
      %v1439 = vsel %vm1414, %v1437, %v1438
      %v1440 = vrot.slane %v1438, 4
      %v1441 = vrot.slane %v948, 5
      %v1442 = vsel %vm1414, %v1440, %v1441
      %v1443 = vrot.slane %v1352, 5
      %v1444 = vrot.slane %v1443, 4
      %v1445 = vrot.slane %v922, 5
      %v1446 = vsel %vm1414, %v1444, %v1445
      %v1447 = vrot.slane %v1445, 4
      %v1448 = vrot.slane %v949, 5
      %v1449 = vsel %vm1414, %v1447, %v1448
      %v1450 = vrot.slane %v1353, 5
      %v1451 = vrot.slane %v1450, 4
      %v1452 = vrot.slane %v924, 5
      %v1453 = vsel %vm1414, %v1451, %v1452
      %v1454 = vrot.slane %v1452, 4
      %v1455 = vrot.slane %v950, 5
      %v1456 = vsel %vm1414, %v1454, %v1455
      %v1457 = vrot.slane %v1354, 5
      %v1458 = vrot.slane %v1457, 4
      %v1459 = vrot.slane %v926, 5
      %v1460 = vsel %vm1414, %v1458, %v1459
      %v1461 = vrot.slane %v1459, 4
      %v1462 = vrot.slane %v951, 5
      %v1463 = vsel %vm1414, %v1461, %v1462
      %v1464 = vrot.slane %v1355, 5
      %v1465 = vrot.slane %v1464, 4
      %v1466 = vrot.slane %v928, 5
      %v1467 = vsel %vm1414, %v1465, %v1466
      %v1468 = vrot.slane %v1466, 4
      %v1469 = vrot.slane %v952, 5
      %v1470 = vsel %vm1414, %v1468, %v1469
      %v1471 = vrot.slane %v1356, 5
      %v1472 = vrot.slane %v1471, 4
      %v1473 = vrot.slane %v930, 5
      %v1474 = vsel %vm1414, %v1472, %v1473
      %v1475 = vrot.slane %v1473, 4
      %v1476 = vrot.slane %v953, 5
      %v1477 = vsel %vm1414, %v1475, %v1476
      %v1478 = vrot.slane %v1357, 5
      %v1479 = vrot.slane %v1478, 4
      %v1480 = vrot.slane %v932, 5
      %v1481 = vsel %vm1414, %v1479, %v1480
      %v1482 = vrot.slane %v1480, 4
      %v1483 = vrot.slane %v954, 5
      %v1484 = vsel %vm1414, %v1482, %v1483
      %v1485 = vrot.slane %v1358, 5
      %v1486 = vrot.slane %v1485, 4
      %v1487 = vrot.slane %v934, 5
      %v1488 = vsel %vm1414, %v1486, %v1487
      %v1489 = vrot.slane %v1487, 4
      %v1490 = vrot.slane %v955, 5
      %v1491 = vsel %vm1414, %v1489, %v1490
      %v1492 = vrot.slane %v1359, 5
      %v1493 = vrot.slane %v1492, 4
      %v1494 = vrot.slane %v936, 5
      %v1495 = vsel %vm1414, %v1493, %v1494
      %v1496 = vrot.slane %v1494, 4
      %v1497 = vrot.slane %v956, 5
      %v1498 = vsel %vm1414, %v1496, %v1497
      %v1499 = vrot.slane %v1360, 5
      %v1500 = vrot.slane %v1499, 4
      %v1501 = vrot.slane %v938, 5
      %v1502 = vsel %vm1414, %v1500, %v1501
      %v1503 = vrot.slane %v1501, 4
      %v1504 = vrot.slane %v957, 5
      %v1505 = vsel %vm1414, %v1503, %v1504
      %v1506 = vrot.slane %v1361, 5
      %v1507 = vrot.slane %v1506, 4
      %v1508 = vrot.slane %v940, 5
      %v1509 = vsel %vm1414, %v1507, %v1508
      %v1510 = vrot.slane %v1508, 4
      %v1511 = vrot.slane %v958, 5
      %v1512 = vsel %vm1414, %v1510, %v1511
      %v1513 = vrot.slane %v1362, 5
      %v1514 = vrot.slane %v1513, 4
      %v1515 = vrot.slane %v942, 5
      %v1516 = vsel %vm1414, %v1514, %v1515
      %v1517 = vrot.slane %v1515, 4
      %v1518 = vrot.slane %v959, 5
      %v1519 = vsel %vm1414, %v1517, %v1518
      %v1520 = vrot.slane %v1363, 5
      %v1521 = vrot.slane %v1520, 4
      %v1522 = vrot.slane %v944, 5
      %v1523 = vsel %vm1414, %v1521, %v1522
      %v1524 = vrot.slane %v1522, 4
      %v1525 = vrot.slane %v960, 5
      %v1526 = vsel %vm1414, %v1524, %v1525
      %v1527 = vld [vmem:[%s798] sm:$0xf]
      %v1528 = vld [vmem:[%s798 + $0x4] sm:$0xf]
      %v1529 = vld [vmem:[%s798 + $0xc] sm:$0xf]
      %v1530 = vld [vmem:[%s798 + $0x10] sm:$0xf]
      %v1531 = vld [vmem:[%s798 + $0x18] sm:$0xf]
      %v1532 = vld [vmem:[%s798 + $0x1c] sm:$0xf]
      %v1533 = vld [vmem:[%s798 + $0x24] sm:$0xf]
      %v1534 = vld [vmem:[%s798 + $0x28] sm:$0xf]
      %v1535 = vld [vmem:[%s798 + $0x30] sm:$0xf]
      %v1536 = vld [vmem:[%s798 + $0x34] sm:$0xf]
      %v1537 = vld [vmem:[%s798 + $0x3c] sm:$0xf]
      %v1538 = vld [vmem:[%s798 + $0x40] sm:$0xf]
      %v1539 = vld [vmem:[%s798 + $0x48] sm:$0xf]
      %v1540 = vld [vmem:[%s798 + $0x4c] sm:$0xf]
      %v1541 = vld [vmem:[%s798 + $0x54] sm:$0xf]
      %v1542 = vld [vmem:[%s798 + $0x58] sm:$0xf]
      %v1543 = vld [vmem:[%s798 + $0x60] sm:$0xf]
      %v1544 = vld [vmem:[%s798 + $0x64] sm:$0xf]
      %v1545 = vld [vmem:[%s798 + $0x6c] sm:$0xf]
      %v1546 = vld [vmem:[%s798 + $0x70] sm:$0xf]
      %v1547 = vld [vmem:[%s798 + $0x78] sm:$0xf]
      %v1548 = vld [vmem:[%s798 + $0x7c] sm:$0xf]
      %v1549 = vld [vmem:[%s798 + $0x84] sm:$0xf]
      %v1550 = vld [vmem:[%s798 + $0x88] sm:$0xf]
      %v1551 = vld [vmem:[%s798 + $0x90] sm:$0xf]
      %v1552 = vld [vmem:[%s798 + $0x94] sm:$0xf]
      %v1553 = vld [vmem:[%s798 + $0x9c] sm:$0xf]
      %v1554 = vld [vmem:[%s798 + $0xa0] sm:$0xf]
      %v1555 = vld [vmem:[%s798 + $0xa8] sm:$0xf]
      %v1556 = vld [vmem:[%s798 + $0xac] sm:$0xf]
      %v1557 = vld [vmem:[%s798 + $0xb4] sm:$0xf]
      %v1558 = vld [vmem:[%s798 + $0xb8] sm:$0xf]
      %v1559 = vld [vmem:[%s798 + $0x8] sm:$0x1]
      %v1560 = vld [vmem:[%s798 + $0x14] sm:$0x1]
      %v1561 = vld [vmem:[%s798 + $0x20] sm:$0x1]
      %v1562 = vld [vmem:[%s798 + $0x2c] sm:$0x1]
      %v1563 = vld [vmem:[%s798 + $0x38] sm:$0x1]
      %v1564 = vld [vmem:[%s798 + $0x44] sm:$0x1]
      %v1565 = vld [vmem:[%s798 + $0x50] sm:$0x1]
      %v1566 = vld [vmem:[%s798 + $0x5c] sm:$0x1]
      %v1567 = vld [vmem:[%s798 + $0x68] sm:$0x1]
      %v1568 = vld [vmem:[%s798 + $0x74] sm:$0x1]
      %v1569 = vld [vmem:[%s798 + $0x80] sm:$0x1]
      %v1570 = vld [vmem:[%s798 + $0x8c] sm:$0x1]
      %v1571 = vld [vmem:[%s798 + $0x98] sm:$0x1]
      %v1572 = vld [vmem:[%s798 + $0xa4] sm:$0x1]
      %v1573 = vld [vmem:[%s798 + $0xb0] sm:$0x1]
      %v1574 = vld [vmem:[%s798 + $0xbc] sm:$0x1]
      %v1576 = vshrl.u32 %v1527, 16
      %v1578 = vrot.slane %v1576, 4
      %v1579 = vshll.u32 %v1527, 16
      %v1581 = vrot.slane %v1579, 5
      %v1582 = vor.u32 %v1578, %v1581
      %v1583 = vrot.slane %v1582, 4
      %v1585 = vshll.u32 %v1528, 16
      %v1587 = vrot.slane %v1585, 5
      %v1588 = vsel %vm963, %v1583, %v1587
      %v1589 = vshrl.u32 %v1528, 16
      %v1591 = vrot.slane %v1589, 4
      %v1592 = vor.u32 %v1591, %v1587
      %v1593 = vrot.slane %v1592, 4
      %v1595 = vshll.u32 %v1559, 16
      %v1597 = vrot.slane %v1595, 5
      %v1598 = vsel %vm963, %v1593, %v1597
      %v1600 = vshrl.u32 %v1529, 16
      %v1602 = vrot.slane %v1600, 4
      %v1603 = vshll.u32 %v1529, 16
      %v1605 = vrot.slane %v1603, 5
      %v1606 = vor.u32 %v1602, %v1605
      %v1607 = vrot.slane %v1606, 4
      %v1609 = vshll.u32 %v1530, 16
      %v1611 = vrot.slane %v1609, 5
      %v1612 = vsel %vm963, %v1607, %v1611
      %v1613 = vshrl.u32 %v1530, 16
      %v1615 = vrot.slane %v1613, 4
      %v1616 = vor.u32 %v1615, %v1611
      %v1617 = vrot.slane %v1616, 4
      %v1619 = vshll.u32 %v1560, 16
      %v1621 = vrot.slane %v1619, 5
      %v1622 = vsel %vm963, %v1617, %v1621
      %v1624 = vshrl.u32 %v1531, 16
      %v1626 = vrot.slane %v1624, 4
      %v1627 = vshll.u32 %v1531, 16
      %v1629 = vrot.slane %v1627, 5
      %v1630 = vor.u32 %v1626, %v1629
      %v1631 = vrot.slane %v1630, 4
      %v1633 = vshll.u32 %v1532, 16
      %v1635 = vrot.slane %v1633, 5
      %v1636 = vsel %vm963, %v1631, %v1635
      %v1637 = vshrl.u32 %v1532, 16
      %v1639 = vrot.slane %v1637, 4
      %v1640 = vor.u32 %v1639, %v1635
      %v1641 = vrot.slane %v1640, 4
      %v1643 = vshll.u32 %v1561, 16
      %v1645 = vrot.slane %v1643, 5
      %v1646 = vsel %vm963, %v1641, %v1645
      %v1648 = vshrl.u32 %v1533, 16
      %v1650 = vrot.slane %v1648, 4
      %v1651 = vshll.u32 %v1533, 16
      %v1653 = vrot.slane %v1651, 5
      %v1654 = vor.u32 %v1650, %v1653
      %v1655 = vrot.slane %v1654, 4
      %v1657 = vshll.u32 %v1534, 16
      %v1659 = vrot.slane %v1657, 5
      %v1660 = vsel %vm963, %v1655, %v1659
      %v1661 = vshrl.u32 %v1534, 16
      %v1663 = vrot.slane %v1661, 4
      %v1664 = vor.u32 %v1663, %v1659
      %v1665 = vrot.slane %v1664, 4
      %v1667 = vshll.u32 %v1562, 16
      %v1669 = vrot.slane %v1667, 5
      %v1670 = vsel %vm963, %v1665, %v1669
      %v1672 = vshrl.u32 %v1535, 16
      %v1674 = vrot.slane %v1672, 4
      %v1675 = vshll.u32 %v1535, 16
      %v1677 = vrot.slane %v1675, 5
      %v1678 = vor.u32 %v1674, %v1677
      %v1679 = vrot.slane %v1678, 4
      %v1681 = vshll.u32 %v1536, 16
      %v1683 = vrot.slane %v1681, 5
      %v1684 = vsel %vm963, %v1679, %v1683
      %v1685 = vshrl.u32 %v1536, 16
      %v1687 = vrot.slane %v1685, 4
      %v1688 = vor.u32 %v1687, %v1683
      %v1689 = vrot.slane %v1688, 4
      %v1691 = vshll.u32 %v1563, 16
      %v1693 = vrot.slane %v1691, 5
      %v1694 = vsel %vm963, %v1689, %v1693
      %v1696 = vshrl.u32 %v1537, 16
      %v1698 = vrot.slane %v1696, 4
      %v1699 = vshll.u32 %v1537, 16
      %v1701 = vrot.slane %v1699, 5
      %v1702 = vor.u32 %v1698, %v1701
      %v1703 = vrot.slane %v1702, 4
      %v1705 = vshll.u32 %v1538, 16
      %v1707 = vrot.slane %v1705, 5
      %v1708 = vsel %vm963, %v1703, %v1707
      %v1709 = vshrl.u32 %v1538, 16
      %v1711 = vrot.slane %v1709, 4
      %v1712 = vor.u32 %v1711, %v1707
      %v1713 = vrot.slane %v1712, 4
      %v1715 = vshll.u32 %v1564, 16
      %v1717 = vrot.slane %v1715, 5
      %v1718 = vsel %vm963, %v1713, %v1717
      %v1720 = vshrl.u32 %v1539, 16
      %v1722 = vrot.slane %v1720, 4
      %v1723 = vshll.u32 %v1539, 16
      %v1725 = vrot.slane %v1723, 5
      %v1726 = vor.u32 %v1722, %v1725
      %v1727 = vrot.slane %v1726, 4
      %v1729 = vshll.u32 %v1540, 16
      %v1731 = vrot.slane %v1729, 5
      %v1732 = vsel %vm963, %v1727, %v1731
      %v1733 = vshrl.u32 %v1540, 16
      %v1735 = vrot.slane %v1733, 4
      %v1736 = vor.u32 %v1735, %v1731
      %v1737 = vrot.slane %v1736, 4
      %v1739 = vshll.u32 %v1565, 16
      %v1741 = vrot.slane %v1739, 5
      %v1742 = vsel %vm963, %v1737, %v1741
      %v1744 = vshrl.u32 %v1541, 16
      %v1746 = vrot.slane %v1744, 4
      %v1747 = vshll.u32 %v1541, 16
      %v1749 = vrot.slane %v1747, 5
      %v1750 = vor.u32 %v1746, %v1749
      %v1751 = vrot.slane %v1750, 4
      %v1753 = vshll.u32 %v1542, 16
      %v1755 = vrot.slane %v1753, 5
      %v1756 = vsel %vm963, %v1751, %v1755
      %v1757 = vshrl.u32 %v1542, 16
      %v1759 = vrot.slane %v1757, 4
      %v1760 = vor.u32 %v1759, %v1755
      %v1761 = vrot.slane %v1760, 4
      %v1763 = vshll.u32 %v1566, 16
      %v1765 = vrot.slane %v1763, 5
      %v1766 = vsel %vm963, %v1761, %v1765
      %v1768 = vshrl.u32 %v1543, 16
      %v1770 = vrot.slane %v1768, 4
      %v1771 = vshll.u32 %v1543, 16
      %v1773 = vrot.slane %v1771, 5
      %v1774 = vor.u32 %v1770, %v1773
      %v1775 = vrot.slane %v1774, 4
      %v1777 = vshll.u32 %v1544, 16
      %v1779 = vrot.slane %v1777, 5
      %v1780 = vsel %vm963, %v1775, %v1779
      %v1781 = vshrl.u32 %v1544, 16
      %v1783 = vrot.slane %v1781, 4
      %v1784 = vor.u32 %v1783, %v1779
      %v1785 = vrot.slane %v1784, 4
      %v1787 = vshll.u32 %v1567, 16
      %v1789 = vrot.slane %v1787, 5
      %v1790 = vsel %vm963, %v1785, %v1789
      %v1792 = vshrl.u32 %v1545, 16
      %v1794 = vrot.slane %v1792, 4
      %v1795 = vshll.u32 %v1545, 16
      %v1797 = vrot.slane %v1795, 5
      %v1798 = vor.u32 %v1794, %v1797
      %v1799 = vrot.slane %v1798, 4
      %v1801 = vshll.u32 %v1546, 16
      %v1803 = vrot.slane %v1801, 5
      %v1804 = vsel %vm963, %v1799, %v1803
      %v1805 = vshrl.u32 %v1546, 16
      %v1807 = vrot.slane %v1805, 4
      %v1808 = vor.u32 %v1807, %v1803
      %v1809 = vrot.slane %v1808, 4
      %v1811 = vshll.u32 %v1568, 16
      %v1813 = vrot.slane %v1811, 5
      %v1814 = vsel %vm963, %v1809, %v1813
      %v1816 = vshrl.u32 %v1547, 16
      %v1818 = vrot.slane %v1816, 4
      %v1819 = vshll.u32 %v1547, 16
      %v1821 = vrot.slane %v1819, 5
      %v1822 = vor.u32 %v1818, %v1821
      %v1823 = vrot.slane %v1822, 4
      %v1825 = vshll.u32 %v1548, 16
      %v1827 = vrot.slane %v1825, 5
      %v1828 = vsel %vm963, %v1823, %v1827
      %v1829 = vshrl.u32 %v1548, 16
      %v1831 = vrot.slane %v1829, 4
      %v1832 = vor.u32 %v1831, %v1827
      %v1833 = vrot.slane %v1832, 4
      %v1835 = vshll.u32 %v1569, 16
      %v1837 = vrot.slane %v1835, 5
      %v1838 = vsel %vm963, %v1833, %v1837
      %v1840 = vshrl.u32 %v1549, 16
      %v1842 = vrot.slane %v1840, 4
      %v1843 = vshll.u32 %v1549, 16
      %v1845 = vrot.slane %v1843, 5
      %v1846 = vor.u32 %v1842, %v1845
      %v1847 = vrot.slane %v1846, 4
      %v1849 = vshll.u32 %v1550, 16
      %v1851 = vrot.slane %v1849, 5
      %v1852 = vsel %vm963, %v1847, %v1851
      %v1853 = vshrl.u32 %v1550, 16
      %v1855 = vrot.slane %v1853, 4
      %v1856 = vor.u32 %v1855, %v1851
      %v1857 = vrot.slane %v1856, 4
      %v1859 = vshll.u32 %v1570, 16
      %v1861 = vrot.slane %v1859, 5
      %v1862 = vsel %vm963, %v1857, %v1861
      %v1864 = vshrl.u32 %v1551, 16
      %v1866 = vrot.slane %v1864, 4
      %v1867 = vshll.u32 %v1551, 16
      %v1869 = vrot.slane %v1867, 5
      %v1870 = vor.u32 %v1866, %v1869
      %v1871 = vrot.slane %v1870, 4
      %v1873 = vshll.u32 %v1552, 16
      %v1875 = vrot.slane %v1873, 5
      %v1876 = vsel %vm963, %v1871, %v1875
      %v1877 = vshrl.u32 %v1552, 16
      %v1879 = vrot.slane %v1877, 4
      %v1880 = vor.u32 %v1879, %v1875
      %v1881 = vrot.slane %v1880, 4
      %v1883 = vshll.u32 %v1571, 16
      %v1885 = vrot.slane %v1883, 5
      %v1886 = vsel %vm963, %v1881, %v1885
      %v1888 = vshrl.u32 %v1553, 16
      %v1890 = vrot.slane %v1888, 4
      %v1891 = vshll.u32 %v1553, 16
      %v1893 = vrot.slane %v1891, 5
      %v1894 = vor.u32 %v1890, %v1893
      %v1895 = vrot.slane %v1894, 4
      %v1897 = vshll.u32 %v1554, 16
      %v1899 = vrot.slane %v1897, 5
      %v1900 = vsel %vm963, %v1895, %v1899
      %v1901 = vshrl.u32 %v1554, 16
      %v1903 = vrot.slane %v1901, 4
      %v1904 = vor.u32 %v1903, %v1899
      %v1905 = vrot.slane %v1904, 4
      %v1907 = vshll.u32 %v1572, 16
      %v1909 = vrot.slane %v1907, 5
      %v1910 = vsel %vm963, %v1905, %v1909
      %v1912 = vshrl.u32 %v1555, 16
      %v1914 = vrot.slane %v1912, 4
      %v1915 = vshll.u32 %v1555, 16
      %v1917 = vrot.slane %v1915, 5
      %v1918 = vor.u32 %v1914, %v1917
      %v1919 = vrot.slane %v1918, 4
      %v1921 = vshll.u32 %v1556, 16
      %v1923 = vrot.slane %v1921, 5
      %v1924 = vsel %vm963, %v1919, %v1923
      %v1925 = vshrl.u32 %v1556, 16
      %v1927 = vrot.slane %v1925, 4
      %v1928 = vor.u32 %v1927, %v1923
      %v1929 = vrot.slane %v1928, 4
      %v1931 = vshll.u32 %v1573, 16
      %v1933 = vrot.slane %v1931, 5
      %v1934 = vsel %vm963, %v1929, %v1933
      %v1936 = vshrl.u32 %v1557, 16
      %v1938 = vrot.slane %v1936, 4
      %v1939 = vshll.u32 %v1557, 16
      %v1941 = vrot.slane %v1939, 5
      %v1942 = vor.u32 %v1938, %v1941
      %v1943 = vrot.slane %v1942, 4
      %v1945 = vshll.u32 %v1558, 16
      %v1947 = vrot.slane %v1945, 5
      %v1948 = vsel %vm963, %v1943, %v1947
      %v1949 = vshrl.u32 %v1558, 16
      %v1951 = vrot.slane %v1949, 4
      %v1952 = vor.u32 %v1951, %v1947
      %v1953 = vrot.slane %v1952, 4
      %v1955 = vshll.u32 %v1574, 16
      %v1957 = vrot.slane %v1955, 5
      %v1958 = vsel %vm963, %v1953, %v1957
      %v1959 = vld [vmem:[%s798] sm:$0xe]
      %v1960 = vld [vmem:[%s798 + $0xc] sm:$0xe]
      %v1961 = vld [vmem:[%s798 + $0x18] sm:$0xe]
      %v1962 = vld [vmem:[%s798 + $0x24] sm:$0xe]
      %v1963 = vld [vmem:[%s798 + $0x30] sm:$0xe]
      %v1964 = vld [vmem:[%s798 + $0x3c] sm:$0xe]
      %v1965 = vld [vmem:[%s798 + $0x48] sm:$0xe]
      %v1966 = vld [vmem:[%s798 + $0x54] sm:$0xe]
      %v1967 = vld [vmem:[%s798 + $0x60] sm:$0xe]
      %v1968 = vld [vmem:[%s798 + $0x6c] sm:$0xe]
      %v1969 = vld [vmem:[%s798 + $0x78] sm:$0xe]
      %v1970 = vld [vmem:[%s798 + $0x84] sm:$0xe]
      %v1971 = vld [vmem:[%s798 + $0x90] sm:$0xe]
      %v1972 = vld [vmem:[%s798 + $0x9c] sm:$0xe]
      %v1973 = vld [vmem:[%s798 + $0xa8] sm:$0xe]
      %v1974 = vld [vmem:[%s798 + $0xb4] sm:$0xe]
      %v2023 = vrot.slane %v1959, 5
      %v2024 = vrot.slane %v2023, 4
      %v2025 = vrot.slane %v1528, 5
      %v2026 = vsel %vm1414, %v2024, %v2025
      %v2027 = vrot.slane %v2025, 4
      %v2028 = vrot.slane %v1559, 5
      %v2029 = vsel %vm1414, %v2027, %v2028
      %v2030 = vrot.slane %v1960, 5
      %v2031 = vrot.slane %v2030, 4
      %v2032 = vrot.slane %v1530, 5
      %v2033 = vsel %vm1414, %v2031, %v2032
      %v2034 = vrot.slane %v2032, 4
      %v2035 = vrot.slane %v1560, 5
      %v2036 = vsel %vm1414, %v2034, %v2035
      %v2037 = vrot.slane %v1961, 5
      %v2038 = vrot.slane %v2037, 4
      %v2039 = vrot.slane %v1532, 5
      %v2040 = vsel %vm1414, %v2038, %v2039
      %v2041 = vrot.slane %v2039, 4
      %v2042 = vrot.slane %v1561, 5
      %v2043 = vsel %vm1414, %v2041, %v2042
      %v2044 = vrot.slane %v1962, 5
      %v2045 = vrot.slane %v2044, 4
      %v2046 = vrot.slane %v1534, 5
      %v2047 = vsel %vm1414, %v2045, %v2046
      %v2048 = vrot.slane %v2046, 4
      %v2049 = vrot.slane %v1562, 5
      %v2050 = vsel %vm1414, %v2048, %v2049
      %v2051 = vrot.slane %v1963, 5
      %v2052 = vrot.slane %v2051, 4
      %v2053 = vrot.slane %v1536, 5
      %v2054 = vsel %vm1414, %v2052, %v2053
      %v2055 = vrot.slane %v2053, 4
      %v2056 = vrot.slane %v1563, 5
      %v2057 = vsel %vm1414, %v2055, %v2056
      %v2058 = vrot.slane %v1964, 5
      %v2059 = vrot.slane %v2058, 4
      %v2060 = vrot.slane %v1538, 5
      %v2061 = vsel %vm1414, %v2059, %v2060
      %v2062 = vrot.slane %v2060, 4
      %v2063 = vrot.slane %v1564, 5
      %v2064 = vsel %vm1414, %v2062, %v2063
      %v2065 = vrot.slane %v1965, 5
      %v2066 = vrot.slane %v2065, 4
      %v2067 = vrot.slane %v1540, 5
      %v2068 = vsel %vm1414, %v2066, %v2067
      %v2069 = vrot.slane %v2067, 4
      %v2070 = vrot.slane %v1565, 5
      %v2071 = vsel %vm1414, %v2069, %v2070
      %v2072 = vrot.slane %v1966, 5
      %v2073 = vrot.slane %v2072, 4
      %v2074 = vrot.slane %v1542, 5
      %v2075 = vsel %vm1414, %v2073, %v2074
      %v2076 = vrot.slane %v2074, 4
      %v2077 = vrot.slane %v1566, 5
      %v2078 = vsel %vm1414, %v2076, %v2077
      %v2079 = vrot.slane %v1967, 5
      %v2080 = vrot.slane %v2079, 4
      %v2081 = vrot.slane %v1544, 5
      %v2082 = vsel %vm1414, %v2080, %v2081
      %v2083 = vrot.slane %v2081, 4
      %v2084 = vrot.slane %v1567, 5
      %v2085 = vsel %vm1414, %v2083, %v2084
      %v2086 = vrot.slane %v1968, 5
      %v2087 = vrot.slane %v2086, 4
      %v2088 = vrot.slane %v1546, 5
      %v2089 = vsel %vm1414, %v2087, %v2088
      %v2090 = vrot.slane %v2088, 4
      %v2091 = vrot.slane %v1568, 5
      %v2092 = vsel %vm1414, %v2090, %v2091
      %v2093 = vrot.slane %v1969, 5
      %v2094 = vrot.slane %v2093, 4
      %v2095 = vrot.slane %v1548, 5
      %v2096 = vsel %vm1414, %v2094, %v2095
      %v2097 = vrot.slane %v2095, 4
      %v2098 = vrot.slane %v1569, 5
      %v2099 = vsel %vm1414, %v2097, %v2098
      %v2100 = vrot.slane %v1970, 5
      %v2101 = vrot.slane %v2100, 4
      %v2102 = vrot.slane %v1550, 5
      %v2103 = vsel %vm1414, %v2101, %v2102
      %v2104 = vrot.slane %v2102, 4
      %v2105 = vrot.slane %v1570, 5
      %v2106 = vsel %vm1414, %v2104, %v2105
      %v2107 = vrot.slane %v1971, 5
      %v2108 = vrot.slane %v2107, 4
      %v2109 = vrot.slane %v1552, 5
      %v2110 = vsel %vm1414, %v2108, %v2109
      %v2111 = vrot.slane %v2109, 4
      %v2112 = vrot.slane %v1571, 5
      %v2113 = vsel %vm1414, %v2111, %v2112
      %v2114 = vrot.slane %v1972, 5
      %v2115 = vrot.slane %v2114, 4
      %v2116 = vrot.slane %v1554, 5
      %v2117 = vsel %vm1414, %v2115, %v2116
      %v2118 = vrot.slane %v2116, 4
      %v2119 = vrot.slane %v1572, 5
      %v2120 = vsel %vm1414, %v2118, %v2119
      %v2121 = vrot.slane %v1973, 5
      %v2122 = vrot.slane %v2121, 4
      %v2123 = vrot.slane %v1556, 5
      %v2124 = vsel %vm1414, %v2122, %v2123
      %v2125 = vrot.slane %v2123, 4
      %v2126 = vrot.slane %v1573, 5
      %v2127 = vsel %vm1414, %v2125, %v2126
      %v2128 = vrot.slane %v1974, 5
      %v2129 = vrot.slane %v2128, 4
      %v2130 = vrot.slane %v1558, 5
      %v2131 = vsel %vm1414, %v2129, %v2130
      %v2132 = vrot.slane %v2130, 4
      %v2133 = vrot.slane %v1574, 5
      %v2134 = vsel %vm1414, %v2132, %v2133
      %s2135 = scalar_lea.vmem [#allocation2], 24
      %v2136 = vld [vmem:[%s2135] sm:$0xf]
      %v2137 = vld [vmem:[%s2135 + $0x4] sm:$0xf]
      %v2138 = vld [vmem:[%s2135 + $0xc] sm:$0xf]
      %v2139 = vld [vmem:[%s2135 + $0x10] sm:$0xf]
      %v2140 = vld [vmem:[%s2135 + $0x18] sm:$0xf]
      %v2141 = vld [vmem:[%s2135 + $0x1c] sm:$0xf]
      %v2142 = vld [vmem:[%s2135 + $0x24] sm:$0xf]
      %v2143 = vld [vmem:[%s2135 + $0x28] sm:$0xf]
      %v2144 = vld [vmem:[%s2135 + $0x30] sm:$0xf]
      %v2145 = vld [vmem:[%s2135 + $0x34] sm:$0xf]
      %v2146 = vld [vmem:[%s2135 + $0x3c] sm:$0xf]
      %v2147 = vld [vmem:[%s2135 + $0x40] sm:$0xf]
      %v2148 = vld [vmem:[%s2135 + $0x48] sm:$0xf]
      %v2149 = vld [vmem:[%s2135 + $0x4c] sm:$0xf]
      %v2150 = vld [vmem:[%s2135 + $0x54] sm:$0xf]
      %v2151 = vld [vmem:[%s2135 + $0x58] sm:$0xf]
      %v2152 = vld [vmem:[%s2135 + $0x60] sm:$0xf]
      %v2153 = vld [vmem:[%s2135 + $0x64] sm:$0xf]
      %v2154 = vld [vmem:[%s2135 + $0x6c] sm:$0xf]
      %v2155 = vld [vmem:[%s2135 + $0x70] sm:$0xf]
      %v2156 = vld [vmem:[%s2135 + $0x78] sm:$0xf]
      %v2157 = vld [vmem:[%s2135 + $0x7c] sm:$0xf]
      %v2158 = vld [vmem:[%s2135 + $0x84] sm:$0xf]
      %v2159 = vld [vmem:[%s2135 + $0x88] sm:$0xf]
      %v2160 = vld [vmem:[%s2135 + $0x90] sm:$0xf]
      %v2161 = vld [vmem:[%s2135 + $0x94] sm:$0xf]
      %v2162 = vld [vmem:[%s2135 + $0x9c] sm:$0xf]
      %v2163 = vld [vmem:[%s2135 + $0xa0] sm:$0xf]
      %v2164 = vld [vmem:[%s2135 + $0xa8] sm:$0xf]
      %v2165 = vld [vmem:[%s2135 + $0xac] sm:$0xf]
      %v2166 = vld [vmem:[%s2135 + $0xb4] sm:$0xf]
      %v2167 = vld [vmem:[%s2135 + $0xb8] sm:$0xf]
      %v2168 = vld [vmem:[%s2135 + $0x8] sm:$0x1]
      %v2169 = vld [vmem:[%s2135 + $0x14] sm:$0x1]
      %v2170 = vld [vmem:[%s2135 + $0x20] sm:$0x1]
      %v2171 = vld [vmem:[%s2135 + $0x2c] sm:$0x1]
      %v2172 = vld [vmem:[%s2135 + $0x38] sm:$0x1]
      %v2173 = vld [vmem:[%s2135 + $0x44] sm:$0x1]
      %v2174 = vld [vmem:[%s2135 + $0x50] sm:$0x1]
      %v2175 = vld [vmem:[%s2135 + $0x5c] sm:$0x1]
      %v2176 = vld [vmem:[%s2135 + $0x68] sm:$0x1]
      %v2177 = vld [vmem:[%s2135 + $0x74] sm:$0x1]
      %v2178 = vld [vmem:[%s2135 + $0x80] sm:$0x1]
      %v2179 = vld [vmem:[%s2135 + $0x8c] sm:$0x1]
      %v2180 = vld [vmem:[%s2135 + $0x98] sm:$0x1]
      %v2181 = vld [vmem:[%s2135 + $0xa4] sm:$0x1]
      %v2182 = vld [vmem:[%s2135 + $0xb0] sm:$0x1]
      %v2183 = vld [vmem:[%s2135 + $0xbc] sm:$0x1]
      %v2185 = vshrl.u32 %v2136, 16
      %v2187 = vrot.slane %v2185, 4
      %v2188 = vshll.u32 %v2136, 16
      %v2190 = vrot.slane %v2188, 5
      %v2191 = vor.u32 %v2187, %v2190
      %v2192 = vrot.slane %v2191, 4
      %v2194 = vshll.u32 %v2137, 16
      %v2196 = vrot.slane %v2194, 5
      %v2197 = vsel %vm963, %v2192, %v2196
      %v2198 = vshrl.u32 %v2137, 16
      %v2200 = vrot.slane %v2198, 4
      %v2201 = vor.u32 %v2200, %v2196
      %v2202 = vrot.slane %v2201, 4
      %v2204 = vshll.u32 %v2168, 16
      %v2206 = vrot.slane %v2204, 5
      %v2207 = vsel %vm963, %v2202, %v2206
      %v2209 = vshrl.u32 %v2138, 16
      %v2211 = vrot.slane %v2209, 4
      %v2212 = vshll.u32 %v2138, 16
      %v2214 = vrot.slane %v2212, 5
      %v2215 = vor.u32 %v2211, %v2214
      %v2216 = vrot.slane %v2215, 4
      %v2218 = vshll.u32 %v2139, 16
      %v2220 = vrot.slane %v2218, 5
      %v2221 = vsel %vm963, %v2216, %v2220
      %v2222 = vshrl.u32 %v2139, 16
      %v2224 = vrot.slane %v2222, 4
      %v2225 = vor.u32 %v2224, %v2220
      %v2226 = vrot.slane %v2225, 4
      %v2228 = vshll.u32 %v2169, 16
      %v2230 = vrot.slane %v2228, 5
      %v2231 = vsel %vm963, %v2226, %v2230
      %v2233 = vshrl.u32 %v2140, 16
      %v2235 = vrot.slane %v2233, 4
      %v2236 = vshll.u32 %v2140, 16
      %v2238 = vrot.slane %v2236, 5
      %v2239 = vor.u32 %v2235, %v2238
      %v2240 = vrot.slane %v2239, 4
      %v2242 = vshll.u32 %v2141, 16
      %v2244 = vrot.slane %v2242, 5
      %v2245 = vsel %vm963, %v2240, %v2244
      %v2246 = vshrl.u32 %v2141, 16
      %v2248 = vrot.slane %v2246, 4
      %v2249 = vor.u32 %v2248, %v2244
      %v2250 = vrot.slane %v2249, 4
      %v2252 = vshll.u32 %v2170, 16
      %v2254 = vrot.slane %v2252, 5
      %v2255 = vsel %vm963, %v2250, %v2254
      %v2257 = vshrl.u32 %v2142, 16
      %v2259 = vrot.slane %v2257, 4
      %v2260 = vshll.u32 %v2142, 16
      %v2262 = vrot.slane %v2260, 5
      %v2263 = vor.u32 %v2259, %v2262
      %v2264 = vrot.slane %v2263, 4
      %v2266 = vshll.u32 %v2143, 16
      %v2268 = vrot.slane %v2266, 5
      %v2269 = vsel %vm963, %v2264, %v2268
      %v2270 = vshrl.u32 %v2143, 16
      %v2272 = vrot.slane %v2270, 4
      %v2273 = vor.u32 %v2272, %v2268
      %v2274 = vrot.slane %v2273, 4
      %v2276 = vshll.u32 %v2171, 16
      %v2278 = vrot.slane %v2276, 5
      %v2279 = vsel %vm963, %v2274, %v2278
      %v2281 = vshrl.u32 %v2144, 16
      %v2283 = vrot.slane %v2281, 4
      %v2284 = vshll.u32 %v2144, 16
      %v2286 = vrot.slane %v2284, 5
      %v2287 = vor.u32 %v2283, %v2286
      %v2288 = vrot.slane %v2287, 4
      %v2290 = vshll.u32 %v2145, 16
      %v2292 = vrot.slane %v2290, 5
      %v2293 = vsel %vm963, %v2288, %v2292
      %v2294 = vshrl.u32 %v2145, 16
      %v2296 = vrot.slane %v2294, 4
      %v2297 = vor.u32 %v2296, %v2292
      %v2298 = vrot.slane %v2297, 4
      %v2300 = vshll.u32 %v2172, 16
      %v2302 = vrot.slane %v2300, 5
      %v2303 = vsel %vm963, %v2298, %v2302
      %v2305 = vshrl.u32 %v2146, 16
      %v2307 = vrot.slane %v2305, 4
      %v2308 = vshll.u32 %v2146, 16
      %v2310 = vrot.slane %v2308, 5
      %v2311 = vor.u32 %v2307, %v2310
      %v2312 = vrot.slane %v2311, 4
      %v2314 = vshll.u32 %v2147, 16
      %v2316 = vrot.slane %v2314, 5
      %v2317 = vsel %vm963, %v2312, %v2316
      %v2318 = vshrl.u32 %v2147, 16
      %v2320 = vrot.slane %v2318, 4
      %v2321 = vor.u32 %v2320, %v2316
      %v2322 = vrot.slane %v2321, 4
      %v2324 = vshll.u32 %v2173, 16
      %v2326 = vrot.slane %v2324, 5
      %v2327 = vsel %vm963, %v2322, %v2326
      %v2329 = vshrl.u32 %v2148, 16
      %v2331 = vrot.slane %v2329, 4
      %v2332 = vshll.u32 %v2148, 16
      %v2334 = vrot.slane %v2332, 5
      %v2335 = vor.u32 %v2331, %v2334
      %v2336 = vrot.slane %v2335, 4
      %v2338 = vshll.u32 %v2149, 16
      %v2340 = vrot.slane %v2338, 5
      %v2341 = vsel %vm963, %v2336, %v2340
      %v2342 = vshrl.u32 %v2149, 16
      %v2344 = vrot.slane %v2342, 4
      %v2345 = vor.u32 %v2344, %v2340
      %v2346 = vrot.slane %v2345, 4
      %v2348 = vshll.u32 %v2174, 16
      %v2350 = vrot.slane %v2348, 5
      %v2351 = vsel %vm963, %v2346, %v2350
      %v2353 = vshrl.u32 %v2150, 16
      %v2355 = vrot.slane %v2353, 4
      %v2356 = vshll.u32 %v2150, 16
      %v2358 = vrot.slane %v2356, 5
      %v2359 = vor.u32 %v2355, %v2358
      %v2360 = vrot.slane %v2359, 4
      %v2362 = vshll.u32 %v2151, 16
      %v2364 = vrot.slane %v2362, 5
      %v2365 = vsel %vm963, %v2360, %v2364
      %v2366 = vshrl.u32 %v2151, 16
      %v2368 = vrot.slane %v2366, 4
      %v2369 = vor.u32 %v2368, %v2364
      %v2370 = vrot.slane %v2369, 4
      %v2372 = vshll.u32 %v2175, 16
      %v2374 = vrot.slane %v2372, 5
      %v2375 = vsel %vm963, %v2370, %v2374
      %v2377 = vshrl.u32 %v2152, 16
      %v2379 = vrot.slane %v2377, 4
      %v2380 = vshll.u32 %v2152, 16
      %v2382 = vrot.slane %v2380, 5
      %v2383 = vor.u32 %v2379, %v2382
      %v2384 = vrot.slane %v2383, 4
      %v2386 = vshll.u32 %v2153, 16
      %v2388 = vrot.slane %v2386, 5
      %v2389 = vsel %vm963, %v2384, %v2388
      %v2390 = vshrl.u32 %v2153, 16
      %v2392 = vrot.slane %v2390, 4
      %v2393 = vor.u32 %v2392, %v2388
      %v2394 = vrot.slane %v2393, 4
      %v2396 = vshll.u32 %v2176, 16
      %v2398 = vrot.slane %v2396, 5
      %v2399 = vsel %vm963, %v2394, %v2398
      %v2401 = vshrl.u32 %v2154, 16
      %v2403 = vrot.slane %v2401, 4
      %v2404 = vshll.u32 %v2154, 16
      %v2406 = vrot.slane %v2404, 5
      %v2407 = vor.u32 %v2403, %v2406
      %v2408 = vrot.slane %v2407, 4
      %v2410 = vshll.u32 %v2155, 16
      %v2412 = vrot.slane %v2410, 5
      %v2413 = vsel %vm963, %v2408, %v2412
      %v2414 = vshrl.u32 %v2155, 16
      %v2416 = vrot.slane %v2414, 4
      %v2417 = vor.u32 %v2416, %v2412
      %v2418 = vrot.slane %v2417, 4
      %v2420 = vshll.u32 %v2177, 16
      %v2422 = vrot.slane %v2420, 5
      %v2423 = vsel %vm963, %v2418, %v2422
      %v2425 = vshrl.u32 %v2156, 16
      %v2427 = vrot.slane %v2425, 4
      %v2428 = vshll.u32 %v2156, 16
      %v2430 = vrot.slane %v2428, 5
      %v2431 = vor.u32 %v2427, %v2430
      %v2432 = vrot.slane %v2431, 4
      %v2434 = vshll.u32 %v2157, 16
      %v2436 = vrot.slane %v2434, 5
      %v2437 = vsel %vm963, %v2432, %v2436
      %v2438 = vshrl.u32 %v2157, 16
      %v2440 = vrot.slane %v2438, 4
      %v2441 = vor.u32 %v2440, %v2436
      %v2442 = vrot.slane %v2441, 4
      %v2444 = vshll.u32 %v2178, 16
      %v2446 = vrot.slane %v2444, 5
      %v2447 = vsel %vm963, %v2442, %v2446
      %v2449 = vshrl.u32 %v2158, 16
      %v2451 = vrot.slane %v2449, 4
      %v2452 = vshll.u32 %v2158, 16
      %v2454 = vrot.slane %v2452, 5
      %v2455 = vor.u32 %v2451, %v2454
      %v2456 = vrot.slane %v2455, 4
      %v2458 = vshll.u32 %v2159, 16
      %v2460 = vrot.slane %v2458, 5
      %v2461 = vsel %vm963, %v2456, %v2460
      %v2462 = vshrl.u32 %v2159, 16
      %v2464 = vrot.slane %v2462, 4
      %v2465 = vor.u32 %v2464, %v2460
      %v2466 = vrot.slane %v2465, 4
      %v2468 = vshll.u32 %v2179, 16
      %v2470 = vrot.slane %v2468, 5
      %v2471 = vsel %vm963, %v2466, %v2470
      %v2473 = vshrl.u32 %v2160, 16
      %v2475 = vrot.slane %v2473, 4
      %v2476 = vshll.u32 %v2160, 16
      %v2478 = vrot.slane %v2476, 5
      %v2479 = vor.u32 %v2475, %v2478
      %v2480 = vrot.slane %v2479, 4
      %v2482 = vshll.u32 %v2161, 16
      %v2484 = vrot.slane %v2482, 5
      %v2485 = vsel %vm963, %v2480, %v2484
      %v2486 = vshrl.u32 %v2161, 16
      %v2488 = vrot.slane %v2486, 4
      %v2489 = vor.u32 %v2488, %v2484
      %v2490 = vrot.slane %v2489, 4
      %v2492 = vshll.u32 %v2180, 16
      %v2494 = vrot.slane %v2492, 5
      %v2495 = vsel %vm963, %v2490, %v2494
      %v2497 = vshrl.u32 %v2162, 16
      %v2499 = vrot.slane %v2497, 4
      %v2500 = vshll.u32 %v2162, 16
      %v2502 = vrot.slane %v2500, 5
      %v2503 = vor.u32 %v2499, %v2502
      %v2504 = vrot.slane %v2503, 4
      %v2506 = vshll.u32 %v2163, 16
      %v2508 = vrot.slane %v2506, 5
      %v2509 = vsel %vm963, %v2504, %v2508
      %v2510 = vshrl.u32 %v2163, 16
      %v2512 = vrot.slane %v2510, 4
      %v2513 = vor.u32 %v2512, %v2508
      %v2514 = vrot.slane %v2513, 4
      %v2516 = vshll.u32 %v2181, 16
      %v2518 = vrot.slane %v2516, 5
      %v2519 = vsel %vm963, %v2514, %v2518
      %v2521 = vshrl.u32 %v2164, 16
      %v2523 = vrot.slane %v2521, 4
      %v2524 = vshll.u32 %v2164, 16
      %v2526 = vrot.slane %v2524, 5
      %v2527 = vor.u32 %v2523, %v2526
      %v2528 = vrot.slane %v2527, 4
      %v2530 = vshll.u32 %v2165, 16
      %v2532 = vrot.slane %v2530, 5
      %v2533 = vsel %vm963, %v2528, %v2532
      %v2534 = vshrl.u32 %v2165, 16
      %v2536 = vrot.slane %v2534, 4
      %v2537 = vor.u32 %v2536, %v2532
      %v2538 = vrot.slane %v2537, 4
      %v2540 = vshll.u32 %v2182, 16
      %v2542 = vrot.slane %v2540, 5
      %v2543 = vsel %vm963, %v2538, %v2542
      %v2545 = vshrl.u32 %v2166, 16
      %v2547 = vrot.slane %v2545, 4
      %v2548 = vshll.u32 %v2166, 16
      %v2550 = vrot.slane %v2548, 5
      %v2551 = vor.u32 %v2547, %v2550
      %v2552 = vrot.slane %v2551, 4
      %v2554 = vshll.u32 %v2167, 16
      %v2556 = vrot.slane %v2554, 5
      %v2557 = vsel %vm963, %v2552, %v2556
      %v2558 = vshrl.u32 %v2167, 16
      %v2560 = vrot.slane %v2558, 4
      %v2561 = vor.u32 %v2560, %v2556
      %v2562 = vrot.slane %v2561, 4
      %v2564 = vshll.u32 %v2183, 16
      %v2566 = vrot.slane %v2564, 5
      %v2567 = vsel %vm963, %v2562, %v2566
      %v2568 = vld [vmem:[%s2135] sm:$0xe]
      %v2569 = vld [vmem:[%s2135 + $0xc] sm:$0xe]
      %v2570 = vld [vmem:[%s2135 + $0x18] sm:$0xe]
      %v2571 = vld [vmem:[%s2135 + $0x24] sm:$0xe]
      %v2572 = vld [vmem:[%s2135 + $0x30] sm:$0xe]
      %v2573 = vld [vmem:[%s2135 + $0x3c] sm:$0xe]
      %v2574 = vld [vmem:[%s2135 + $0x48] sm:$0xe]
      %v2575 = vld [vmem:[%s2135 + $0x54] sm:$0xe]
      %v2576 = vld [vmem:[%s2135 + $0x60] sm:$0xe]
      %v2577 = vld [vmem:[%s2135 + $0x6c] sm:$0xe]
      %v2578 = vld [vmem:[%s2135 + $0x78] sm:$0xe]
      %v2579 = vld [vmem:[%s2135 + $0x84] sm:$0xe]
      %v2580 = vld [vmem:[%s2135 + $0x90] sm:$0xe]
      %v2581 = vld [vmem:[%s2135 + $0x9c] sm:$0xe]
      %v2582 = vld [vmem:[%s2135 + $0xa8] sm:$0xe]
      %v2583 = vld [vmem:[%s2135 + $0xb4] sm:$0xe]
      %v2632 = vrot.slane %v2568, 5
      %v2633 = vrot.slane %v2632, 4
      %v2634 = vrot.slane %v2137, 5
      %v2635 = vsel %vm1414, %v2633, %v2634
      %v2636 = vrot.slane %v2634, 4
      %v2637 = vrot.slane %v2168, 5
      %v2638 = vsel %vm1414, %v2636, %v2637
      %v2639 = vrot.slane %v2569, 5
      %v2640 = vrot.slane %v2639, 4
      %v2641 = vrot.slane %v2139, 5
      %v2642 = vsel %vm1414, %v2640, %v2641
      %v2643 = vrot.slane %v2641, 4
      %v2644 = vrot.slane %v2169, 5
      %v2645 = vsel %vm1414, %v2643, %v2644
      %v2646 = vrot.slane %v2570, 5
      %v2647 = vrot.slane %v2646, 4
      %v2648 = vrot.slane %v2141, 5
      %v2649 = vsel %vm1414, %v2647, %v2648
      %v2650 = vrot.slane %v2648, 4
      %v2651 = vrot.slane %v2170, 5
      %v2652 = vsel %vm1414, %v2650, %v2651
      %v2653 = vrot.slane %v2571, 5
      %v2654 = vrot.slane %v2653, 4
      %v2655 = vrot.slane %v2143, 5
      %v2656 = vsel %vm1414, %v2654, %v2655
      %v2657 = vrot.slane %v2655, 4
      %v2658 = vrot.slane %v2171, 5
      %v2659 = vsel %vm1414, %v2657, %v2658
      %v2660 = vrot.slane %v2572, 5
      %v2661 = vrot.slane %v2660, 4
      %v2662 = vrot.slane %v2145, 5
      %v2663 = vsel %vm1414, %v2661, %v2662
      %v2664 = vrot.slane %v2662, 4
      %v2665 = vrot.slane %v2172, 5
      %v2666 = vsel %vm1414, %v2664, %v2665
      %v2667 = vrot.slane %v2573, 5
      %v2668 = vrot.slane %v2667, 4
      %v2669 = vrot.slane %v2147, 5
      %v2670 = vsel %vm1414, %v2668, %v2669
      %v2671 = vrot.slane %v2669, 4
      %v2672 = vrot.slane %v2173, 5
      %v2673 = vsel %vm1414, %v2671, %v2672
      %v2674 = vrot.slane %v2574, 5
      %v2675 = vrot.slane %v2674, 4
      %v2676 = vrot.slane %v2149, 5
      %v2677 = vsel %vm1414, %v2675, %v2676
      %v2678 = vrot.slane %v2676, 4
      %v2679 = vrot.slane %v2174, 5
      %v2680 = vsel %vm1414, %v2678, %v2679
      %v2681 = vrot.slane %v2575, 5
      %v2682 = vrot.slane %v2681, 4
      %v2683 = vrot.slane %v2151, 5
      %v2684 = vsel %vm1414, %v2682, %v2683
      %v2685 = vrot.slane %v2683, 4
      %v2686 = vrot.slane %v2175, 5
      %v2687 = vsel %vm1414, %v2685, %v2686
      %v2688 = vrot.slane %v2576, 5
      %v2689 = vrot.slane %v2688, 4
      %v2690 = vrot.slane %v2153, 5
      %v2691 = vsel %vm1414, %v2689, %v2690
      %v2692 = vrot.slane %v2690, 4
      %v2693 = vrot.slane %v2176, 5
      %v2694 = vsel %vm1414, %v2692, %v2693
      %v2695 = vrot.slane %v2577, 5
      %v2696 = vrot.slane %v2695, 4
      %v2697 = vrot.slane %v2155, 5
      %v2698 = vsel %vm1414, %v2696, %v2697
      %v2699 = vrot.slane %v2697, 4
      %v2700 = vrot.slane %v2177, 5
      %v2701 = vsel %vm1414, %v2699, %v2700
      %v2702 = vrot.slane %v2578, 5
      %v2703 = vrot.slane %v2702, 4
      %v2704 = vrot.slane %v2157, 5
      %v2705 = vsel %vm1414, %v2703, %v2704
      %v2706 = vrot.slane %v2704, 4
      %v2707 = vrot.slane %v2178, 5
      %v2708 = vsel %vm1414, %v2706, %v2707
      %v2709 = vrot.slane %v2579, 5
      %v2710 = vrot.slane %v2709, 4
      %v2711 = vrot.slane %v2159, 5
      %v2712 = vsel %vm1414, %v2710, %v2711
      %v2713 = vrot.slane %v2711, 4
      %v2714 = vrot.slane %v2179, 5
      %v2715 = vsel %vm1414, %v2713, %v2714
      %v2716 = vrot.slane %v2580, 5
      %v2717 = vrot.slane %v2716, 4
      %v2718 = vrot.slane %v2161, 5
      %v2719 = vsel %vm1414, %v2717, %v2718
      %v2720 = vrot.slane %v2718, 4
      %v2721 = vrot.slane %v2180, 5
      %v2722 = vsel %vm1414, %v2720, %v2721
      %v2723 = vrot.slane %v2581, 5
      %v2724 = vrot.slane %v2723, 4
      %v2725 = vrot.slane %v2163, 5
      %v2726 = vsel %vm1414, %v2724, %v2725
      %v2727 = vrot.slane %v2725, 4
      %v2728 = vrot.slane %v2181, 5
      %v2729 = vsel %vm1414, %v2727, %v2728
      %v2730 = vrot.slane %v2582, 5
      %v2731 = vrot.slane %v2730, 4
      %v2732 = vrot.slane %v2165, 5
      %v2733 = vsel %vm1414, %v2731, %v2732
      %v2734 = vrot.slane %v2732, 4
      %v2735 = vrot.slane %v2182, 5
      %v2736 = vsel %vm1414, %v2734, %v2735
      %v2737 = vrot.slane %v2583, 5
      %v2738 = vrot.slane %v2737, 4
      %v2739 = vrot.slane %v2167, 5
      %v2740 = vsel %vm1414, %v2738, %v2739
      %v2741 = vrot.slane %v2739, 4
      %v2742 = vrot.slane %v2183, 5
      %v2743 = vsel %vm1414, %v2741, %v2742
      %v2760 = vunpack.c.l.b16 %v913
      %v2761 = vunpack.c.l.b16 %v914
      %v2762 = vunpack.c.l.b16 %v915
      %v2763 = vunpack.c.l.b16 %v916
      %v2764 = vunpack.c.l.b16 %v917
      %v2765 = vunpack.c.l.b16 %v918
      %v2766 = vunpack.c.l.b16 %v919
      %v2767 = vunpack.c.l.b16 %v920
      %v2768 = vunpack.c.l.b16 %v921
      %v2769 = vunpack.c.l.b16 %v922
      %v2770 = vunpack.c.l.b16 %v923
      %v2771 = vunpack.c.l.b16 %v924
      %v2772 = vunpack.c.l.b16 %v925
      %v2773 = vunpack.c.l.b16 %v926
      %v2774 = vunpack.c.l.b16 %v927
      %v2775 = vunpack.c.l.b16 %v928
      %v2776 = vunpack.c.l.b16 %v929
      %v2777 = vunpack.c.l.b16 %v930
      %v2778 = vunpack.c.l.b16 %v931
      %v2779 = vunpack.c.l.b16 %v932
      %v2780 = vunpack.c.l.b16 %v933
      %v2781 = vunpack.c.l.b16 %v934
      %v2782 = vunpack.c.l.b16 %v935
      %v2783 = vunpack.c.l.b16 %v936
      %v2784 = vunpack.c.l.b16 %v937
      %v2785 = vunpack.c.l.b16 %v938
      %v2786 = vunpack.c.l.b16 %v939
      %v2787 = vunpack.c.l.b16 %v940
      %v2788 = vunpack.c.l.b16 %v941
      %v2789 = vunpack.c.l.b16 %v942
      %v2790 = vunpack.c.l.b16 %v943
      %v2791 = vunpack.c.l.b16 %v944
      %v2792 = vpack.c.b16 %v2761, %v2760
      %v2793 = vpack.c.b16 %v2763, %v2762
      %v2794 = vpack.c.b16 %v2765, %v2764
      %v2795 = vpack.c.b16 %v2767, %v2766
      %v2796 = vpack.c.b16 %v2769, %v2768
      %v2797 = vpack.c.b16 %v2771, %v2770
      %v2798 = vpack.c.b16 %v2773, %v2772
      %v2799 = vpack.c.b16 %v2775, %v2774
      %v2800 = vpack.c.b16 %v2777, %v2776
      %v2801 = vpack.c.b16 %v2779, %v2778
      %v2802 = vpack.c.b16 %v2781, %v2780
      %v2803 = vpack.c.b16 %v2783, %v2782
      %v2804 = vpack.c.b16 %v2785, %v2784
      %v2805 = vpack.c.b16 %v2787, %v2786
      %v2806 = vpack.c.b16 %v2789, %v2788
      %v2807 = vpack.c.b16 %v2791, %v2790
      %v2808 = vunpack.c.l.b16 %v977
      %v2809 = vunpack.c.l.b16 %v987
      %v2810 = vunpack.c.l.b16 %v1001
      %v2811 = vunpack.c.l.b16 %v1011
      %v2812 = vunpack.c.l.b16 %v1025
      %v2813 = vunpack.c.l.b16 %v1035
      %v2814 = vunpack.c.l.b16 %v1049
      %v2815 = vunpack.c.l.b16 %v1059
      %v2816 = vunpack.c.l.b16 %v1073
      %v2817 = vunpack.c.l.b16 %v1083
      %v2818 = vunpack.c.l.b16 %v1097
      %v2819 = vunpack.c.l.b16 %v1107
      %v2820 = vunpack.c.l.b16 %v1121
      %v2821 = vunpack.c.l.b16 %v1131
      %v2822 = vunpack.c.l.b16 %v1145
      %v2823 = vunpack.c.l.b16 %v1155
      %v2824 = vunpack.c.l.b16 %v1169
      %v2825 = vunpack.c.l.b16 %v1179
      %v2826 = vunpack.c.l.b16 %v1193
      %v2827 = vunpack.c.l.b16 %v1203
      %v2828 = vunpack.c.l.b16 %v1217
      %v2829 = vunpack.c.l.b16 %v1227
      %v2830 = vunpack.c.l.b16 %v1241
      %v2831 = vunpack.c.l.b16 %v1251
      %v2832 = vunpack.c.l.b16 %v1265
      %v2833 = vunpack.c.l.b16 %v1275
      %v2834 = vunpack.c.l.b16 %v1289
      %v2835 = vunpack.c.l.b16 %v1299
      %v2836 = vunpack.c.l.b16 %v1313
      %v2837 = vunpack.c.l.b16 %v1323
      %v2838 = vunpack.c.l.b16 %v1337
      %v2839 = vunpack.c.l.b16 %v1347
      %v2840 = vpack.c.b16 %v2809, %v2808
      %v2841 = vpack.c.b16 %v2811, %v2810
      %v2842 = vpack.c.b16 %v2813, %v2812
      %v2843 = vpack.c.b16 %v2815, %v2814
      %v2844 = vpack.c.b16 %v2817, %v2816
      %v2845 = vpack.c.b16 %v2819, %v2818
      %v2846 = vpack.c.b16 %v2821, %v2820
      %v2847 = vpack.c.b16 %v2823, %v2822
      %v2848 = vpack.c.b16 %v2825, %v2824
      %v2849 = vpack.c.b16 %v2827, %v2826
      %v2850 = vpack.c.b16 %v2829, %v2828
      %v2851 = vpack.c.b16 %v2831, %v2830
      %v2852 = vpack.c.b16 %v2833, %v2832
      %v2853 = vpack.c.b16 %v2835, %v2834
      %v2854 = vpack.c.b16 %v2837, %v2836
      %v2855 = vpack.c.b16 %v2839, %v2838
      %2856 = vrot.lane.b32.xlu0 %v2840, 4
      %v2857 = vpop.permute.xlu0 %2856
      %2858 = vrot.lane.b32.xlu0 %v2841, 4
      %v2859 = vpop.permute.xlu0 %2858
      %2860 = vrot.lane.b32.xlu0 %v2842, 4
      %v2861 = vpop.permute.xlu0 %2860
      %2862 = vrot.lane.b32.xlu0 %v2843, 4
      %v2863 = vpop.permute.xlu0 %2862
      %2864 = vrot.lane.b32.xlu0 %v2844, 4
      %v2865 = vpop.permute.xlu0 %2864
      %2866 = vrot.lane.b32.xlu0 %v2845, 4
      %v2867 = vpop.permute.xlu0 %2866
      %2868 = vrot.lane.b32.xlu0 %v2846, 4
      %v2869 = vpop.permute.xlu0 %2868
      %2870 = vrot.lane.b32.xlu0 %v2847, 4
      %v2871 = vpop.permute.xlu0 %2870
      %2872 = vrot.lane.b32.xlu0 %v2848, 4
      %v2873 = vpop.permute.xlu0 %2872
      %2874 = vrot.lane.b32.xlu0 %v2849, 4
      %v2875 = vpop.permute.xlu0 %2874
      %2876 = vrot.lane.b32.xlu0 %v2850, 4
      %v2877 = vpop.permute.xlu0 %2876
      %2878 = vrot.lane.b32.xlu0 %v2851, 4
      %v2879 = vpop.permute.xlu0 %2878
      %2880 = vrot.lane.b32.xlu0 %v2852, 4
      %v2881 = vpop.permute.xlu0 %2880
      %2882 = vrot.lane.b32.xlu0 %v2853, 4
      %v2883 = vpop.permute.xlu0 %2882
      %2884 = vrot.lane.b32.xlu0 %v2854, 4
      %v2885 = vpop.permute.xlu0 %2884
      %2886 = vrot.lane.b32.xlu0 %v2855, 4
      %v2887 = vpop.permute.xlu0 %2886
      %v2888 = vunpack.c.l.b16 %v1418
      %v2889 = vunpack.c.l.b16 %v1421
      %v2890 = vunpack.c.l.b16 %v1425
      %v2891 = vunpack.c.l.b16 %v1428
      %v2892 = vunpack.c.l.b16 %v1432
      %v2893 = vunpack.c.l.b16 %v1435
      %v2894 = vunpack.c.l.b16 %v1439
      %v2895 = vunpack.c.l.b16 %v1442
      %v2896 = vunpack.c.l.b16 %v1446
      %v2897 = vunpack.c.l.b16 %v1449
      %v2898 = vunpack.c.l.b16 %v1453
      %v2899 = vunpack.c.l.b16 %v1456
      %v2900 = vunpack.c.l.b16 %v1460
      %v2901 = vunpack.c.l.b16 %v1463
      %v2902 = vunpack.c.l.b16 %v1467
      %v2903 = vunpack.c.l.b16 %v1470
      %v2904 = vunpack.c.l.b16 %v1474
      %v2905 = vunpack.c.l.b16 %v1477
      %v2906 = vunpack.c.l.b16 %v1481
      %v2907 = vunpack.c.l.b16 %v1484
      %v2908 = vunpack.c.l.b16 %v1488
      %v2909 = vunpack.c.l.b16 %v1491
      %v2910 = vunpack.c.l.b16 %v1495
      %v2911 = vunpack.c.l.b16 %v1498
      %v2912 = vunpack.c.l.b16 %v1502
      %v2913 = vunpack.c.l.b16 %v1505
      %v2914 = vunpack.c.l.b16 %v1509
      %v2915 = vunpack.c.l.b16 %v1512
      %v2916 = vunpack.c.l.b16 %v1516
      %v2917 = vunpack.c.l.b16 %v1519
      %v2918 = vunpack.c.l.b16 %v1523
      %v2919 = vunpack.c.l.b16 %v1526
      %v2920 = vpack.c.b16 %v2889, %v2888
      %v2921 = vpack.c.b16 %v2891, %v2890
      %v2922 = vpack.c.b16 %v2893, %v2892
      %v2923 = vpack.c.b16 %v2895, %v2894
      %v2924 = vpack.c.b16 %v2897, %v2896
      %v2925 = vpack.c.b16 %v2899, %v2898
      %v2926 = vpack.c.b16 %v2901, %v2900
      %v2927 = vpack.c.b16 %v2903, %v2902
      %v2928 = vpack.c.b16 %v2905, %v2904
      %v2929 = vpack.c.b16 %v2907, %v2906
      %v2930 = vpack.c.b16 %v2909, %v2908
      %v2931 = vpack.c.b16 %v2911, %v2910
      %v2932 = vpack.c.b16 %v2913, %v2912
      %v2933 = vpack.c.b16 %v2915, %v2914
      %v2934 = vpack.c.b16 %v2917, %v2916
      %v2935 = vpack.c.b16 %v2919, %v2918
      %2936 = vrot.lane.b32.xlu0 %v2920, 8
      %v2937 = vpop.permute.xlu0 %2936
      %2938 = vrot.lane.b32.xlu0 %v2921, 8
      %v2939 = vpop.permute.xlu0 %2938
      %2940 = vrot.lane.b32.xlu0 %v2922, 8
      %v2941 = vpop.permute.xlu0 %2940
      %2942 = vrot.lane.b32.xlu0 %v2923, 8
      %v2943 = vpop.permute.xlu0 %2942
      %2944 = vrot.lane.b32.xlu0 %v2924, 8
      %v2945 = vpop.permute.xlu0 %2944
      %2946 = vrot.lane.b32.xlu0 %v2925, 8
      %v2947 = vpop.permute.xlu0 %2946
      %2948 = vrot.lane.b32.xlu0 %v2926, 8
      %v2949 = vpop.permute.xlu0 %2948
      %2950 = vrot.lane.b32.xlu0 %v2927, 8
      %v2951 = vpop.permute.xlu0 %2950
      %2952 = vrot.lane.b32.xlu0 %v2928, 8
      %v2953 = vpop.permute.xlu0 %2952
      %2954 = vrot.lane.b32.xlu0 %v2929, 8
      %v2955 = vpop.permute.xlu0 %2954
      %2956 = vrot.lane.b32.xlu0 %v2930, 8
      %v2957 = vpop.permute.xlu0 %2956
      %2958 = vrot.lane.b32.xlu0 %v2931, 8
      %v2959 = vpop.permute.xlu0 %2958
      %2960 = vrot.lane.b32.xlu0 %v2932, 8
      %v2961 = vpop.permute.xlu0 %2960
      %2962 = vrot.lane.b32.xlu0 %v2933, 8
      %v2963 = vpop.permute.xlu0 %2962
      %2964 = vrot.lane.b32.xlu0 %v2934, 8
      %v2965 = vpop.permute.xlu0 %2964
      %2966 = vrot.lane.b32.xlu0 %v2935, 8
      %v2967 = vpop.permute.xlu0 %2966
      %v2984 = vunpack.c.l.b16 %v1527
      %v2985 = vunpack.c.l.b16 %v1528
      %v2986 = vunpack.c.l.b16 %v1529
      %v2987 = vunpack.c.l.b16 %v1530
      %v2988 = vunpack.c.l.b16 %v1531
      %v2989 = vunpack.c.l.b16 %v1532
      %v2990 = vunpack.c.l.b16 %v1533
      %v2991 = vunpack.c.l.b16 %v1534
      %v2992 = vunpack.c.l.b16 %v1535
      %v2993 = vunpack.c.l.b16 %v1536
      %v2994 = vunpack.c.l.b16 %v1537
      %v2995 = vunpack.c.l.b16 %v1538
      %v2996 = vunpack.c.l.b16 %v1539
      %v2997 = vunpack.c.l.b16 %v1540
      %v2998 = vunpack.c.l.b16 %v1541
      %v2999 = vunpack.c.l.b16 %v1542
      %v3000 = vunpack.c.l.b16 %v1543
      %v3001 = vunpack.c.l.b16 %v1544
      %v3002 = vunpack.c.l.b16 %v1545
      %v3003 = vunpack.c.l.b16 %v1546
      %v3004 = vunpack.c.l.b16 %v1547
      %v3005 = vunpack.c.l.b16 %v1548
      %v3006 = vunpack.c.l.b16 %v1549
      %v3007 = vunpack.c.l.b16 %v1550
      %v3008 = vunpack.c.l.b16 %v1551
      %v3009 = vunpack.c.l.b16 %v1552
      %v3010 = vunpack.c.l.b16 %v1553
      %v3011 = vunpack.c.l.b16 %v1554
      %v3012 = vunpack.c.l.b16 %v1555
      %v3013 = vunpack.c.l.b16 %v1556
      %v3014 = vunpack.c.l.b16 %v1557
      %v3015 = vunpack.c.l.b16 %v1558
      %v3016 = vpack.c.b16 %v2985, %v2984
      %v3017 = vpack.c.b16 %v2987, %v2986
      %v3018 = vpack.c.b16 %v2989, %v2988
      %v3019 = vpack.c.b16 %v2991, %v2990
      %v3020 = vpack.c.b16 %v2993, %v2992
      %v3021 = vpack.c.b16 %v2995, %v2994
      %v3022 = vpack.c.b16 %v2997, %v2996
      %v3023 = vpack.c.b16 %v2999, %v2998
      %v3024 = vpack.c.b16 %v3001, %v3000
      %v3025 = vpack.c.b16 %v3003, %v3002
      %v3026 = vpack.c.b16 %v3005, %v3004
      %v3027 = vpack.c.b16 %v3007, %v3006
      %v3028 = vpack.c.b16 %v3009, %v3008
      %v3029 = vpack.c.b16 %v3011, %v3010
      %v3030 = vpack.c.b16 %v3013, %v3012
      %v3031 = vpack.c.b16 %v3015, %v3014
      %3032 = vrot.lane.b32.xlu0 %v3016, 12
      %v3033 = vpop.permute.xlu0 %3032
      %3034 = vrot.lane.b32.xlu0 %v3017, 12
      %v3035 = vpop.permute.xlu0 %3034
      %3036 = vrot.lane.b32.xlu0 %v3018, 12
      %v3037 = vpop.permute.xlu0 %3036
      %3038 = vrot.lane.b32.xlu0 %v3019, 12
      %v3039 = vpop.permute.xlu0 %3038
      %3040 = vrot.lane.b32.xlu0 %v3020, 12
      %v3041 = vpop.permute.xlu0 %3040
      %3042 = vrot.lane.b32.xlu0 %v3021, 12
      %v3043 = vpop.permute.xlu0 %3042
      %3044 = vrot.lane.b32.xlu0 %v3022, 12
      %v3045 = vpop.permute.xlu0 %3044
      %3046 = vrot.lane.b32.xlu0 %v3023, 12
      %v3047 = vpop.permute.xlu0 %3046
      %3048 = vrot.lane.b32.xlu0 %v3024, 12
      %v3049 = vpop.permute.xlu0 %3048
      %3050 = vrot.lane.b32.xlu0 %v3025, 12
      %v3051 = vpop.permute.xlu0 %3050
      %3052 = vrot.lane.b32.xlu0 %v3026, 12
      %v3053 = vpop.permute.xlu0 %3052
      %3054 = vrot.lane.b32.xlu0 %v3027, 12
      %v3055 = vpop.permute.xlu0 %3054
      %3056 = vrot.lane.b32.xlu0 %v3028, 12
      %v3057 = vpop.permute.xlu0 %3056
      %3058 = vrot.lane.b32.xlu0 %v3029, 12
      %v3059 = vpop.permute.xlu0 %3058
      %3060 = vrot.lane.b32.xlu0 %v3030, 12
      %v3061 = vpop.permute.xlu0 %3060
      %3062 = vrot.lane.b32.xlu0 %v3031, 12
      %v3063 = vpop.permute.xlu0 %3062
      %v3064 = vunpack.c.l.b16 %v1588
      %v3065 = vunpack.c.l.b16 %v1598
      %v3066 = vunpack.c.l.b16 %v1612
      %v3067 = vunpack.c.l.b16 %v1622
      %v3068 = vunpack.c.l.b16 %v1636
      %v3069 = vunpack.c.l.b16 %v1646
      %v3070 = vunpack.c.l.b16 %v1660
      %v3071 = vunpack.c.l.b16 %v1670
      %v3072 = vunpack.c.l.b16 %v1684
      %v3073 = vunpack.c.l.b16 %v1694
      %v3074 = vunpack.c.l.b16 %v1708
      %v3075 = vunpack.c.l.b16 %v1718
      %v3076 = vunpack.c.l.b16 %v1732
      %v3077 = vunpack.c.l.b16 %v1742
      %v3078 = vunpack.c.l.b16 %v1756
      %v3079 = vunpack.c.l.b16 %v1766
      %v3080 = vunpack.c.l.b16 %v1780
      %v3081 = vunpack.c.l.b16 %v1790
      %v3082 = vunpack.c.l.b16 %v1804
      %v3083 = vunpack.c.l.b16 %v1814
      %v3084 = vunpack.c.l.b16 %v1828
      %v3085 = vunpack.c.l.b16 %v1838
      %v3086 = vunpack.c.l.b16 %v1852
      %v3087 = vunpack.c.l.b16 %v1862
      %v3088 = vunpack.c.l.b16 %v1876
      %v3089 = vunpack.c.l.b16 %v1886
      %v3090 = vunpack.c.l.b16 %v1900
      %v3091 = vunpack.c.l.b16 %v1910
      %v3092 = vunpack.c.l.b16 %v1924
      %v3093 = vunpack.c.l.b16 %v1934
      %v3094 = vunpack.c.l.b16 %v1948
      %v3095 = vunpack.c.l.b16 %v1958
      %v3096 = vpack.c.b16 %v3065, %v3064
      %v3097 = vpack.c.b16 %v3067, %v3066
      %v3098 = vpack.c.b16 %v3069, %v3068
      %v3099 = vpack.c.b16 %v3071, %v3070
      %v3100 = vpack.c.b16 %v3073, %v3072
      %v3101 = vpack.c.b16 %v3075, %v3074
      %v3102 = vpack.c.b16 %v3077, %v3076
      %v3103 = vpack.c.b16 %v3079, %v3078
      %v3104 = vpack.c.b16 %v3081, %v3080
      %v3105 = vpack.c.b16 %v3083, %v3082
      %v3106 = vpack.c.b16 %v3085, %v3084
      %v3107 = vpack.c.b16 %v3087, %v3086
      %v3108 = vpack.c.b16 %v3089, %v3088
      %v3109 = vpack.c.b16 %v3091, %v3090
      %v3110 = vpack.c.b16 %v3093, %v3092
      %v3111 = vpack.c.b16 %v3095, %v3094
      %3112 = vrot.lane.b32.xlu0 %v3096, 16
      %v3113 = vpop.permute.xlu0 %3112
      %3114 = vrot.lane.b32.xlu0 %v3097, 16
      %v3115 = vpop.permute.xlu0 %3114
      %3116 = vrot.lane.b32.xlu0 %v3098, 16
      %v3117 = vpop.permute.xlu0 %3116
      %3118 = vrot.lane.b32.xlu0 %v3099, 16
      %v3119 = vpop.permute.xlu0 %3118
      %3120 = vrot.lane.b32.xlu0 %v3100, 16
      %v3121 = vpop.permute.xlu0 %3120
      %3122 = vrot.lane.b32.xlu0 %v3101, 16
      %v3123 = vpop.permute.xlu0 %3122
      %3124 = vrot.lane.b32.xlu0 %v3102, 16
      %v3125 = vpop.permute.xlu0 %3124
      %3126 = vrot.lane.b32.xlu0 %v3103, 16
      %v3127 = vpop.permute.xlu0 %3126
      %3128 = vrot.lane.b32.xlu0 %v3104, 16
      %v3129 = vpop.permute.xlu0 %3128
      %3130 = vrot.lane.b32.xlu0 %v3105, 16
      %v3131 = vpop.permute.xlu0 %3130
      %3132 = vrot.lane.b32.xlu0 %v3106, 16
      %v3133 = vpop.permute.xlu0 %3132
      %3134 = vrot.lane.b32.xlu0 %v3107, 16
      %v3135 = vpop.permute.xlu0 %3134
      %3136 = vrot.lane.b32.xlu0 %v3108, 16
      %v3137 = vpop.permute.xlu0 %3136
      %3138 = vrot.lane.b32.xlu0 %v3109, 16
      %v3139 = vpop.permute.xlu0 %3138
      %3140 = vrot.lane.b32.xlu0 %v3110, 16
      %v3141 = vpop.permute.xlu0 %3140
      %3142 = vrot.lane.b32.xlu0 %v3111, 16
      %v3143 = vpop.permute.xlu0 %3142
      %v3144 = vunpack.c.l.b16 %v2026
      %v3145 = vunpack.c.l.b16 %v2029
      %v3146 = vunpack.c.l.b16 %v2033
      %v3147 = vunpack.c.l.b16 %v2036
      %v3148 = vunpack.c.l.b16 %v2040
      %v3149 = vunpack.c.l.b16 %v2043
      %v3150 = vunpack.c.l.b16 %v2047
      %v3151 = vunpack.c.l.b16 %v2050
      %v3152 = vunpack.c.l.b16 %v2054
      %v3153 = vunpack.c.l.b16 %v2057
      %v3154 = vunpack.c.l.b16 %v2061
      %v3155 = vunpack.c.l.b16 %v2064
      %v3156 = vunpack.c.l.b16 %v2068
      %v3157 = vunpack.c.l.b16 %v2071
      %v3158 = vunpack.c.l.b16 %v2075
      %v3159 = vunpack.c.l.b16 %v2078
      %v3160 = vunpack.c.l.b16 %v2082
      %v3161 = vunpack.c.l.b16 %v2085
      %v3162 = vunpack.c.l.b16 %v2089
      %v3163 = vunpack.c.l.b16 %v2092
      %v3164 = vunpack.c.l.b16 %v2096
      %v3165 = vunpack.c.l.b16 %v2099
      %v3166 = vunpack.c.l.b16 %v2103
      %v3167 = vunpack.c.l.b16 %v2106
      %v3168 = vunpack.c.l.b16 %v2110
      %v3169 = vunpack.c.l.b16 %v2113
      %v3170 = vunpack.c.l.b16 %v2117
      %v3171 = vunpack.c.l.b16 %v2120
      %v3172 = vunpack.c.l.b16 %v2124
      %v3173 = vunpack.c.l.b16 %v2127
      %v3174 = vunpack.c.l.b16 %v2131
      %v3175 = vunpack.c.l.b16 %v2134
      %v3176 = vpack.c.b16 %v3145, %v3144
      %v3177 = vpack.c.b16 %v3147, %v3146
      %v3178 = vpack.c.b16 %v3149, %v3148
      %v3179 = vpack.c.b16 %v3151, %v3150
      %v3180 = vpack.c.b16 %v3153, %v3152
      %v3181 = vpack.c.b16 %v3155, %v3154
      %v3182 = vpack.c.b16 %v3157, %v3156
      %v3183 = vpack.c.b16 %v3159, %v3158
      %v3184 = vpack.c.b16 %v3161, %v3160
      %v3185 = vpack.c.b16 %v3163, %v3162
      %v3186 = vpack.c.b16 %v3165, %v3164
      %v3187 = vpack.c.b16 %v3167, %v3166
      %v3188 = vpack.c.b16 %v3169, %v3168
      %v3189 = vpack.c.b16 %v3171, %v3170
      %v3190 = vpack.c.b16 %v3173, %v3172
      %v3191 = vpack.c.b16 %v3175, %v3174
      %3192 = vrot.lane.b32.xlu0 %v3176, 20
      %v3193 = vpop.permute.xlu0 %3192
      %3194 = vrot.lane.b32.xlu0 %v3177, 20
      %v3195 = vpop.permute.xlu0 %3194
      %3196 = vrot.lane.b32.xlu0 %v3178, 20
      %v3197 = vpop.permute.xlu0 %3196
      %3198 = vrot.lane.b32.xlu0 %v3179, 20
      %v3199 = vpop.permute.xlu0 %3198
      %3200 = vrot.lane.b32.xlu0 %v3180, 20
      %v3201 = vpop.permute.xlu0 %3200
      %3202 = vrot.lane.b32.xlu0 %v3181, 20
      %v3203 = vpop.permute.xlu0 %3202
      %3204 = vrot.lane.b32.xlu0 %v3182, 20
      %v3205 = vpop.permute.xlu0 %3204
      %3206 = vrot.lane.b32.xlu0 %v3183, 20
      %v3207 = vpop.permute.xlu0 %3206
      %3208 = vrot.lane.b32.xlu0 %v3184, 20
      %v3209 = vpop.permute.xlu0 %3208
      %3210 = vrot.lane.b32.xlu0 %v3185, 20
      %v3211 = vpop.permute.xlu0 %3210
      %3212 = vrot.lane.b32.xlu0 %v3186, 20
      %v3213 = vpop.permute.xlu0 %3212
      %3214 = vrot.lane.b32.xlu0 %v3187, 20
      %v3215 = vpop.permute.xlu0 %3214
      %3216 = vrot.lane.b32.xlu0 %v3188, 20
      %v3217 = vpop.permute.xlu0 %3216
      %3218 = vrot.lane.b32.xlu0 %v3189, 20
      %v3219 = vpop.permute.xlu0 %3218
      %3220 = vrot.lane.b32.xlu0 %v3190, 20
      %v3221 = vpop.permute.xlu0 %3220
      %3222 = vrot.lane.b32.xlu0 %v3191, 20
      %v3223 = vpop.permute.xlu0 %3222
      %v3240 = vunpack.c.l.b16 %v2136
      %v3241 = vunpack.c.l.b16 %v2137
      %v3242 = vunpack.c.l.b16 %v2138
      %v3243 = vunpack.c.l.b16 %v2139
      %v3244 = vunpack.c.l.b16 %v2140
      %v3245 = vunpack.c.l.b16 %v2141
      %v3246 = vunpack.c.l.b16 %v2142
      %v3247 = vunpack.c.l.b16 %v2143
      %v3248 = vunpack.c.l.b16 %v2144
      %v3249 = vunpack.c.l.b16 %v2145
      %v3250 = vunpack.c.l.b16 %v2146
      %v3251 = vunpack.c.l.b16 %v2147
      %v3252 = vunpack.c.l.b16 %v2148
      %v3253 = vunpack.c.l.b16 %v2149
      %v3254 = vunpack.c.l.b16 %v2150
      %v3255 = vunpack.c.l.b16 %v2151
      %v3256 = vunpack.c.l.b16 %v2152
      %v3257 = vunpack.c.l.b16 %v2153
      %v3258 = vunpack.c.l.b16 %v2154
      %v3259 = vunpack.c.l.b16 %v2155
      %v3260 = vunpack.c.l.b16 %v2156
      %v3261 = vunpack.c.l.b16 %v2157
      %v3262 = vunpack.c.l.b16 %v2158
      %v3263 = vunpack.c.l.b16 %v2159
      %v3264 = vunpack.c.l.b16 %v2160
      %v3265 = vunpack.c.l.b16 %v2161
      %v3266 = vunpack.c.l.b16 %v2162
      %v3267 = vunpack.c.l.b16 %v2163
      %v3268 = vunpack.c.l.b16 %v2164
      %v3269 = vunpack.c.l.b16 %v2165
      %v3270 = vunpack.c.l.b16 %v2166
      %v3271 = vunpack.c.l.b16 %v2167
      %v3272 = vpack.c.b16 %v3241, %v3240
      %v3273 = vpack.c.b16 %v3243, %v3242
      %v3274 = vpack.c.b16 %v3245, %v3244
      %v3275 = vpack.c.b16 %v3247, %v3246
      %v3276 = vpack.c.b16 %v3249, %v3248
      %v3277 = vpack.c.b16 %v3251, %v3250
      %v3278 = vpack.c.b16 %v3253, %v3252
      %v3279 = vpack.c.b16 %v3255, %v3254
      %v3280 = vpack.c.b16 %v3257, %v3256
      %v3281 = vpack.c.b16 %v3259, %v3258
      %v3282 = vpack.c.b16 %v3261, %v3260
      %v3283 = vpack.c.b16 %v3263, %v3262
      %v3284 = vpack.c.b16 %v3265, %v3264
      %v3285 = vpack.c.b16 %v3267, %v3266
      %v3286 = vpack.c.b16 %v3269, %v3268
      %v3287 = vpack.c.b16 %v3271, %v3270
      %3288 = vrot.lane.b32.xlu0 %v3272, 24
      %v3289 = vpop.permute.xlu0 %3288
      %3290 = vrot.lane.b32.xlu0 %v3273, 24
      %v3291 = vpop.permute.xlu0 %3290
      %3292 = vrot.lane.b32.xlu0 %v3274, 24
      %v3293 = vpop.permute.xlu0 %3292
      %3294 = vrot.lane.b32.xlu0 %v3275, 24
      %v3295 = vpop.permute.xlu0 %3294
      %3296 = vrot.lane.b32.xlu0 %v3276, 24
      %v3297 = vpop.permute.xlu0 %3296
      %3298 = vrot.lane.b32.xlu0 %v3277, 24
      %v3299 = vpop.permute.xlu0 %3298
      %3300 = vrot.lane.b32.xlu0 %v3278, 24
      %v3301 = vpop.permute.xlu0 %3300
      %3302 = vrot.lane.b32.xlu0 %v3279, 24
      %v3303 = vpop.permute.xlu0 %3302
      %3304 = vrot.lane.b32.xlu0 %v3280, 24
      %v3305 = vpop.permute.xlu0 %3304
      %3306 = vrot.lane.b32.xlu0 %v3281, 24
      %v3307 = vpop.permute.xlu0 %3306
      %3308 = vrot.lane.b32.xlu0 %v3282, 24
      %v3309 = vpop.permute.xlu0 %3308
      %3310 = vrot.lane.b32.xlu0 %v3283, 24
      %v3311 = vpop.permute.xlu0 %3310
      %3312 = vrot.lane.b32.xlu0 %v3284, 24
      %v3313 = vpop.permute.xlu0 %3312
      %3314 = vrot.lane.b32.xlu0 %v3285, 24
      %v3315 = vpop.permute.xlu0 %3314
      %3316 = vrot.lane.b32.xlu0 %v3286, 24
      %v3317 = vpop.permute.xlu0 %3316
      %3318 = vrot.lane.b32.xlu0 %v3287, 24
      %v3319 = vpop.permute.xlu0 %3318
      %v3320 = vunpack.c.l.b16 %v2197
      %v3321 = vunpack.c.l.b16 %v2207
      %v3322 = vunpack.c.l.b16 %v2221
      %v3323 = vunpack.c.l.b16 %v2231
      %v3324 = vunpack.c.l.b16 %v2245
      %v3325 = vunpack.c.l.b16 %v2255
      %v3326 = vunpack.c.l.b16 %v2269
      %v3327 = vunpack.c.l.b16 %v2279
      %v3328 = vunpack.c.l.b16 %v2293
      %v3329 = vunpack.c.l.b16 %v2303
      %v3330 = vunpack.c.l.b16 %v2317
      %v3331 = vunpack.c.l.b16 %v2327
      %v3332 = vunpack.c.l.b16 %v2341
      %v3333 = vunpack.c.l.b16 %v2351
      %v3334 = vunpack.c.l.b16 %v2365
      %v3335 = vunpack.c.l.b16 %v2375
      %v3336 = vunpack.c.l.b16 %v2389
      %v3337 = vunpack.c.l.b16 %v2399
      %v3338 = vunpack.c.l.b16 %v2413
      %v3339 = vunpack.c.l.b16 %v2423
      %v3340 = vunpack.c.l.b16 %v2437
      %v3341 = vunpack.c.l.b16 %v2447
      %v3342 = vunpack.c.l.b16 %v2461
      %v3343 = vunpack.c.l.b16 %v2471
      %v3344 = vunpack.c.l.b16 %v2485
      %v3345 = vunpack.c.l.b16 %v2495
      %v3346 = vunpack.c.l.b16 %v2509
      %v3347 = vunpack.c.l.b16 %v2519
      %v3348 = vunpack.c.l.b16 %v2533
      %v3349 = vunpack.c.l.b16 %v2543
      %v3350 = vunpack.c.l.b16 %v2557
      %v3351 = vunpack.c.l.b16 %v2567
      %v3352 = vpack.c.b16 %v3321, %v3320
      %v3353 = vpack.c.b16 %v3323, %v3322
      %v3354 = vpack.c.b16 %v3325, %v3324
      %v3355 = vpack.c.b16 %v3327, %v3326
      %v3356 = vpack.c.b16 %v3329, %v3328
      %v3357 = vpack.c.b16 %v3331, %v3330
      %v3358 = vpack.c.b16 %v3333, %v3332
      %v3359 = vpack.c.b16 %v3335, %v3334
      %v3360 = vpack.c.b16 %v3337, %v3336
      %v3361 = vpack.c.b16 %v3339, %v3338
      %v3362 = vpack.c.b16 %v3341, %v3340
      %v3363 = vpack.c.b16 %v3343, %v3342
      %v3364 = vpack.c.b16 %v3345, %v3344
      %v3365 = vpack.c.b16 %v3347, %v3346
      %v3366 = vpack.c.b16 %v3349, %v3348
      %v3367 = vpack.c.b16 %v3351, %v3350
      %3368 = vrot.lane.b32.xlu0 %v3352, 28
      %v3369 = vpop.permute.xlu0 %3368
      %3370 = vrot.lane.b32.xlu0 %v3353, 28
      %v3371 = vpop.permute.xlu0 %3370
      %3372 = vrot.lane.b32.xlu0 %v3354, 28
      %v3373 = vpop.permute.xlu0 %3372
      %3374 = vrot.lane.b32.xlu0 %v3355, 28
      %v3375 = vpop.permute.xlu0 %3374
      %3376 = vrot.lane.b32.xlu0 %v3356, 28
      %v3377 = vpop.permute.xlu0 %3376
      %3378 = vrot.lane.b32.xlu0 %v3357, 28
      %v3379 = vpop.permute.xlu0 %3378
      %3380 = vrot.lane.b32.xlu0 %v3358, 28
      %v3381 = vpop.permute.xlu0 %3380
      %3382 = vrot.lane.b32.xlu0 %v3359, 28
      %v3383 = vpop.permute.xlu0 %3382
      %3384 = vrot.lane.b32.xlu0 %v3360, 28
      %v3385 = vpop.permute.xlu0 %3384
      %3386 = vrot.lane.b32.xlu0 %v3361, 28
      %v3387 = vpop.permute.xlu0 %3386
      %3388 = vrot.lane.b32.xlu0 %v3362, 28
      %v3389 = vpop.permute.xlu0 %3388
      %3390 = vrot.lane.b32.xlu0 %v3363, 28
      %v3391 = vpop.permute.xlu0 %3390
      %3392 = vrot.lane.b32.xlu0 %v3364, 28
      %v3393 = vpop.permute.xlu0 %3392
      %3394 = vrot.lane.b32.xlu0 %v3365, 28
      %v3395 = vpop.permute.xlu0 %3394
      %3396 = vrot.lane.b32.xlu0 %v3366, 28
      %v3397 = vpop.permute.xlu0 %3396
      %3398 = vrot.lane.b32.xlu0 %v3367, 28
      %v3399 = vpop.permute.xlu0 %3398
      %v3400 = vunpack.c.l.b16 %v2635
      %v3401 = vunpack.c.l.b16 %v2638
      %v3402 = vunpack.c.l.b16 %v2642
      %v3403 = vunpack.c.l.b16 %v2645
      %v3404 = vunpack.c.l.b16 %v2649
      %v3405 = vunpack.c.l.b16 %v2652
      %v3406 = vunpack.c.l.b16 %v2656
      %v3407 = vunpack.c.l.b16 %v2659
      %v3408 = vunpack.c.l.b16 %v2663
      %v3409 = vunpack.c.l.b16 %v2666
      %v3410 = vunpack.c.l.b16 %v2670
      %v3411 = vunpack.c.l.b16 %v2673
      %v3412 = vunpack.c.l.b16 %v2677
      %v3413 = vunpack.c.l.b16 %v2680
      %v3414 = vunpack.c.l.b16 %v2684
      %v3415 = vunpack.c.l.b16 %v2687
      %v3416 = vunpack.c.l.b16 %v2691
      %v3417 = vunpack.c.l.b16 %v2694
      %v3418 = vunpack.c.l.b16 %v2698
      %v3419 = vunpack.c.l.b16 %v2701
      %v3420 = vunpack.c.l.b16 %v2705
      %v3421 = vunpack.c.l.b16 %v2708
      %v3422 = vunpack.c.l.b16 %v2712
      %v3423 = vunpack.c.l.b16 %v2715
      %v3424 = vunpack.c.l.b16 %v2719
      %v3425 = vunpack.c.l.b16 %v2722
      %v3426 = vunpack.c.l.b16 %v2726
      %v3427 = vunpack.c.l.b16 %v2729
      %v3428 = vunpack.c.l.b16 %v2733
      %v3429 = vunpack.c.l.b16 %v2736
      %v3430 = vunpack.c.l.b16 %v2740
      %v3431 = vunpack.c.l.b16 %v2743
      %v3432 = vpack.c.b16 %v3401, %v3400
      %v3433 = vpack.c.b16 %v3403, %v3402
      %v3434 = vpack.c.b16 %v3405, %v3404
      %v3435 = vpack.c.b16 %v3407, %v3406
      %v3436 = vpack.c.b16 %v3409, %v3408
      %v3437 = vpack.c.b16 %v3411, %v3410
      %v3438 = vpack.c.b16 %v3413, %v3412
      %v3439 = vpack.c.b16 %v3415, %v3414
      %v3440 = vpack.c.b16 %v3417, %v3416
      %v3441 = vpack.c.b16 %v3419, %v3418
      %v3442 = vpack.c.b16 %v3421, %v3420
      %v3443 = vpack.c.b16 %v3423, %v3422
      %v3444 = vpack.c.b16 %v3425, %v3424
      %v3445 = vpack.c.b16 %v3427, %v3426
      %v3446 = vpack.c.b16 %v3429, %v3428
      %v3447 = vpack.c.b16 %v3431, %v3430
      %3448 = vrot.lane.b32.xlu0 %v3432, 32
      %v3449 = vpop.permute.xlu0 %3448
      %3450 = vrot.lane.b32.xlu0 %v3433, 32
      %v3451 = vpop.permute.xlu0 %3450
      %3452 = vrot.lane.b32.xlu0 %v3434, 32
      %v3453 = vpop.permute.xlu0 %3452
      %3454 = vrot.lane.b32.xlu0 %v3435, 32
      %v3455 = vpop.permute.xlu0 %3454
      %3456 = vrot.lane.b32.xlu0 %v3436, 32
      %v3457 = vpop.permute.xlu0 %3456
      %3458 = vrot.lane.b32.xlu0 %v3437, 32
      %v3459 = vpop.permute.xlu0 %3458
      %3460 = vrot.lane.b32.xlu0 %v3438, 32
      %v3461 = vpop.permute.xlu0 %3460
      %3462 = vrot.lane.b32.xlu0 %v3439, 32
      %v3463 = vpop.permute.xlu0 %3462
      %3464 = vrot.lane.b32.xlu0 %v3440, 32
      %v3465 = vpop.permute.xlu0 %3464
      %3466 = vrot.lane.b32.xlu0 %v3441, 32
      %v3467 = vpop.permute.xlu0 %3466
      %3468 = vrot.lane.b32.xlu0 %v3442, 32
      %v3469 = vpop.permute.xlu0 %3468
      %3470 = vrot.lane.b32.xlu0 %v3443, 32
      %v3471 = vpop.permute.xlu0 %3470
      %3472 = vrot.lane.b32.xlu0 %v3444, 32
      %v3473 = vpop.permute.xlu0 %3472
      %3474 = vrot.lane.b32.xlu0 %v3445, 32
      %v3475 = vpop.permute.xlu0 %3474
      %3476 = vrot.lane.b32.xlu0 %v3446, 32
      %v3477 = vpop.permute.xlu0 %3476
      %3478 = vrot.lane.b32.xlu0 %v3447, 32
      %v3479 = vpop.permute.xlu0 %3478
      %vm3480 = vcmask 31744
      %v3483 = vsel %vm3480, %v2792, %v2857
      %v3486 = vsel %vm3480, %v2793, %v2859
      %v3489 = vsel %vm3480, %v2794, %v2861
      %v3492 = vsel %vm3480, %v2795, %v2863
      %v3495 = vsel %vm3480, %v2796, %v2865
      %v3498 = vsel %vm3480, %v2797, %v2867
      %v3501 = vsel %vm3480, %v2798, %v2869
      %v3504 = vsel %vm3480, %v2799, %v2871
      %v3507 = vsel %vm3480, %v2800, %v2873
      %v3510 = vsel %vm3480, %v2801, %v2875
      %v3513 = vsel %vm3480, %v2802, %v2877
      %v3516 = vsel %vm3480, %v2803, %v2879
      %v3519 = vsel %vm3480, %v2804, %v2881
      %v3522 = vsel %vm3480, %v2805, %v2883
      %v3525 = vsel %vm3480, %v2806, %v2885
      %v3528 = vsel %vm3480, %v2807, %v2887
      %vm3529 = vcmask 64512
      %v3531 = vsel %vm3529, %v3483, %v2937
      %v3533 = vsel %vm3529, %v3486, %v2939
      %v3535 = vsel %vm3529, %v3489, %v2941
      %v3537 = vsel %vm3529, %v3492, %v2943
      %v3539 = vsel %vm3529, %v3495, %v2945
      %v3541 = vsel %vm3529, %v3498, %v2947
      %v3543 = vsel %vm3529, %v3501, %v2949
      %v3545 = vsel %vm3529, %v3504, %v2951
      %v3547 = vsel %vm3529, %v3507, %v2953
      %v3549 = vsel %vm3529, %v3510, %v2955
      %v3551 = vsel %vm3529, %v3513, %v2957
      %v3553 = vsel %vm3529, %v3516, %v2959
      %v3555 = vsel %vm3529, %v3519, %v2961
      %v3557 = vsel %vm3529, %v3522, %v2963
      %v3559 = vsel %vm3529, %v3525, %v2965
      %v3561 = vsel %vm3529, %v3528, %v2967
      %vm3562 = vcmask 97280
      %v3564 = vsel %vm3562, %v3531, %v3033
      %v3566 = vsel %vm3562, %v3533, %v3035
      %v3568 = vsel %vm3562, %v3535, %v3037
      %v3570 = vsel %vm3562, %v3537, %v3039
      %v3572 = vsel %vm3562, %v3539, %v3041
      %v3574 = vsel %vm3562, %v3541, %v3043
      %v3576 = vsel %vm3562, %v3543, %v3045
      %v3578 = vsel %vm3562, %v3545, %v3047
      %v3580 = vsel %vm3562, %v3547, %v3049
      %v3582 = vsel %vm3562, %v3549, %v3051
      %v3584 = vsel %vm3562, %v3551, %v3053
      %v3586 = vsel %vm3562, %v3553, %v3055
      %v3588 = vsel %vm3562, %v3555, %v3057
      %v3590 = vsel %vm3562, %v3557, %v3059
      %v3592 = vsel %vm3562, %v3559, %v3061
      %v3594 = vsel %vm3562, %v3561, %v3063
      %vm3595 = vcmask 130048
      %v3597 = vsel %vm3595, %v3564, %v3113
      %v3599 = vsel %vm3595, %v3566, %v3115
      %v3601 = vsel %vm3595, %v3568, %v3117
      %v3603 = vsel %vm3595, %v3570, %v3119
      %v3605 = vsel %vm3595, %v3572, %v3121
      %v3607 = vsel %vm3595, %v3574, %v3123
      %v3609 = vsel %vm3595, %v3576, %v3125
      %v3611 = vsel %vm3595, %v3578, %v3127
      %v3613 = vsel %vm3595, %v3580, %v3129
      %v3615 = vsel %vm3595, %v3582, %v3131
      %v3617 = vsel %vm3595, %v3584, %v3133
      %v3619 = vsel %vm3595, %v3586, %v3135
      %v3621 = vsel %vm3595, %v3588, %v3137
      %v3623 = vsel %vm3595, %v3590, %v3139
      %v3625 = vsel %vm3595, %v3592, %v3141
      %v3627 = vsel %vm3595, %v3594, %v3143
      %vm3628 = vcmask 162816
      %v3630 = vsel %vm3628, %v3597, %v3193
      %v3632 = vsel %vm3628, %v3599, %v3195
      %v3634 = vsel %vm3628, %v3601, %v3197
      %v3636 = vsel %vm3628, %v3603, %v3199
      %v3638 = vsel %vm3628, %v3605, %v3201
      %v3640 = vsel %vm3628, %v3607, %v3203
      %v3642 = vsel %vm3628, %v3609, %v3205
      %v3644 = vsel %vm3628, %v3611, %v3207
      %v3646 = vsel %vm3628, %v3613, %v3209
      %v3648 = vsel %vm3628, %v3615, %v3211
      %v3650 = vsel %vm3628, %v3617, %v3213
      %v3652 = vsel %vm3628, %v3619, %v3215
      %v3654 = vsel %vm3628, %v3621, %v3217
      %v3656 = vsel %vm3628, %v3623, %v3219
      %v3658 = vsel %vm3628, %v3625, %v3221
      %v3660 = vsel %vm3628, %v3627, %v3223
      %vm3661 = vcmask 195584
      %v3663 = vsel %vm3661, %v3630, %v3289
      %v3665 = vsel %vm3661, %v3632, %v3291
      %v3667 = vsel %vm3661, %v3634, %v3293
      %v3669 = vsel %vm3661, %v3636, %v3295
      %v3671 = vsel %vm3661, %v3638, %v3297
      %v3673 = vsel %vm3661, %v3640, %v3299
      %v3675 = vsel %vm3661, %v3642, %v3301
      %v3677 = vsel %vm3661, %v3644, %v3303
      %v3679 = vsel %vm3661, %v3646, %v3305
      %v3681 = vsel %vm3661, %v3648, %v3307
      %v3683 = vsel %vm3661, %v3650, %v3309
      %v3685 = vsel %vm3661, %v3652, %v3311
      %v3687 = vsel %vm3661, %v3654, %v3313
      %v3689 = vsel %vm3661, %v3656, %v3315
      %v3691 = vsel %vm3661, %v3658, %v3317
      %v3693 = vsel %vm3661, %v3660, %v3319
      %vm3694 = vcmask 228352
      %v3696 = vsel %vm3694, %v3663, %v3369
      %v3698 = vsel %vm3694, %v3665, %v3371
      %v3700 = vsel %vm3694, %v3667, %v3373
      %v3702 = vsel %vm3694, %v3669, %v3375
      %v3704 = vsel %vm3694, %v3671, %v3377
      %v3706 = vsel %vm3694, %v3673, %v3379
      %v3708 = vsel %vm3694, %v3675, %v3381
      %v3710 = vsel %vm3694, %v3677, %v3383
      %v3712 = vsel %vm3694, %v3679, %v3385
      %v3714 = vsel %vm3694, %v3681, %v3387
      %v3716 = vsel %vm3694, %v3683, %v3389
      %v3718 = vsel %vm3694, %v3685, %v3391
      %v3720 = vsel %vm3694, %v3687, %v3393
      %v3722 = vsel %vm3694, %v3689, %v3395
      %v3724 = vsel %vm3694, %v3691, %v3397
      %v3726 = vsel %vm3694, %v3693, %v3399
      %vm3727 = vcmask 261120
      %v3729 = vsel %vm3727, %v3696, %v3449
      %v3731 = vsel %vm3727, %v3698, %v3451
      %v3733 = vsel %vm3727, %v3700, %v3453
      %v3735 = vsel %vm3727, %v3702, %v3455
      %v3737 = vsel %vm3727, %v3704, %v3457
      %v3739 = vsel %vm3727, %v3706, %v3459
      %v3741 = vsel %vm3727, %v3708, %v3461
      %v3743 = vsel %vm3727, %v3710, %v3463
      %v3745 = vsel %vm3727, %v3712, %v3465
      %v3747 = vsel %vm3727, %v3714, %v3467
      %v3749 = vsel %vm3727, %v3716, %v3469
      %v3751 = vsel %vm3727, %v3718, %v3471
      %v3753 = vsel %vm3727, %v3720, %v3473
      %v3755 = vsel %vm3727, %v3722, %v3475
      %v3757 = vsel %vm3727, %v3724, %v3477
      %v3759 = vsel %vm3727, %v3726, %v3479
      %v3760 = vld [vmem:[%s1] sm:$0xf]
      %v3761 = vld [vmem:[%s1 + $0x4] sm:$0xf]
      %v3762 = vld [vmem:[%s1 + $0x8] sm:$0xf]
      %v3763 = vld [vmem:[%s1 + $0xc] sm:$0xf]
      %v3764 = vld [vmem:[%s1 + $0x10] sm:$0x3]
      %v3765 = vld [vmem:[%s2] sm:$0x1]
      %v3767 = vlaneseq
      %v3768 = vshrl.u32 %v3767, 7
      %v3769 = vsub.s32 0, %v3768
      %v3770 = vrot.slane %v3765, %v3769
      %v3777 = vunpack.c.l.b16 %v3760
      %v3778 = vunpack.c.l.b16 %v3761
      %v3779 = vunpack.c.l.b16 %v3762
      %v3780 = vunpack.c.l.b16 %v3763
      %v3781 = vunpack.c.l.b16 %v3764
      %v3782 = vpack.c.b16 %v3778, %v3777
      %v3783 = vpack.c.b16 %v3780, %v3779
      %v3784 = vpack.c.b16 %v3781, %v3781
      %vm3787 = vcmask 293888
      %v3788 = vsel %vm3787, %v3729, 0
      %v3790 = vsel %vm3787, %v3731, 0
      %v3792 = vsel %vm3787, %v3733, 0
      %v3794 = vsel %vm3787, %v3735, 0
      %v3796 = vsel %vm3787, %v3737, 0
      %v3798 = vsel %vm3787, %v3739, 0
      %v3800 = vsel %vm3787, %v3741, 0
      %v3802 = vsel %vm3787, %v3743, 0
      %v3804 = vsel %vm3787, %v3745, 0
      %v3806 = vsel %vm3787, %v3747, 0
      %v3808 = vsel %vm3787, %v3749, 0
      %v3810 = vsel %vm3787, %v3751, 0
      %v3812 = vsel %vm3787, %v3753, 0
      %v3814 = vsel %vm3787, %v3755, 0
      %v3816 = vsel %vm3787, %v3757, 0
      %v3818 = vsel %vm3787, %v3759, 0
      %vm3820 = vcmask 1041408
      %v3822 = vsel %vm3820, %v3784, 0
      %3824 = vmatprep.subr.bf16.mxu0 0
      %3825 = vmatpush1.bf16.msra.mxu0 %v3782
      %3826 = vmatprep.subr.bf16.mxu0 0
      %3827 = vmatpush1.bf16.msra.mxu0 %v3783
      %3828 = vmatprep.subr.bf16.mxu0 0
      %3829 = vmatpush1.bf16.msra.mxu0 %v3822
      %3830 = vmatprep.subr.bf16.mxu0 0
      %3831 = vmatpush1.bf16.msra.mxu0 0
      %3832 = vmatprep.subr.bf16.mxu0 0
      %3833 = vmatpush1.bf16.msra.mxu0 0
      %3834 = vmatprep.subr.bf16.mxu0 0
      %3835 = vmatpush1.bf16.msra.mxu0 0
      %3836 = vmatprep.subr.bf16.mxu0 0
      %3837 = vmatpush1.bf16.msra.mxu0 0
      %3838 = vmatprep.subr.bf16.mxu0 0
      %3839 = vmatpush1.bf16.msra.mxu0 0
      %3840 = vmatprep.subr.bf16.mxu0 0
      %3841 = vmatpush1.bf16.msra.mxu0 0
      %3842 = vmatprep.subr.bf16.mxu0 0
      %3843 = vmatpush1.bf16.msra.mxu0 0
      %3844 = vmatprep.subr.bf16.mxu0 0
      %3845 = vmatpush1.bf16.msra.mxu0 0
      %3846 = vmatprep.subr.bf16.mxu0 0
      %3847 = vmatpush1.bf16.msra.mxu0 0
      %3848 = vmatprep.subr.bf16.mxu0 0
      %3849 = vmatpush1.bf16.msra.mxu0 0
      %3850 = vmatprep.subr.bf16.mxu0 0
      %3851 = vmatpush1.bf16.msra.mxu0 0
      %3852 = vmatprep.subr.bf16.mxu0 0
      %3853 = vmatpush1.bf16.msra.mxu0 0
      %3854 = vmatprep.subr.bf16.mxu0 0
      %3855 = vmatpush1.bf16.msra.mxu0 0
      %3856 = vmatprep.mubr.bf16.mxu0 0
      %3857 = vmatmul.mubr.bf16.gmra.mrb[0].mxu0 %v3788
      %v3858 = vpop.f32.mrb[0].mxu0
      %v3859 = vadd.f32 %v3770, %v3858
      %v3860 = vpop.f32.mrb[0].mxu0
      %v3861 = vpop.f32.mrb[0].mxu0
      %v3862 = vadd.f32 %v3770, %v3861
      %v3863 = vpop.f32.mrb[0].mxu0
      %3864 = vmatprep.mubr.bf16.mxu0 0
      %3865 = vmatmul.mubr.bf16.gmra.mrb[0].mxu0 %v3790
      %v3866 = vpop.f32.mrb[0].mxu0
      %v3867 = vadd.f32 %v3770, %v3866
      %v3868 = vpop.f32.mrb[0].mxu0
      %v3869 = vpop.f32.mrb[0].mxu0
      %v3870 = vadd.f32 %v3770, %v3869
      %v3871 = vpop.f32.mrb[0].mxu0
      %3872 = vmatprep.mubr.bf16.mxu0 0
      %3873 = vmatmul.mubr.bf16.gmra.mrb[0].mxu0 %v3792
      %v3874 = vpop.f32.mrb[0].mxu0
      %v3875 = vadd.f32 %v3770, %v3874
      %v3876 = vpop.f32.mrb[0].mxu0
      %v3877 = vpop.f32.mrb[0].mxu0
      %v3878 = vadd.f32 %v3770, %v3877
      %v3879 = vpop.f32.mrb[0].mxu0
      %3880 = vmatprep.mubr.bf16.mxu0 0
      %3881 = vmatmul.mubr.bf16.gmra.mrb[0].mxu0 %v3794
      %v3882 = vpop.f32.mrb[0].mxu0
      %v3883 = vadd.f32 %v3770, %v3882
      %v3884 = vpop.f32.mrb[0].mxu0
      %v3885 = vpop.f32.mrb[0].mxu0
      %v3886 = vadd.f32 %v3770, %v3885
      %v3887 = vpop.f32.mrb[0].mxu0
      %3888 = vmatprep.mubr.bf16.mxu0 0
      %3889 = vmatmul.mubr.bf16.gmra.mrb[0].mxu0 %v3796
      %v3890 = vpop.f32.mrb[0].mxu0
      %v3891 = vadd.f32 %v3770, %v3890
      %v3892 = vpop.f32.mrb[0].mxu0
      %v3893 = vpop.f32.mrb[0].mxu0
      %v3894 = vadd.f32 %v3770, %v3893
      %v3895 = vpop.f32.mrb[0].mxu0
      %3896 = vmatprep.mubr.bf16.mxu0 0
      %3897 = vmatmul.mubr.bf16.gmra.mrb[0].mxu0 %v3798
      %v3898 = vpop.f32.mrb[0].mxu0
      %v3899 = vadd.f32 %v3770, %v3898
      %v3900 = vpop.f32.mrb[0].mxu0
      %v3901 = vpop.f32.mrb[0].mxu0
      %v3902 = vadd.f32 %v3770, %v3901
      %v3903 = vpop.f32.mrb[0].mxu0
      %3904 = vmatprep.mubr.bf16.mxu0 0
      %3905 = vmatmul.mubr.bf16.gmra.mrb[0].mxu0 %v3800
      %v3906 = vpop.f32.mrb[0].mxu0
      %v3907 = vadd.f32 %v3770, %v3906
      %v3908 = vpop.f32.mrb[0].mxu0
      %v3909 = vpop.f32.mrb[0].mxu0
      %v3910 = vadd.f32 %v3770, %v3909
      %v3911 = vpop.f32.mrb[0].mxu0
      %3912 = vmatprep.mubr.bf16.mxu0 0
      %3913 = vmatmul.mubr.bf16.gmra.mrb[0].mxu0 %v3802
      %v3914 = vpop.f32.mrb[0].mxu0
      %v3915 = vadd.f32 %v3770, %v3914
      %v3916 = vpop.f32.mrb[0].mxu0
      %v3917 = vpop.f32.mrb[0].mxu0
      %v3918 = vadd.f32 %v3770, %v3917
      %v3919 = vpop.f32.mrb[0].mxu0
      %3920 = vmatprep.mubr.bf16.mxu0 0
      %3921 = vmatmul.mubr.bf16.gmra.mrb[0].mxu0 %v3804
      %v3922 = vpop.f32.mrb[0].mxu0
      %v3923 = vadd.f32 %v3770, %v3922
      %v3924 = vpop.f32.mrb[0].mxu0
      %v3925 = vpop.f32.mrb[0].mxu0
      %v3926 = vadd.f32 %v3770, %v3925
      %v3927 = vpop.f32.mrb[0].mxu0
      %3928 = vmatprep.mubr.bf16.mxu0 0
      %3929 = vmatmul.mubr.bf16.gmra.mrb[0].mxu0 %v3806
      %v3930 = vpop.f32.mrb[0].mxu0
      %v3931 = vadd.f32 %v3770, %v3930
      %v3932 = vpop.f32.mrb[0].mxu0
      %v3933 = vpop.f32.mrb[0].mxu0
      %v3934 = vadd.f32 %v3770, %v3933
      %v3935 = vpop.f32.mrb[0].mxu0
      %3936 = vmatprep.mubr.bf16.mxu0 0
      %3937 = vmatmul.mubr.bf16.gmra.mrb[0].mxu0 %v3808
      %v3938 = vpop.f32.mrb[0].mxu0
      %v3939 = vadd.f32 %v3770, %v3938
      %v3940 = vpop.f32.mrb[0].mxu0
      %v3941 = vpop.f32.mrb[0].mxu0
      %v3942 = vadd.f32 %v3770, %v3941
      %v3943 = vpop.f32.mrb[0].mxu0
      %3944 = vmatprep.mubr.bf16.mxu0 0
      %3945 = vmatmul.mubr.bf16.gmra.mrb[0].mxu0 %v3810
      %v3946 = vpop.f32.mrb[0].mxu0
      %v3947 = vadd.f32 %v3770, %v3946
      %v3948 = vpop.f32.mrb[0].mxu0
      %v3949 = vpop.f32.mrb[0].mxu0
      %v3950 = vadd.f32 %v3770, %v3949
      %v3951 = vpop.f32.mrb[0].mxu0
      %3952 = vmatprep.mubr.bf16.mxu0 0
      %3953 = vmatmul.mubr.bf16.gmra.mrb[0].mxu0 %v3812
      %v3954 = vpop.f32.mrb[0].mxu0
      %v3955 = vadd.f32 %v3770, %v3954
      %v3956 = vpop.f32.mrb[0].mxu0
      %v3957 = vpop.f32.mrb[0].mxu0
      %v3958 = vadd.f32 %v3770, %v3957
      %v3959 = vpop.f32.mrb[0].mxu0
      %3960 = vmatprep.mubr.bf16.mxu0 0
      %3961 = vmatmul.mubr.bf16.gmra.mrb[0].mxu0 %v3814
      %v3962 = vpop.f32.mrb[0].mxu0
      %v3963 = vadd.f32 %v3770, %v3962
      %v3964 = vpop.f32.mrb[0].mxu0
      %v3965 = vpop.f32.mrb[0].mxu0
      %v3966 = vadd.f32 %v3770, %v3965
      %v3967 = vpop.f32.mrb[0].mxu0
      %3968 = vmatprep.mubr.bf16.mxu0 0
      %3969 = vmatmul.mubr.bf16.gmra.mrb[0].mxu0 %v3816
      %v3970 = vpop.f32.mrb[0].mxu0
      %v3971 = vadd.f32 %v3770, %v3970
      %v3972 = vpop.f32.mrb[0].mxu0
      %v3973 = vpop.f32.mrb[0].mxu0
      %v3974 = vadd.f32 %v3770, %v3973
      %v3975 = vpop.f32.mrb[0].mxu0
      %3976 = vmatprep.mubr.bf16.mxu0 0
      %3977 = vmatmul.mubr.bf16.gmra.mrb[0].mxu0 %v3818
      %v3978 = vpop.f32.mrb[0].mxu0
      %v3979 = vadd.f32 %v3770, %v3978
      %v3980 = vpop.f32.mrb[0].mxu0
      %v3981 = vpop.f32.mrb[0].mxu0
      %v3982 = vadd.f32 %v3770, %v3981
      %v3983 = vpop.f32.mrb[0].mxu0
      %3984 = vdwg.mxu0
      %v3985 = vmax.f32 %v3859, 0.0
      %v3986 = vmax.f32 %v3862, 0.0
      %v3987 = vmax.f32 %v3867, 0.0
      %v3988 = vmax.f32 %v3870, 0.0
      %v3989 = vmax.f32 %v3875, 0.0
      %v3990 = vmax.f32 %v3878, 0.0
      %v3991 = vmax.f32 %v3883, 0.0
      %v3992 = vmax.f32 %v3886, 0.0
      %v3993 = vmax.f32 %v3891, 0.0
      %v3994 = vmax.f32 %v3894, 0.0
      %v3995 = vmax.f32 %v3899, 0.0
      %v3996 = vmax.f32 %v3902, 0.0
      %v3997 = vmax.f32 %v3907, 0.0
      %v3998 = vmax.f32 %v3910, 0.0
      %v3999 = vmax.f32 %v3915, 0.0
      %v4000 = vmax.f32 %v3918, 0.0
      %v4001 = vmax.f32 %v3923, 0.0
      %v4002 = vmax.f32 %v3926, 0.0
      %v4003 = vmax.f32 %v3931, 0.0
      %v4004 = vmax.f32 %v3934, 0.0
      %v4005 = vmax.f32 %v3939, 0.0
      %v4006 = vmax.f32 %v3942, 0.0
      %v4007 = vmax.f32 %v3947, 0.0
      %v4008 = vmax.f32 %v3950, 0.0
      %v4009 = vmax.f32 %v3955, 0.0
      %v4010 = vmax.f32 %v3958, 0.0
      %v4011 = vmax.f32 %v3963, 0.0
      %v4012 = vmax.f32 %v3966, 0.0
      %v4013 = vmax.f32 %v3971, 0.0
      %v4014 = vmax.f32 %v3974, 0.0
      %v4015 = vmax.f32 %v3979, 0.0
      %v4016 = vmax.f32 %v3982, 0.0
      %v4017 = vpack.c.bf16 %v3986, %v3985
      %v4018 = vpack.c.bf16 %v3988, %v3987
      %v4019 = vpack.c.bf16 %v3990, %v3989
      %v4020 = vpack.c.bf16 %v3992, %v3991
      %v4021 = vpack.c.bf16 %v3994, %v3993
      %v4022 = vpack.c.bf16 %v3996, %v3995
      %v4023 = vpack.c.bf16 %v3998, %v3997
      %v4024 = vpack.c.bf16 %v4000, %v3999
      %v4025 = vpack.c.bf16 %v4002, %v4001
      %v4026 = vpack.c.bf16 %v4004, %v4003
      %v4027 = vpack.c.bf16 %v4006, %v4005
      %v4028 = vpack.c.bf16 %v4008, %v4007
      %v4029 = vpack.c.bf16 %v4010, %v4009
      %v4030 = vpack.c.bf16 %v4012, %v4011
      %v4031 = vpack.c.bf16 %v4014, %v4013
      %v4032 = vpack.c.bf16 %v4016, %v4015
      %v4049 = vunpack.c.l.b16 %v4017
      %v4050 = vunpack.c.h.b16 %v4017
      %v4051 = vunpack.c.l.b16 %v4018
      %v4052 = vunpack.c.h.b16 %v4018
      %v4053 = vunpack.c.l.b16 %v4019
      %v4054 = vunpack.c.h.b16 %v4019
      %v4055 = vunpack.c.l.b16 %v4020
      %v4056 = vunpack.c.h.b16 %v4020
      %v4057 = vunpack.c.l.b16 %v4021
      %v4058 = vunpack.c.h.b16 %v4021
      %v4059 = vunpack.c.l.b16 %v4022
      %v4060 = vunpack.c.h.b16 %v4022
      %v4061 = vunpack.c.l.b16 %v4023
      %v4062 = vunpack.c.h.b16 %v4023
      %v4063 = vunpack.c.l.b16 %v4024
      %v4064 = vunpack.c.h.b16 %v4024
      %v4065 = vunpack.c.l.b16 %v4025
      %v4066 = vunpack.c.h.b16 %v4025
      %v4067 = vunpack.c.l.b16 %v4026
      %v4068 = vunpack.c.h.b16 %v4026
      %v4069 = vunpack.c.l.b16 %v4027
      %v4070 = vunpack.c.h.b16 %v4027
      %v4071 = vunpack.c.l.b16 %v4028
      %v4072 = vunpack.c.h.b16 %v4028
      %v4073 = vunpack.c.l.b16 %v4029
      %v4074 = vunpack.c.h.b16 %v4029
      %v4075 = vunpack.c.l.b16 %v4030
      %v4076 = vunpack.c.h.b16 %v4030
      %v4077 = vunpack.c.l.b16 %v4031
      %v4078 = vunpack.c.h.b16 %v4031
      %v4079 = vunpack.c.l.b16 %v4032
      %v4080 = vunpack.c.h.b16 %v4032
      %v4081 = vpack.c.b16 %v4049, %v4049
      %v4082 = vpack.c.b16 %v4050, %v4050
      %v4083 = vpack.c.b16 %v4051, %v4051
      %v4084 = vpack.c.b16 %v4052, %v4052
      %v4085 = vpack.c.b16 %v4053, %v4053
      %v4086 = vpack.c.b16 %v4054, %v4054
      %v4087 = vpack.c.b16 %v4055, %v4055
      %v4088 = vpack.c.b16 %v4056, %v4056
      %v4089 = vpack.c.b16 %v4057, %v4057
      %v4090 = vpack.c.b16 %v4058, %v4058
      %v4091 = vpack.c.b16 %v4059, %v4059
      %v4092 = vpack.c.b16 %v4060, %v4060
      %v4093 = vpack.c.b16 %v4061, %v4061
      %v4094 = vpack.c.b16 %v4062, %v4062
      %v4095 = vpack.c.b16 %v4063, %v4063
      %v4096 = vpack.c.b16 %v4064, %v4064
      %v4097 = vpack.c.b16 %v4065, %v4065
      %v4098 = vpack.c.b16 %v4066, %v4066
      %v4099 = vpack.c.b16 %v4067, %v4067
      %v4100 = vpack.c.b16 %v4068, %v4068
      %v4101 = vpack.c.b16 %v4069, %v4069
      %v4102 = vpack.c.b16 %v4070, %v4070
      %v4103 = vpack.c.b16 %v4071, %v4071
      %v4104 = vpack.c.b16 %v4072, %v4072
      %v4105 = vpack.c.b16 %v4073, %v4073
      %v4106 = vpack.c.b16 %v4074, %v4074
      %v4107 = vpack.c.b16 %v4075, %v4075
      %v4108 = vpack.c.b16 %v4076, %v4076
      %v4109 = vpack.c.b16 %v4077, %v4077
      %v4110 = vpack.c.b16 %v4078, %v4078
      %v4111 = vpack.c.b16 %v4079, %v4079
      %v4112 = vpack.c.b16 %v4080, %v4080
      %v4114 = vshrl.u32 %v4081, 16
      %v4116 = vrot.slane %v4114, 7
      %v4117 = vshll.u32 %v4081, 16
      %v4119 = vor.u32 %v4116, %v4117
      %v4120 = vrot.slane %v4116, 4
      %v4122 = vshrl.u32 %v4082, 16
      %v4124 = vrot.slane %v4122, 7
      %v4125 = vshll.u32 %v4082, 16
      %v4127 = vor.u32 %v4124, %v4125
      %v4128 = vsel %vm477, %v4120, %v4127
      %v4129 = vrot.slane %v4124, 4
      %v4131 = vshrl.u32 %v4083, 16
      %v4133 = vrot.slane %v4131, 7
      %v4134 = vshll.u32 %v4083, 16
      %v4136 = vor.u32 %v4133, %v4134
      %v4137 = vrot.slane %v4133, 4
      %v4139 = vshrl.u32 %v4084, 16
      %v4141 = vrot.slane %v4139, 7
      %v4142 = vshll.u32 %v4084, 16
      %v4144 = vor.u32 %v4141, %v4142
      %v4145 = vsel %vm477, %v4137, %v4144
      %v4146 = vrot.slane %v4141, 4
      %v4148 = vshrl.u32 %v4085, 16
      %v4150 = vrot.slane %v4148, 7
      %v4151 = vshll.u32 %v4085, 16
      %v4153 = vor.u32 %v4150, %v4151
      %v4154 = vrot.slane %v4150, 4
      %v4156 = vshrl.u32 %v4086, 16
      %v4158 = vrot.slane %v4156, 7
      %v4159 = vshll.u32 %v4086, 16
      %v4161 = vor.u32 %v4158, %v4159
      %v4162 = vsel %vm477, %v4154, %v4161
      %v4163 = vrot.slane %v4158, 4
      %v4165 = vshrl.u32 %v4087, 16
      %v4167 = vrot.slane %v4165, 7
      %v4168 = vshll.u32 %v4087, 16
      %v4170 = vor.u32 %v4167, %v4168
      %v4171 = vrot.slane %v4167, 4
      %v4173 = vshrl.u32 %v4088, 16
      %v4175 = vrot.slane %v4173, 7
      %v4176 = vshll.u32 %v4088, 16
      %v4178 = vor.u32 %v4175, %v4176
      %v4179 = vsel %vm477, %v4171, %v4178
      %v4180 = vrot.slane %v4175, 4
      %v4182 = vshrl.u32 %v4089, 16
      %v4184 = vrot.slane %v4182, 7
      %v4185 = vshll.u32 %v4089, 16
      %v4187 = vor.u32 %v4184, %v4185
      %v4188 = vrot.slane %v4184, 4
      %v4190 = vshrl.u32 %v4090, 16
      %v4192 = vrot.slane %v4190, 7
      %v4193 = vshll.u32 %v4090, 16
      %v4195 = vor.u32 %v4192, %v4193
      %v4196 = vsel %vm477, %v4188, %v4195
      %v4197 = vrot.slane %v4192, 4
      %v4199 = vshrl.u32 %v4091, 16
      %v4201 = vrot.slane %v4199, 7
      %v4202 = vshll.u32 %v4091, 16
      %v4204 = vor.u32 %v4201, %v4202
      %v4205 = vrot.slane %v4201, 4
      %v4207 = vshrl.u32 %v4092, 16
      %v4209 = vrot.slane %v4207, 7
      %v4210 = vshll.u32 %v4092, 16
      %v4212 = vor.u32 %v4209, %v4210
      %v4213 = vsel %vm477, %v4205, %v4212
      %v4214 = vrot.slane %v4209, 4
      %v4216 = vshrl.u32 %v4093, 16
      %v4218 = vrot.slane %v4216, 7
      %v4219 = vshll.u32 %v4093, 16
      %v4221 = vor.u32 %v4218, %v4219
      %v4222 = vrot.slane %v4218, 4
      %v4224 = vshrl.u32 %v4094, 16
      %v4226 = vrot.slane %v4224, 7
      %v4227 = vshll.u32 %v4094, 16
      %v4229 = vor.u32 %v4226, %v4227
      %v4230 = vsel %vm477, %v4222, %v4229
      %v4231 = vrot.slane %v4226, 4
      %v4233 = vshrl.u32 %v4095, 16
      %v4235 = vrot.slane %v4233, 7
      %v4236 = vshll.u32 %v4095, 16
      %v4238 = vor.u32 %v4235, %v4236
      %v4239 = vrot.slane %v4235, 4
      %v4241 = vshrl.u32 %v4096, 16
      %v4243 = vrot.slane %v4241, 7
      %v4244 = vshll.u32 %v4096, 16
      %v4246 = vor.u32 %v4243, %v4244
      %v4247 = vsel %vm477, %v4239, %v4246
      %v4248 = vrot.slane %v4243, 4
      %v4250 = vshrl.u32 %v4097, 16
      %v4252 = vrot.slane %v4250, 7
      %v4253 = vshll.u32 %v4097, 16
      %v4255 = vor.u32 %v4252, %v4253
      %v4256 = vrot.slane %v4252, 4
      %v4258 = vshrl.u32 %v4098, 16
      %v4260 = vrot.slane %v4258, 7
      %v4261 = vshll.u32 %v4098, 16
      %v4263 = vor.u32 %v4260, %v4261
      %v4264 = vsel %vm477, %v4256, %v4263
      %v4265 = vrot.slane %v4260, 4
      %v4267 = vshrl.u32 %v4099, 16
      %v4269 = vrot.slane %v4267, 7
      %v4270 = vshll.u32 %v4099, 16
      %v4272 = vor.u32 %v4269, %v4270
      %v4273 = vrot.slane %v4269, 4
      %v4275 = vshrl.u32 %v4100, 16
      %v4277 = vrot.slane %v4275, 7
      %v4278 = vshll.u32 %v4100, 16
      %v4280 = vor.u32 %v4277, %v4278
      %v4281 = vsel %vm477, %v4273, %v4280
      %v4282 = vrot.slane %v4277, 4
      %v4284 = vshrl.u32 %v4101, 16
      %v4286 = vrot.slane %v4284, 7
      %v4287 = vshll.u32 %v4101, 16
      %v4289 = vor.u32 %v4286, %v4287
      %v4290 = vrot.slane %v4286, 4
      %v4292 = vshrl.u32 %v4102, 16
      %v4294 = vrot.slane %v4292, 7
      %v4295 = vshll.u32 %v4102, 16
      %v4297 = vor.u32 %v4294, %v4295
      %v4298 = vsel %vm477, %v4290, %v4297
      %v4299 = vrot.slane %v4294, 4
      %v4301 = vshrl.u32 %v4103, 16
      %v4303 = vrot.slane %v4301, 7
      %v4304 = vshll.u32 %v4103, 16
      %v4306 = vor.u32 %v4303, %v4304
      %v4307 = vrot.slane %v4303, 4
      %v4309 = vshrl.u32 %v4104, 16
      %v4311 = vrot.slane %v4309, 7
      %v4312 = vshll.u32 %v4104, 16
      %v4314 = vor.u32 %v4311, %v4312
      %v4315 = vsel %vm477, %v4307, %v4314
      %v4316 = vrot.slane %v4311, 4
      %v4318 = vshrl.u32 %v4105, 16
      %v4320 = vrot.slane %v4318, 7
      %v4321 = vshll.u32 %v4105, 16
      %v4323 = vor.u32 %v4320, %v4321
      %v4324 = vrot.slane %v4320, 4
      %v4326 = vshrl.u32 %v4106, 16
      %v4328 = vrot.slane %v4326, 7
      %v4329 = vshll.u32 %v4106, 16
      %v4331 = vor.u32 %v4328, %v4329
      %v4332 = vsel %vm477, %v4324, %v4331
      %v4333 = vrot.slane %v4328, 4
      %v4335 = vshrl.u32 %v4107, 16
      %v4337 = vrot.slane %v4335, 7
      %v4338 = vshll.u32 %v4107, 16
      %v4340 = vor.u32 %v4337, %v4338
      %v4341 = vrot.slane %v4337, 4
      %v4343 = vshrl.u32 %v4108, 16
      %v4345 = vrot.slane %v4343, 7
      %v4346 = vshll.u32 %v4108, 16
      %v4348 = vor.u32 %v4345, %v4346
      %v4349 = vsel %vm477, %v4341, %v4348
      %v4350 = vrot.slane %v4345, 4
      %v4352 = vshrl.u32 %v4109, 16
      %v4354 = vrot.slane %v4352, 7
      %v4355 = vshll.u32 %v4109, 16
      %v4357 = vor.u32 %v4354, %v4355
      %v4358 = vrot.slane %v4354, 4
      %v4360 = vshrl.u32 %v4110, 16
      %v4362 = vrot.slane %v4360, 7
      %v4363 = vshll.u32 %v4110, 16
      %v4365 = vor.u32 %v4362, %v4363
      %v4366 = vsel %vm477, %v4358, %v4365
      %v4367 = vrot.slane %v4362, 4
      %v4369 = vshrl.u32 %v4111, 16
      %v4371 = vrot.slane %v4369, 7
      %v4372 = vshll.u32 %v4111, 16
      %v4374 = vor.u32 %v4371, %v4372
      %v4375 = vrot.slane %v4371, 4
      %v4377 = vshrl.u32 %v4112, 16
      %v4379 = vrot.slane %v4377, 7
      %v4380 = vshll.u32 %v4112, 16
      %v4382 = vor.u32 %v4379, %v4380
      %v4383 = vsel %vm477, %v4375, %v4382
      %v4384 = vrot.slane %v4379, 4
      %v4433 = vsel %vm800, %v4119, %v1527
      %4434 = vst [vmem:[%s798] sm:$0xf] %v4433
      %4435 = vst.msk [vmem:[%s798 + $0x4] sm:$0xf] %vm226, %v4128
      %v4436 = vld [vmem:[%s798 + $0x8] sm:$0x1]
      %v4437 = vsel %vm237, %v4129, %v4436
      %4438 = vst [vmem:[%s798 + $0x8] sm:$0x1] %v4437
      %v4439 = vld [vmem:[%s798 + $0xc] sm:$0xf]
      %v4440 = vsel %vm800, %v4136, %v4439
      %4441 = vst [vmem:[%s798 + $0xc] sm:$0xf] %v4440
      %4442 = vst.msk [vmem:[%s798 + $0x10] sm:$0xf] %vm226, %v4145
      %v4443 = vld [vmem:[%s798 + $0x14] sm:$0x1]
      %v4444 = vsel %vm237, %v4146, %v4443
      %4445 = vst [vmem:[%s798 + $0x14] sm:$0x1] %v4444
      %v4446 = vld [vmem:[%s798 + $0x18] sm:$0xf]
      %v4447 = vsel %vm800, %v4153, %v4446
      %4448 = vst [vmem:[%s798 + $0x18] sm:$0xf] %v4447
      %4449 = vst.msk [vmem:[%s798 + $0x1c] sm:$0xf] %vm226, %v4162
      %v4450 = vld [vmem:[%s798 + $0x20] sm:$0x1]
      %v4451 = vsel %vm237, %v4163, %v4450
      %4452 = vst [vmem:[%s798 + $0x20] sm:$0x1] %v4451
      %v4453 = vld [vmem:[%s798 + $0x24] sm:$0xf]
      %v4454 = vsel %vm800, %v4170, %v4453
      %4455 = vst [vmem:[%s798 + $0x24] sm:$0xf] %v4454
      %4456 = vst.msk [vmem:[%s798 + $0x28] sm:$0xf] %vm226, %v4179
      %v4457 = vld [vmem:[%s798 + $0x2c] sm:$0x1]
      %v4458 = vsel %vm237, %v4180, %v4457
      %4459 = vst [vmem:[%s798 + $0x2c] sm:$0x1] %v4458
      %v4460 = vld [vmem:[%s798 + $0x30] sm:$0xf]
      %v4461 = vsel %vm800, %v4187, %v4460
      %4462 = vst [vmem:[%s798 + $0x30] sm:$0xf] %v4461
      %4463 = vst.msk [vmem:[%s798 + $0x34] sm:$0xf] %vm226, %v4196
      %v4464 = vld [vmem:[%s798 + $0x38] sm:$0x1]
      %v4465 = vsel %vm237, %v4197, %v4464
      %4466 = vst [vmem:[%s798 + $0x38] sm:$0x1] %v4465
      %v4467 = vld [vmem:[%s798 + $0x3c] sm:$0xf]
      %v4468 = vsel %vm800, %v4204, %v4467
      %4469 = vst [vmem:[%s798 + $0x3c] sm:$0xf] %v4468
      %4470 = vst.msk [vmem:[%s798 + $0x40] sm:$0xf] %vm226, %v4213
      %v4471 = vld [vmem:[%s798 + $0x44] sm:$0x1]
      %v4472 = vsel %vm237, %v4214, %v4471
      %4473 = vst [vmem:[%s798 + $0x44] sm:$0x1] %v4472
      %v4474 = vld [vmem:[%s798 + $0x48] sm:$0xf]
      %v4475 = vsel %vm800, %v4221, %v4474
      %4476 = vst [vmem:[%s798 + $0x48] sm:$0xf] %v4475
      %4477 = vst.msk [vmem:[%s798 + $0x4c] sm:$0xf] %vm226, %v4230
      %v4478 = vld [vmem:[%s798 + $0x50] sm:$0x1]
      %v4479 = vsel %vm237, %v4231, %v4478
      %4480 = vst [vmem:[%s798 + $0x50] sm:$0x1] %v4479
      %v4481 = vld [vmem:[%s798 + $0x54] sm:$0xf]
      %v4482 = vsel %vm800, %v4238, %v4481
      %4483 = vst [vmem:[%s798 + $0x54] sm:$0xf] %v4482
      %4484 = vst.msk [vmem:[%s798 + $0x58] sm:$0xf] %vm226, %v4247
      %v4485 = vld [vmem:[%s798 + $0x5c] sm:$0x1]
      %v4486 = vsel %vm237, %v4248, %v4485
      %4487 = vst [vmem:[%s798 + $0x5c] sm:$0x1] %v4486
      %v4488 = vld [vmem:[%s798 + $0x60] sm:$0xf]
      %v4489 = vsel %vm800, %v4255, %v4488
      %4490 = vst [vmem:[%s798 + $0x60] sm:$0xf] %v4489
      %4491 = vst.msk [vmem:[%s798 + $0x64] sm:$0xf] %vm226, %v4264
      %v4492 = vld [vmem:[%s798 + $0x68] sm:$0x1]
      %v4493 = vsel %vm237, %v4265, %v4492
      %4494 = vst [vmem:[%s798 + $0x68] sm:$0x1] %v4493
      %v4495 = vld [vmem:[%s798 + $0x6c] sm:$0xf]
      %v4496 = vsel %vm800, %v4272, %v4495
      %4497 = vst [vmem:[%s798 + $0x6c] sm:$0xf] %v4496
      %4498 = vst.msk [vmem:[%s798 + $0x70] sm:$0xf] %vm226, %v4281
      %v4499 = vld [vmem:[%s798 + $0x74] sm:$0x1]
      %v4500 = vsel %vm237, %v4282, %v4499
      %4501 = vst [vmem:[%s798 + $0x74] sm:$0x1] %v4500
      %v4502 = vld [vmem:[%s798 + $0x78] sm:$0xf]
      %v4503 = vsel %vm800, %v4289, %v4502
      %4504 = vst [vmem:[%s798 + $0x78] sm:$0xf] %v4503
      %4505 = vst.msk [vmem:[%s798 + $0x7c] sm:$0xf] %vm226, %v4298
      %v4506 = vld [vmem:[%s798 + $0x80] sm:$0x1]
      %v4507 = vsel %vm237, %v4299, %v4506
      %4508 = vst [vmem:[%s798 + $0x80] sm:$0x1] %v4507
      %v4509 = vld [vmem:[%s798 + $0x84] sm:$0xf]
      %v4510 = vsel %vm800, %v4306, %v4509
      %4511 = vst [vmem:[%s798 + $0x84] sm:$0xf] %v4510
      %4512 = vst.msk [vmem:[%s798 + $0x88] sm:$0xf] %vm226, %v4315
      %v4513 = vld [vmem:[%s798 + $0x8c] sm:$0x1]
      %v4514 = vsel %vm237, %v4316, %v4513
      %4515 = vst [vmem:[%s798 + $0x8c] sm:$0x1] %v4514
      %v4516 = vld [vmem:[%s798 + $0x90] sm:$0xf]
      %v4517 = vsel %vm800, %v4323, %v4516
      %4518 = vst [vmem:[%s798 + $0x90] sm:$0xf] %v4517
      %4519 = vst.msk [vmem:[%s798 + $0x94] sm:$0xf] %vm226, %v4332
      %v4520 = vld [vmem:[%s798 + $0x98] sm:$0x1]
      %v4521 = vsel %vm237, %v4333, %v4520
      %4522 = vst [vmem:[%s798 + $0x98] sm:$0x1] %v4521
      %v4523 = vld [vmem:[%s798 + $0x9c] sm:$0xf]
      %v4524 = vsel %vm800, %v4340, %v4523
      %4525 = vst [vmem:[%s798 + $0x9c] sm:$0xf] %v4524
      %4526 = vst.msk [vmem:[%s798 + $0xa0] sm:$0xf] %vm226, %v4349
      %v4527 = vld [vmem:[%s798 + $0xa4] sm:$0x1]
      %v4528 = vsel %vm237, %v4350, %v4527
      %4529 = vst [vmem:[%s798 + $0xa4] sm:$0x1] %v4528
      %v4530 = vld [vmem:[%s798 + $0xa8] sm:$0xf]
      %v4531 = vsel %vm800, %v4357, %v4530
      %4532 = vst [vmem:[%s798 + $0xa8] sm:$0xf] %v4531
      %4533 = vst.msk [vmem:[%s798 + $0xac] sm:$0xf] %vm226, %v4366
      %v4534 = vld [vmem:[%s798 + $0xb0] sm:$0x1]
      %v4535 = vsel %vm237, %v4367, %v4534
      %4536 = vst [vmem:[%s798 + $0xb0] sm:$0x1] %v4535
      %v4537 = vld [vmem:[%s798 + $0xb4] sm:$0xf]
      %v4538 = vsel %vm800, %v4374, %v4537
      %4539 = vst [vmem:[%s798 + $0xb4] sm:$0xf] %v4538
      %4540 = vst.msk [vmem:[%s798 + $0xb8] sm:$0xf] %vm226, %v4383
      %v4541 = vld [vmem:[%s798 + $0xbc] sm:$0x1]
      %v4542 = vsel %vm237, %v4384, %v4541
      %4543 = vst [vmem:[%s798 + $0xbc] sm:$0x1] %v4542
      %v4544 = vld [vmem:[%s219] sm:$0xff]
      %v4545 = vld [vmem:[%s219 + $0x8] sm:$0xff]
      %v4546 = vld [vmem:[%s219 + $0x10] sm:$0xff]
      %v4547 = vld [vmem:[%s219 + $0x18] sm:$0xff]
      %v4548 = vld [vmem:[%s219 + $0x20] sm:$0xff]
      %v4549 = vld [vmem:[%s219 + $0x28] sm:$0xff]
      %v4550 = vld [vmem:[%s219 + $0x30] sm:$0xff]
      %v4551 = vld [vmem:[%s219 + $0x38] sm:$0xff]
      %v4552 = vld [vmem:[%s219 + $0x40] sm:$0xff]
      %v4553 = vld [vmem:[%s219 + $0x48] sm:$0xff]
      %v4554 = vld [vmem:[%s219 + $0x50] sm:$0xff]
      %v4555 = vld [vmem:[%s219 + $0x58] sm:$0xff]
      %v4556 = vld [vmem:[%s219 + $0x60] sm:$0xff]
      %v4557 = vld [vmem:[%s219 + $0x68] sm:$0xff]
      %v4558 = vld [vmem:[%s219 + $0x70] sm:$0xff]
      %v4559 = vld [vmem:[%s219 + $0x78] sm:$0xff]
      %v4560 = vld [vmem:[%s219 + $0x80] sm:$0xff]
      %v4561 = vld [vmem:[%s219 + $0x88] sm:$0xff]
      %v4562 = vld [vmem:[%s219 + $0x90] sm:$0xff]
      %v4563 = vld [vmem:[%s219 + $0x98] sm:$0xff]
      %v4564 = vld [vmem:[%s219 + $0xa0] sm:$0xff]
      %v4565 = vld [vmem:[%s219 + $0xa8] sm:$0xff]
      %v4566 = vld [vmem:[%s219 + $0xb0] sm:$0xff]
      %v4567 = vld [vmem:[%s219 + $0xb8] sm:$0xff]
      %v4568 = vld [vmem:[%s219 + $0xc0] sm:$0xff]
      %v4569 = vld [vmem:[%s219 + $0xc8] sm:$0xff]
      %v4570 = vld [vmem:[%s219 + $0xd0] sm:$0xff]
      %v4571 = vld [vmem:[%s219 + $0xd8] sm:$0xff]
      %v4572 = vld [vmem:[%s219 + $0xe0] sm:$0xff]
      %v4573 = vld [vmem:[%s219 + $0xe8] sm:$0xff]
      %v4574 = vld [vmem:[%s219 + $0xf0] sm:$0xff]
      %v4575 = vld [vmem:[%s219 + $0xf8] sm:$0xff]
      %v4576 = vld [vmem:[#allocation2] sm:$0xf]
      %v4577 = vld [vmem:[#allocation2 + $0x4] sm:$0xf]
      %v4578 = vld [vmem:[#allocation2 + $0xc] sm:$0xf]
      %v4579 = vld [vmem:[#allocation2 + $0x10] sm:$0xf]
      %v4580 = vld [vmem:[#allocation2 + $0x18] sm:$0xf]
      %v4581 = vld [vmem:[#allocation2 + $0x1c] sm:$0xf]
      %v4582 = vld [vmem:[#allocation2 + $0x24] sm:$0xf]
      %v4583 = vld [vmem:[#allocation2 + $0x28] sm:$0xf]
      %v4584 = vld [vmem:[#allocation2 + $0x30] sm:$0xf]
      %v4585 = vld [vmem:[#allocation2 + $0x34] sm:$0xf]
      %v4586 = vld [vmem:[#allocation2 + $0x3c] sm:$0xf]
      %v4587 = vld [vmem:[#allocation2 + $0x40] sm:$0xf]
      %v4588 = vld [vmem:[#allocation2 + $0x48] sm:$0xf]
      %v4589 = vld [vmem:[#allocation2 + $0x4c] sm:$0xf]
      %v4590 = vld [vmem:[#allocation2 + $0x54] sm:$0xf]
      %v4591 = vld [vmem:[#allocation2 + $0x58] sm:$0xf]
      %v4592 = vld [vmem:[#allocation2 + $0x60] sm:$0xf]
      %v4593 = vld [vmem:[#allocation2 + $0x64] sm:$0xf]
      %v4594 = vld [vmem:[#allocation2 + $0x6c] sm:$0xf]
      %v4595 = vld [vmem:[#allocation2 + $0x70] sm:$0xf]
      %v4596 = vld [vmem:[#allocation2 + $0x78] sm:$0xf]
      %v4597 = vld [vmem:[#allocation2 + $0x7c] sm:$0xf]
      %v4598 = vld [vmem:[#allocation2 + $0x84] sm:$0xf]
      %v4599 = vld [vmem:[#allocation2 + $0x88] sm:$0xf]
      %v4600 = vld [vmem:[#allocation2 + $0x90] sm:$0xf]
      %v4601 = vld [vmem:[#allocation2 + $0x94] sm:$0xf]
      %v4602 = vld [vmem:[#allocation2 + $0x9c] sm:$0xf]
      %v4603 = vld [vmem:[#allocation2 + $0xa0] sm:$0xf]
      %v4604 = vld [vmem:[#allocation2 + $0xa8] sm:$0xf]
      %v4605 = vld [vmem:[#allocation2 + $0xac] sm:$0xf]
      %v4606 = vld [vmem:[#allocation2 + $0xb4] sm:$0xf]
      %v4607 = vld [vmem:[#allocation2 + $0xb8] sm:$0xf]
      %v4608 = vld [vmem:[#allocation2 + $0x8] sm:$0x1]
      %v4609 = vld [vmem:[#allocation2 + $0x14] sm:$0x1]
      %v4610 = vld [vmem:[#allocation2 + $0x20] sm:$0x1]
      %v4611 = vld [vmem:[#allocation2 + $0x2c] sm:$0x1]
      %v4612 = vld [vmem:[#allocation2 + $0x38] sm:$0x1]
      %v4613 = vld [vmem:[#allocation2 + $0x44] sm:$0x1]
      %v4614 = vld [vmem:[#allocation2 + $0x50] sm:$0x1]
      %v4615 = vld [vmem:[#allocation2 + $0x5c] sm:$0x1]
      %v4616 = vld [vmem:[#allocation2 + $0x68] sm:$0x1]
      %v4617 = vld [vmem:[#allocation2 + $0x74] sm:$0x1]
      %v4618 = vld [vmem:[#allocation2 + $0x80] sm:$0x1]
      %v4619 = vld [vmem:[#allocation2 + $0x8c] sm:$0x1]
      %v4620 = vld [vmem:[#allocation2 + $0x98] sm:$0x1]
      %v4621 = vld [vmem:[#allocation2 + $0xa4] sm:$0x1]
      %v4622 = vld [vmem:[#allocation2 + $0xb0] sm:$0x1]
      %v4623 = vld [vmem:[#allocation2 + $0xbc] sm:$0x1]
      %v4625 = vshrl.u32 %v4576, 16
      %v4627 = vrot.slane %v4625, 4
      %v4628 = vshll.u32 %v4576, 16
      %v4630 = vrot.slane %v4628, 5
      %v4631 = vor.u32 %v4627, %v4630
      %v4632 = vrot.slane %v4631, 4
      %v4634 = vshll.u32 %v4577, 16
      %v4636 = vrot.slane %v4634, 5
      %v4637 = vsel %vm963, %v4632, %v4636
      %v4638 = vshrl.u32 %v4577, 16
      %v4640 = vrot.slane %v4638, 4
      %v4641 = vor.u32 %v4640, %v4636
      %v4642 = vrot.slane %v4641, 4
      %v4644 = vshll.u32 %v4608, 16
      %v4646 = vrot.slane %v4644, 5
      %v4647 = vsel %vm963, %v4642, %v4646
      %v4649 = vshrl.u32 %v4578, 16
      %v4651 = vrot.slane %v4649, 4
      %v4652 = vshll.u32 %v4578, 16
      %v4654 = vrot.slane %v4652, 5
      %v4655 = vor.u32 %v4651, %v4654
      %v4656 = vrot.slane %v4655, 4
      %v4658 = vshll.u32 %v4579, 16
      %v4660 = vrot.slane %v4658, 5
      %v4661 = vsel %vm963, %v4656, %v4660
      %v4662 = vshrl.u32 %v4579, 16
      %v4664 = vrot.slane %v4662, 4
      %v4665 = vor.u32 %v4664, %v4660
      %v4666 = vrot.slane %v4665, 4
      %v4668 = vshll.u32 %v4609, 16
      %v4670 = vrot.slane %v4668, 5
      %v4671 = vsel %vm963, %v4666, %v4670
      %v4673 = vshrl.u32 %v4580, 16
      %v4675 = vrot.slane %v4673, 4
      %v4676 = vshll.u32 %v4580, 16
      %v4678 = vrot.slane %v4676, 5
      %v4679 = vor.u32 %v4675, %v4678
      %v4680 = vrot.slane %v4679, 4
      %v4682 = vshll.u32 %v4581, 16
      %v4684 = vrot.slane %v4682, 5
      %v4685 = vsel %vm963, %v4680, %v4684
      %v4686 = vshrl.u32 %v4581, 16
      %v4688 = vrot.slane %v4686, 4
      %v4689 = vor.u32 %v4688, %v4684
      %v4690 = vrot.slane %v4689, 4
      %v4692 = vshll.u32 %v4610, 16
      %v4694 = vrot.slane %v4692, 5
      %v4695 = vsel %vm963, %v4690, %v4694
      %v4697 = vshrl.u32 %v4582, 16
      %v4699 = vrot.slane %v4697, 4
      %v4700 = vshll.u32 %v4582, 16
      %v4702 = vrot.slane %v4700, 5
      %v4703 = vor.u32 %v4699, %v4702
      %v4704 = vrot.slane %v4703, 4
      %v4706 = vshll.u32 %v4583, 16
      %v4708 = vrot.slane %v4706, 5
      %v4709 = vsel %vm963, %v4704, %v4708
      %v4710 = vshrl.u32 %v4583, 16
      %v4712 = vrot.slane %v4710, 4
      %v4713 = vor.u32 %v4712, %v4708
      %v4714 = vrot.slane %v4713, 4
      %v4716 = vshll.u32 %v4611, 16
      %v4718 = vrot.slane %v4716, 5
      %v4719 = vsel %vm963, %v4714, %v4718
      %v4721 = vshrl.u32 %v4584, 16
      %v4723 = vrot.slane %v4721, 4
      %v4724 = vshll.u32 %v4584, 16
      %v4726 = vrot.slane %v4724, 5
      %v4727 = vor.u32 %v4723, %v4726
      %v4728 = vrot.slane %v4727, 4
      %v4730 = vshll.u32 %v4585, 16
      %v4732 = vrot.slane %v4730, 5
      %v4733 = vsel %vm963, %v4728, %v4732
      %v4734 = vshrl.u32 %v4585, 16
      %v4736 = vrot.slane %v4734, 4
      %v4737 = vor.u32 %v4736, %v4732
      %v4738 = vrot.slane %v4737, 4
      %v4740 = vshll.u32 %v4612, 16
      %v4742 = vrot.slane %v4740, 5
      %v4743 = vsel %vm963, %v4738, %v4742
      %v4745 = vshrl.u32 %v4586, 16
      %v4747 = vrot.slane %v4745, 4
      %v4748 = vshll.u32 %v4586, 16
      %v4750 = vrot.slane %v4748, 5
      %v4751 = vor.u32 %v4747, %v4750
      %v4752 = vrot.slane %v4751, 4
      %v4754 = vshll.u32 %v4587, 16
      %v4756 = vrot.slane %v4754, 5
      %v4757 = vsel %vm963, %v4752, %v4756
      %v4758 = vshrl.u32 %v4587, 16
      %v4760 = vrot.slane %v4758, 4
      %v4761 = vor.u32 %v4760, %v4756
      %v4762 = vrot.slane %v4761, 4
      %v4764 = vshll.u32 %v4613, 16
      %v4766 = vrot.slane %v4764, 5
      %v4767 = vsel %vm963, %v4762, %v4766
      %v4769 = vshrl.u32 %v4588, 16
      %v4771 = vrot.slane %v4769, 4
      %v4772 = vshll.u32 %v4588, 16
      %v4774 = vrot.slane %v4772, 5
      %v4775 = vor.u32 %v4771, %v4774
      %v4776 = vrot.slane %v4775, 4
      %v4778 = vshll.u32 %v4589, 16
      %v4780 = vrot.slane %v4778, 5
      %v4781 = vsel %vm963, %v4776, %v4780
      %v4782 = vshrl.u32 %v4589, 16
      %v4784 = vrot.slane %v4782, 4
      %v4785 = vor.u32 %v4784, %v4780
      %v4786 = vrot.slane %v4785, 4
      %v4788 = vshll.u32 %v4614, 16
      %v4790 = vrot.slane %v4788, 5
      %v4791 = vsel %vm963, %v4786, %v4790
      %v4793 = vshrl.u32 %v4590, 16
      %v4795 = vrot.slane %v4793, 4
      %v4796 = vshll.u32 %v4590, 16
      %v4798 = vrot.slane %v4796, 5
      %v4799 = vor.u32 %v4795, %v4798
      %v4800 = vrot.slane %v4799, 4
      %v4802 = vshll.u32 %v4591, 16
      %v4804 = vrot.slane %v4802, 5
      %v4805 = vsel %vm963, %v4800, %v4804
      %v4806 = vshrl.u32 %v4591, 16
      %v4808 = vrot.slane %v4806, 4
      %v4809 = vor.u32 %v4808, %v4804
      %v4810 = vrot.slane %v4809, 4
      %v4812 = vshll.u32 %v4615, 16
      %v4814 = vrot.slane %v4812, 5
      %v4815 = vsel %vm963, %v4810, %v4814
      %v4817 = vshrl.u32 %v4592, 16
      %v4819 = vrot.slane %v4817, 4
      %v4820 = vshll.u32 %v4592, 16
      %v4822 = vrot.slane %v4820, 5
      %v4823 = vor.u32 %v4819, %v4822
      %v4824 = vrot.slane %v4823, 4
      %v4826 = vshll.u32 %v4593, 16
      %v4828 = vrot.slane %v4826, 5
      %v4829 = vsel %vm963, %v4824, %v4828
      %v4830 = vshrl.u32 %v4593, 16
      %v4832 = vrot.slane %v4830, 4
      %v4833 = vor.u32 %v4832, %v4828
      %v4834 = vrot.slane %v4833, 4
      %v4836 = vshll.u32 %v4616, 16
      %v4838 = vrot.slane %v4836, 5
      %v4839 = vsel %vm963, %v4834, %v4838
      %v4841 = vshrl.u32 %v4594, 16
      %v4843 = vrot.slane %v4841, 4
      %v4844 = vshll.u32 %v4594, 16
      %v4846 = vrot.slane %v4844, 5
      %v4847 = vor.u32 %v4843, %v4846
      %v4848 = vrot.slane %v4847, 4
      %v4850 = vshll.u32 %v4595, 16
      %v4852 = vrot.slane %v4850, 5
      %v4853 = vsel %vm963, %v4848, %v4852
      %v4854 = vshrl.u32 %v4595, 16
      %v4856 = vrot.slane %v4854, 4
      %v4857 = vor.u32 %v4856, %v4852
      %v4858 = vrot.slane %v4857, 4
      %v4860 = vshll.u32 %v4617, 16
      %v4862 = vrot.slane %v4860, 5
      %v4863 = vsel %vm963, %v4858, %v4862
      %v4865 = vshrl.u32 %v4596, 16
      %v4867 = vrot.slane %v4865, 4
      %v4868 = vshll.u32 %v4596, 16
      %v4870 = vrot.slane %v4868, 5
      %v4871 = vor.u32 %v4867, %v4870
      %v4872 = vrot.slane %v4871, 4
      %v4874 = vshll.u32 %v4597, 16
      %v4876 = vrot.slane %v4874, 5
      %v4877 = vsel %vm963, %v4872, %v4876
      %v4878 = vshrl.u32 %v4597, 16
      %v4880 = vrot.slane %v4878, 4
      %v4881 = vor.u32 %v4880, %v4876
      %v4882 = vrot.slane %v4881, 4
      %v4884 = vshll.u32 %v4618, 16
      %v4886 = vrot.slane %v4884, 5
      %v4887 = vsel %vm963, %v4882, %v4886
      %v4889 = vshrl.u32 %v4598, 16
      %v4891 = vrot.slane %v4889, 4
      %v4892 = vshll.u32 %v4598, 16
      %v4894 = vrot.slane %v4892, 5
      %v4895 = vor.u32 %v4891, %v4894
      %v4896 = vrot.slane %v4895, 4
      %v4898 = vshll.u32 %v4599, 16
      %v4900 = vrot.slane %v4898, 5
      %v4901 = vsel %vm963, %v4896, %v4900
      %v4902 = vshrl.u32 %v4599, 16
      %v4904 = vrot.slane %v4902, 4
      %v4905 = vor.u32 %v4904, %v4900
      %v4906 = vrot.slane %v4905, 4
      %v4908 = vshll.u32 %v4619, 16
      %v4910 = vrot.slane %v4908, 5
      %v4911 = vsel %vm963, %v4906, %v4910
      %v4913 = vshrl.u32 %v4600, 16
      %v4915 = vrot.slane %v4913, 4
      %v4916 = vshll.u32 %v4600, 16
      %v4918 = vrot.slane %v4916, 5
      %v4919 = vor.u32 %v4915, %v4918
      %v4920 = vrot.slane %v4919, 4
      %v4922 = vshll.u32 %v4601, 16
      %v4924 = vrot.slane %v4922, 5
      %v4925 = vsel %vm963, %v4920, %v4924
      %v4926 = vshrl.u32 %v4601, 16
      %v4928 = vrot.slane %v4926, 4
      %v4929 = vor.u32 %v4928, %v4924
      %v4930 = vrot.slane %v4929, 4
      %v4932 = vshll.u32 %v4620, 16
      %v4934 = vrot.slane %v4932, 5
      %v4935 = vsel %vm963, %v4930, %v4934
      %v4937 = vshrl.u32 %v4602, 16
      %v4939 = vrot.slane %v4937, 4
      %v4940 = vshll.u32 %v4602, 16
      %v4942 = vrot.slane %v4940, 5
      %v4943 = vor.u32 %v4939, %v4942
      %v4944 = vrot.slane %v4943, 4
      %v4946 = vshll.u32 %v4603, 16
      %v4948 = vrot.slane %v4946, 5
      %v4949 = vsel %vm963, %v4944, %v4948
      %v4950 = vshrl.u32 %v4603, 16
      %v4952 = vrot.slane %v4950, 4
      %v4953 = vor.u32 %v4952, %v4948
      %v4954 = vrot.slane %v4953, 4
      %v4956 = vshll.u32 %v4621, 16
      %v4958 = vrot.slane %v4956, 5
      %v4959 = vsel %vm963, %v4954, %v4958
      %v4961 = vshrl.u32 %v4604, 16
      %v4963 = vrot.slane %v4961, 4
      %v4964 = vshll.u32 %v4604, 16
      %v4966 = vrot.slane %v4964, 5
      %v4967 = vor.u32 %v4963, %v4966
      %v4968 = vrot.slane %v4967, 4
      %v4970 = vshll.u32 %v4605, 16
      %v4972 = vrot.slane %v4970, 5
      %v4973 = vsel %vm963, %v4968, %v4972
      %v4974 = vshrl.u32 %v4605, 16
      %v4976 = vrot.slane %v4974, 4
      %v4977 = vor.u32 %v4976, %v4972
      %v4978 = vrot.slane %v4977, 4
      %v4980 = vshll.u32 %v4622, 16
      %v4982 = vrot.slane %v4980, 5
      %v4983 = vsel %vm963, %v4978, %v4982
      %v4985 = vshrl.u32 %v4606, 16
      %v4987 = vrot.slane %v4985, 4
      %v4988 = vshll.u32 %v4606, 16
      %v4990 = vrot.slane %v4988, 5
      %v4991 = vor.u32 %v4987, %v4990
      %v4992 = vrot.slane %v4991, 4
      %v4994 = vshll.u32 %v4607, 16
      %v4996 = vrot.slane %v4994, 5
      %v4997 = vsel %vm963, %v4992, %v4996
      %v4998 = vshrl.u32 %v4607, 16
      %v5000 = vrot.slane %v4998, 4
      %v5001 = vor.u32 %v5000, %v4996
      %v5002 = vrot.slane %v5001, 4
      %v5004 = vshll.u32 %v4623, 16
      %v5006 = vrot.slane %v5004, 5
      %v5007 = vsel %vm963, %v5002, %v5006
      %v5008 = vld [vmem:[#allocation2] sm:$0xe]
      %v5009 = vld [vmem:[#allocation2 + $0xc] sm:$0xe]
      %v5010 = vld [vmem:[#allocation2 + $0x18] sm:$0xe]
      %v5011 = vld [vmem:[#allocation2 + $0x24] sm:$0xe]
      %v5012 = vld [vmem:[#allocation2 + $0x30] sm:$0xe]
      %v5013 = vld [vmem:[#allocation2 + $0x3c] sm:$0xe]
      %v5014 = vld [vmem:[#allocation2 + $0x48] sm:$0xe]
      %v5015 = vld [vmem:[#allocation2 + $0x54] sm:$0xe]
      %v5016 = vld [vmem:[#allocation2 + $0x60] sm:$0xe]
      %v5017 = vld [vmem:[#allocation2 + $0x6c] sm:$0xe]
      %v5018 = vld [vmem:[#allocation2 + $0x78] sm:$0xe]
      %v5019 = vld [vmem:[#allocation2 + $0x84] sm:$0xe]
      %v5020 = vld [vmem:[#allocation2 + $0x90] sm:$0xe]
      %v5021 = vld [vmem:[#allocation2 + $0x9c] sm:$0xe]
      %v5022 = vld [vmem:[#allocation2 + $0xa8] sm:$0xe]
      %v5023 = vld [vmem:[#allocation2 + $0xb4] sm:$0xe]
      %v5072 = vrot.slane %v5008, 5
      %v5073 = vrot.slane %v5072, 4
      %v5074 = vrot.slane %v4577, 5
      %v5075 = vsel %vm1414, %v5073, %v5074
      %v5076 = vrot.slane %v5074, 4
      %v5077 = vrot.slane %v4608, 5
      %v5078 = vsel %vm1414, %v5076, %v5077
      %v5079 = vrot.slane %v5009, 5
      %v5080 = vrot.slane %v5079, 4
      %v5081 = vrot.slane %v4579, 5
      %v5082 = vsel %vm1414, %v5080, %v5081
      %v5083 = vrot.slane %v5081, 4
      %v5084 = vrot.slane %v4609, 5
      %v5085 = vsel %vm1414, %v5083, %v5084
      %v5086 = vrot.slane %v5010, 5
      %v5087 = vrot.slane %v5086, 4
      %v5088 = vrot.slane %v4581, 5
      %v5089 = vsel %vm1414, %v5087, %v5088
      %v5090 = vrot.slane %v5088, 4
      %v5091 = vrot.slane %v4610, 5
      %v5092 = vsel %vm1414, %v5090, %v5091
      %v5093 = vrot.slane %v5011, 5
      %v5094 = vrot.slane %v5093, 4
      %v5095 = vrot.slane %v4583, 5
      %v5096 = vsel %vm1414, %v5094, %v5095
      %v5097 = vrot.slane %v5095, 4
      %v5098 = vrot.slane %v4611, 5
      %v5099 = vsel %vm1414, %v5097, %v5098
      %v5100 = vrot.slane %v5012, 5
      %v5101 = vrot.slane %v5100, 4
      %v5102 = vrot.slane %v4585, 5
      %v5103 = vsel %vm1414, %v5101, %v5102
      %v5104 = vrot.slane %v5102, 4
      %v5105 = vrot.slane %v4612, 5
      %v5106 = vsel %vm1414, %v5104, %v5105
      %v5107 = vrot.slane %v5013, 5
      %v5108 = vrot.slane %v5107, 4
      %v5109 = vrot.slane %v4587, 5
      %v5110 = vsel %vm1414, %v5108, %v5109
      %v5111 = vrot.slane %v5109, 4
      %v5112 = vrot.slane %v4613, 5
      %v5113 = vsel %vm1414, %v5111, %v5112
      %v5114 = vrot.slane %v5014, 5
      %v5115 = vrot.slane %v5114, 4
      %v5116 = vrot.slane %v4589, 5
      %v5117 = vsel %vm1414, %v5115, %v5116
      %v5118 = vrot.slane %v5116, 4
      %v5119 = vrot.slane %v4614, 5
      %v5120 = vsel %vm1414, %v5118, %v5119
      %v5121 = vrot.slane %v5015, 5
      %v5122 = vrot.slane %v5121, 4
      %v5123 = vrot.slane %v4591, 5
      %v5124 = vsel %vm1414, %v5122, %v5123
      %v5125 = vrot.slane %v5123, 4
      %v5126 = vrot.slane %v4615, 5
      %v5127 = vsel %vm1414, %v5125, %v5126
      %v5128 = vrot.slane %v5016, 5
      %v5129 = vrot.slane %v5128, 4
      %v5130 = vrot.slane %v4593, 5
      %v5131 = vsel %vm1414, %v5129, %v5130
      %v5132 = vrot.slane %v5130, 4
      %v5133 = vrot.slane %v4616, 5
      %v5134 = vsel %vm1414, %v5132, %v5133
      %v5135 = vrot.slane %v5017, 5
      %v5136 = vrot.slane %v5135, 4
      %v5137 = vrot.slane %v4595, 5
      %v5138 = vsel %vm1414, %v5136, %v5137
      %v5139 = vrot.slane %v5137, 4
      %v5140 = vrot.slane %v4617, 5
      %v5141 = vsel %vm1414, %v5139, %v5140
      %v5142 = vrot.slane %v5018, 5
      %v5143 = vrot.slane %v5142, 4
      %v5144 = vrot.slane %v4597, 5
      %v5145 = vsel %vm1414, %v5143, %v5144
      %v5146 = vrot.slane %v5144, 4
      %v5147 = vrot.slane %v4618, 5
      %v5148 = vsel %vm1414, %v5146, %v5147
      %v5149 = vrot.slane %v5019, 5
      %v5150 = vrot.slane %v5149, 4
      %v5151 = vrot.slane %v4599, 5
      %v5152 = vsel %vm1414, %v5150, %v5151
      %v5153 = vrot.slane %v5151, 4
      %v5154 = vrot.slane %v4619, 5
      %v5155 = vsel %vm1414, %v5153, %v5154
      %v5156 = vrot.slane %v5020, 5
      %v5157 = vrot.slane %v5156, 4
      %v5158 = vrot.slane %v4601, 5
      %v5159 = vsel %vm1414, %v5157, %v5158
      %v5160 = vrot.slane %v5158, 4
      %v5161 = vrot.slane %v4620, 5
      %v5162 = vsel %vm1414, %v5160, %v5161
      %v5163 = vrot.slane %v5021, 5
      %v5164 = vrot.slane %v5163, 4
      %v5165 = vrot.slane %v4603, 5
      %v5166 = vsel %vm1414, %v5164, %v5165
      %v5167 = vrot.slane %v5165, 4
      %v5168 = vrot.slane %v4621, 5
      %v5169 = vsel %vm1414, %v5167, %v5168
      %v5170 = vrot.slane %v5022, 5
      %v5171 = vrot.slane %v5170, 4
      %v5172 = vrot.slane %v4605, 5
      %v5173 = vsel %vm1414, %v5171, %v5172
      %v5174 = vrot.slane %v5172, 4
      %v5175 = vrot.slane %v4622, 5
      %v5176 = vsel %vm1414, %v5174, %v5175
      %v5177 = vrot.slane %v5023, 5
      %v5178 = vrot.slane %v5177, 4
      %v5179 = vrot.slane %v4607, 5
      %v5180 = vsel %vm1414, %v5178, %v5179
      %v5181 = vrot.slane %v5179, 4
      %v5182 = vrot.slane %v4623, 5
      %v5183 = vsel %vm1414, %v5181, %v5182
      %v5184 = vld [vmem:[%s798] sm:$0xf]
      %v5185 = vld [vmem:[%s798 + $0x4] sm:$0xf]
      %v5186 = vld [vmem:[%s798 + $0xc] sm:$0xf]
      %v5187 = vld [vmem:[%s798 + $0x10] sm:$0xf]
      %v5188 = vld [vmem:[%s798 + $0x18] sm:$0xf]
      %v5189 = vld [vmem:[%s798 + $0x1c] sm:$0xf]
      %v5190 = vld [vmem:[%s798 + $0x24] sm:$0xf]
      %v5191 = vld [vmem:[%s798 + $0x28] sm:$0xf]
      %v5192 = vld [vmem:[%s798 + $0x30] sm:$0xf]
      %v5193 = vld [vmem:[%s798 + $0x34] sm:$0xf]
      %v5194 = vld [vmem:[%s798 + $0x3c] sm:$0xf]
      %v5195 = vld [vmem:[%s798 + $0x40] sm:$0xf]
      %v5196 = vld [vmem:[%s798 + $0x48] sm:$0xf]
      %v5197 = vld [vmem:[%s798 + $0x4c] sm:$0xf]
      %v5198 = vld [vmem:[%s798 + $0x54] sm:$0xf]
      %v5199 = vld [vmem:[%s798 + $0x58] sm:$0xf]
      %v5200 = vld [vmem:[%s798 + $0x60] sm:$0xf]
      %v5201 = vld [vmem:[%s798 + $0x64] sm:$0xf]
      %v5202 = vld [vmem:[%s798 + $0x6c] sm:$0xf]
      %v5203 = vld [vmem:[%s798 + $0x70] sm:$0xf]
      %v5204 = vld [vmem:[%s798 + $0x78] sm:$0xf]
      %v5205 = vld [vmem:[%s798 + $0x7c] sm:$0xf]
      %v5206 = vld [vmem:[%s798 + $0x84] sm:$0xf]
      %v5207 = vld [vmem:[%s798 + $0x88] sm:$0xf]
      %v5208 = vld [vmem:[%s798 + $0x90] sm:$0xf]
      %v5209 = vld [vmem:[%s798 + $0x94] sm:$0xf]
      %v5210 = vld [vmem:[%s798 + $0x9c] sm:$0xf]
      %v5211 = vld [vmem:[%s798 + $0xa0] sm:$0xf]
      %v5212 = vld [vmem:[%s798 + $0xa8] sm:$0xf]
      %v5213 = vld [vmem:[%s798 + $0xac] sm:$0xf]
      %v5214 = vld [vmem:[%s798 + $0xb4] sm:$0xf]
      %v5215 = vld [vmem:[%s798 + $0xb8] sm:$0xf]
      %v5216 = vld [vmem:[%s798 + $0x8] sm:$0x1]
      %v5217 = vld [vmem:[%s798 + $0x14] sm:$0x1]
      %v5218 = vld [vmem:[%s798 + $0x20] sm:$0x1]
      %v5219 = vld [vmem:[%s798 + $0x2c] sm:$0x1]
      %v5220 = vld [vmem:[%s798 + $0x38] sm:$0x1]
      %v5221 = vld [vmem:[%s798 + $0x44] sm:$0x1]
      %v5222 = vld [vmem:[%s798 + $0x50] sm:$0x1]
      %v5223 = vld [vmem:[%s798 + $0x5c] sm:$0x1]
      %v5224 = vld [vmem:[%s798 + $0x68] sm:$0x1]
      %v5225 = vld [vmem:[%s798 + $0x74] sm:$0x1]
      %v5226 = vld [vmem:[%s798 + $0x80] sm:$0x1]
      %v5227 = vld [vmem:[%s798 + $0x8c] sm:$0x1]
      %v5228 = vld [vmem:[%s798 + $0x98] sm:$0x1]
      %v5229 = vld [vmem:[%s798 + $0xa4] sm:$0x1]
      %v5230 = vld [vmem:[%s798 + $0xb0] sm:$0x1]
      %v5231 = vld [vmem:[%s798 + $0xbc] sm:$0x1]
      %v5233 = vshrl.u32 %v5184, 16
      %v5235 = vrot.slane %v5233, 4
      %v5236 = vshll.u32 %v5184, 16
      %v5238 = vrot.slane %v5236, 5
      %v5239 = vor.u32 %v5235, %v5238
      %v5240 = vrot.slane %v5239, 4
      %v5242 = vshll.u32 %v5185, 16
      %v5244 = vrot.slane %v5242, 5
      %v5245 = vsel %vm963, %v5240, %v5244
      %v5246 = vshrl.u32 %v5185, 16
      %v5248 = vrot.slane %v5246, 4
      %v5249 = vor.u32 %v5248, %v5244
      %v5250 = vrot.slane %v5249, 4
      %v5252 = vshll.u32 %v5216, 16
      %v5254 = vrot.slane %v5252, 5
      %v5255 = vsel %vm963, %v5250, %v5254
      %v5257 = vshrl.u32 %v5186, 16
      %v5259 = vrot.slane %v5257, 4
      %v5260 = vshll.u32 %v5186, 16
      %v5262 = vrot.slane %v5260, 5
      %v5263 = vor.u32 %v5259, %v5262
      %v5264 = vrot.slane %v5263, 4
      %v5266 = vshll.u32 %v5187, 16
      %v5268 = vrot.slane %v5266, 5
      %v5269 = vsel %vm963, %v5264, %v5268
      %v5270 = vshrl.u32 %v5187, 16
      %v5272 = vrot.slane %v5270, 4
      %v5273 = vor.u32 %v5272, %v5268
      %v5274 = vrot.slane %v5273, 4
      %v5276 = vshll.u32 %v5217, 16
      %v5278 = vrot.slane %v5276, 5
      %v5279 = vsel %vm963, %v5274, %v5278
      %v5281 = vshrl.u32 %v5188, 16
      %v5283 = vrot.slane %v5281, 4
      %v5284 = vshll.u32 %v5188, 16
      %v5286 = vrot.slane %v5284, 5
      %v5287 = vor.u32 %v5283, %v5286
      %v5288 = vrot.slane %v5287, 4
      %v5290 = vshll.u32 %v5189, 16
      %v5292 = vrot.slane %v5290, 5
      %v5293 = vsel %vm963, %v5288, %v5292
      %v5294 = vshrl.u32 %v5189, 16
      %v5296 = vrot.slane %v5294, 4
      %v5297 = vor.u32 %v5296, %v5292
      %v5298 = vrot.slane %v5297, 4
      %v5300 = vshll.u32 %v5218, 16
      %v5302 = vrot.slane %v5300, 5
      %v5303 = vsel %vm963, %v5298, %v5302
      %v5305 = vshrl.u32 %v5190, 16
      %v5307 = vrot.slane %v5305, 4
      %v5308 = vshll.u32 %v5190, 16
      %v5310 = vrot.slane %v5308, 5
      %v5311 = vor.u32 %v5307, %v5310
      %v5312 = vrot.slane %v5311, 4
      %v5314 = vshll.u32 %v5191, 16
      %v5316 = vrot.slane %v5314, 5
      %v5317 = vsel %vm963, %v5312, %v5316
      %v5318 = vshrl.u32 %v5191, 16
      %v5320 = vrot.slane %v5318, 4
      %v5321 = vor.u32 %v5320, %v5316
      %v5322 = vrot.slane %v5321, 4
      %v5324 = vshll.u32 %v5219, 16
      %v5326 = vrot.slane %v5324, 5
      %v5327 = vsel %vm963, %v5322, %v5326
      %v5329 = vshrl.u32 %v5192, 16
      %v5331 = vrot.slane %v5329, 4
      %v5332 = vshll.u32 %v5192, 16
      %v5334 = vrot.slane %v5332, 5
      %v5335 = vor.u32 %v5331, %v5334
      %v5336 = vrot.slane %v5335, 4
      %v5338 = vshll.u32 %v5193, 16
      %v5340 = vrot.slane %v5338, 5
      %v5341 = vsel %vm963, %v5336, %v5340
      %v5342 = vshrl.u32 %v5193, 16
      %v5344 = vrot.slane %v5342, 4
      %v5345 = vor.u32 %v5344, %v5340
      %v5346 = vrot.slane %v5345, 4
      %v5348 = vshll.u32 %v5220, 16
      %v5350 = vrot.slane %v5348, 5
      %v5351 = vsel %vm963, %v5346, %v5350
      %v5353 = vshrl.u32 %v5194, 16
      %v5355 = vrot.slane %v5353, 4
      %v5356 = vshll.u32 %v5194, 16
      %v5358 = vrot.slane %v5356, 5
      %v5359 = vor.u32 %v5355, %v5358
      %v5360 = vrot.slane %v5359, 4
      %v5362 = vshll.u32 %v5195, 16
      %v5364 = vrot.slane %v5362, 5
      %v5365 = vsel %vm963, %v5360, %v5364
      %v5366 = vshrl.u32 %v5195, 16
      %v5368 = vrot.slane %v5366, 4
      %v5369 = vor.u32 %v5368, %v5364
      %v5370 = vrot.slane %v5369, 4
      %v5372 = vshll.u32 %v5221, 16
      %v5374 = vrot.slane %v5372, 5
      %v5375 = vsel %vm963, %v5370, %v5374
      %v5377 = vshrl.u32 %v5196, 16
      %v5379 = vrot.slane %v5377, 4
      %v5380 = vshll.u32 %v5196, 16
      %v5382 = vrot.slane %v5380, 5
      %v5383 = vor.u32 %v5379, %v5382
      %v5384 = vrot.slane %v5383, 4
      %v5386 = vshll.u32 %v5197, 16
      %v5388 = vrot.slane %v5386, 5
      %v5389 = vsel %vm963, %v5384, %v5388
      %v5390 = vshrl.u32 %v5197, 16
      %v5392 = vrot.slane %v5390, 4
      %v5393 = vor.u32 %v5392, %v5388
      %v5394 = vrot.slane %v5393, 4
      %v5396 = vshll.u32 %v5222, 16
      %v5398 = vrot.slane %v5396, 5
      %v5399 = vsel %vm963, %v5394, %v5398
      %v5401 = vshrl.u32 %v5198, 16
      %v5403 = vrot.slane %v5401, 4
      %v5404 = vshll.u32 %v5198, 16
      %v5406 = vrot.slane %v5404, 5
      %v5407 = vor.u32 %v5403, %v5406
      %v5408 = vrot.slane %v5407, 4
      %v5410 = vshll.u32 %v5199, 16
      %v5412 = vrot.slane %v5410, 5
      %v5413 = vsel %vm963, %v5408, %v5412
      %v5414 = vshrl.u32 %v5199, 16
      %v5416 = vrot.slane %v5414, 4
      %v5417 = vor.u32 %v5416, %v5412
      %v5418 = vrot.slane %v5417, 4
      %v5420 = vshll.u32 %v5223, 16
      %v5422 = vrot.slane %v5420, 5
      %v5423 = vsel %vm963, %v5418, %v5422
      %v5425 = vshrl.u32 %v5200, 16
      %v5427 = vrot.slane %v5425, 4
      %v5428 = vshll.u32 %v5200, 16
      %v5430 = vrot.slane %v5428, 5
      %v5431 = vor.u32 %v5427, %v5430
      %v5432 = vrot.slane %v5431, 4
      %v5434 = vshll.u32 %v5201, 16
      %v5436 = vrot.slane %v5434, 5
      %v5437 = vsel %vm963, %v5432, %v5436
      %v5438 = vshrl.u32 %v5201, 16
      %v5440 = vrot.slane %v5438, 4
      %v5441 = vor.u32 %v5440, %v5436
      %v5442 = vrot.slane %v5441, 4
      %v5444 = vshll.u32 %v5224, 16
      %v5446 = vrot.slane %v5444, 5
      %v5447 = vsel %vm963, %v5442, %v5446
      %v5449 = vshrl.u32 %v5202, 16
      %v5451 = vrot.slane %v5449, 4
      %v5452 = vshll.u32 %v5202, 16
      %v5454 = vrot.slane %v5452, 5
      %v5455 = vor.u32 %v5451, %v5454
      %v5456 = vrot.slane %v5455, 4
      %v5458 = vshll.u32 %v5203, 16
      %v5460 = vrot.slane %v5458, 5
      %v5461 = vsel %vm963, %v5456, %v5460
      %v5462 = vshrl.u32 %v5203, 16
      %v5464 = vrot.slane %v5462, 4
      %v5465 = vor.u32 %v5464, %v5460
      %v5466 = vrot.slane %v5465, 4
      %v5468 = vshll.u32 %v5225, 16
      %v5470 = vrot.slane %v5468, 5
      %v5471 = vsel %vm963, %v5466, %v5470
      %v5473 = vshrl.u32 %v5204, 16
      %v5475 = vrot.slane %v5473, 4
      %v5476 = vshll.u32 %v5204, 16
      %v5478 = vrot.slane %v5476, 5
      %v5479 = vor.u32 %v5475, %v5478
      %v5480 = vrot.slane %v5479, 4
      %v5482 = vshll.u32 %v5205, 16
      %v5484 = vrot.slane %v5482, 5
      %v5485 = vsel %vm963, %v5480, %v5484
      %v5486 = vshrl.u32 %v5205, 16
      %v5488 = vrot.slane %v5486, 4
      %v5489 = vor.u32 %v5488, %v5484
      %v5490 = vrot.slane %v5489, 4
      %v5492 = vshll.u32 %v5226, 16
      %v5494 = vrot.slane %v5492, 5
      %v5495 = vsel %vm963, %v5490, %v5494
      %v5497 = vshrl.u32 %v5206, 16
      %v5499 = vrot.slane %v5497, 4
      %v5500 = vshll.u32 %v5206, 16
      %v5502 = vrot.slane %v5500, 5
      %v5503 = vor.u32 %v5499, %v5502
      %v5504 = vrot.slane %v5503, 4
      %v5506 = vshll.u32 %v5207, 16
      %v5508 = vrot.slane %v5506, 5
      %v5509 = vsel %vm963, %v5504, %v5508
      %v5510 = vshrl.u32 %v5207, 16
      %v5512 = vrot.slane %v5510, 4
      %v5513 = vor.u32 %v5512, %v5508
      %v5514 = vrot.slane %v5513, 4
      %v5516 = vshll.u32 %v5227, 16
      %v5518 = vrot.slane %v5516, 5
      %v5519 = vsel %vm963, %v5514, %v5518
      %v5521 = vshrl.u32 %v5208, 16
      %v5523 = vrot.slane %v5521, 4
      %v5524 = vshll.u32 %v5208, 16
      %v5526 = vrot.slane %v5524, 5
      %v5527 = vor.u32 %v5523, %v5526
      %v5528 = vrot.slane %v5527, 4
      %v5530 = vshll.u32 %v5209, 16
      %v5532 = vrot.slane %v5530, 5
      %v5533 = vsel %vm963, %v5528, %v5532
      %v5534 = vshrl.u32 %v5209, 16
      %v5536 = vrot.slane %v5534, 4
      %v5537 = vor.u32 %v5536, %v5532
      %v5538 = vrot.slane %v5537, 4
      %v5540 = vshll.u32 %v5228, 16
      %v5542 = vrot.slane %v5540, 5
      %v5543 = vsel %vm963, %v5538, %v5542
      %v5545 = vshrl.u32 %v5210, 16
      %v5547 = vrot.slane %v5545, 4
      %v5548 = vshll.u32 %v5210, 16
      %v5550 = vrot.slane %v5548, 5
      %v5551 = vor.u32 %v5547, %v5550
      %v5552 = vrot.slane %v5551, 4
      %v5554 = vshll.u32 %v5211, 16
      %v5556 = vrot.slane %v5554, 5
      %v5557 = vsel %vm963, %v5552, %v5556
      %v5558 = vshrl.u32 %v5211, 16
      %v5560 = vrot.slane %v5558, 4
      %v5561 = vor.u32 %v5560, %v5556
      %v5562 = vrot.slane %v5561, 4
      %v5564 = vshll.u32 %v5229, 16
      %v5566 = vrot.slane %v5564, 5
      %v5567 = vsel %vm963, %v5562, %v5566
      %v5569 = vshrl.u32 %v5212, 16
      %v5571 = vrot.slane %v5569, 4
      %v5572 = vshll.u32 %v5212, 16
      %v5574 = vrot.slane %v5572, 5
      %v5575 = vor.u32 %v5571, %v5574
      %v5576 = vrot.slane %v5575, 4
      %v5578 = vshll.u32 %v5213, 16
      %v5580 = vrot.slane %v5578, 5
      %v5581 = vsel %vm963, %v5576, %v5580
      %v5582 = vshrl.u32 %v5213, 16
      %v5584 = vrot.slane %v5582, 4
      %v5585 = vor.u32 %v5584, %v5580
      %v5586 = vrot.slane %v5585, 4
      %v5588 = vshll.u32 %v5230, 16
      %v5590 = vrot.slane %v5588, 5
      %v5591 = vsel %vm963, %v5586, %v5590
      %v5593 = vshrl.u32 %v5214, 16
      %v5595 = vrot.slane %v5593, 4
      %v5596 = vshll.u32 %v5214, 16
      %v5598 = vrot.slane %v5596, 5
      %v5599 = vor.u32 %v5595, %v5598
      %v5600 = vrot.slane %v5599, 4
      %v5602 = vshll.u32 %v5215, 16
      %v5604 = vrot.slane %v5602, 5
      %v5605 = vsel %vm963, %v5600, %v5604
      %v5606 = vshrl.u32 %v5215, 16
      %v5608 = vrot.slane %v5606, 4
      %v5609 = vor.u32 %v5608, %v5604
      %v5610 = vrot.slane %v5609, 4
      %v5612 = vshll.u32 %v5231, 16
      %v5614 = vrot.slane %v5612, 5
      %v5615 = vsel %vm963, %v5610, %v5614
      %v5616 = vld [vmem:[%s798] sm:$0xe]
      %v5617 = vld [vmem:[%s798 + $0xc] sm:$0xe]
      %v5618 = vld [vmem:[%s798 + $0x18] sm:$0xe]
      %v5619 = vld [vmem:[%s798 + $0x24] sm:$0xe]
      %v5620 = vld [vmem:[%s798 + $0x30] sm:$0xe]
      %v5621 = vld [vmem:[%s798 + $0x3c] sm:$0xe]
      %v5622 = vld [vmem:[%s798 + $0x48] sm:$0xe]
      %v5623 = vld [vmem:[%s798 + $0x54] sm:$0xe]
      %v5624 = vld [vmem:[%s798 + $0x60] sm:$0xe]
      %v5625 = vld [vmem:[%s798 + $0x6c] sm:$0xe]
      %v5626 = vld [vmem:[%s798 + $0x78] sm:$0xe]
      %v5627 = vld [vmem:[%s798 + $0x84] sm:$0xe]
      %v5628 = vld [vmem:[%s798 + $0x90] sm:$0xe]
      %v5629 = vld [vmem:[%s798 + $0x9c] sm:$0xe]
      %v5630 = vld [vmem:[%s798 + $0xa8] sm:$0xe]
      %v5631 = vld [vmem:[%s798 + $0xb4] sm:$0xe]
      %v5680 = vrot.slane %v5616, 5
      %v5681 = vrot.slane %v5680, 4
      %v5682 = vrot.slane %v5185, 5
      %v5683 = vsel %vm1414, %v5681, %v5682
      %v5684 = vrot.slane %v5682, 4
      %v5685 = vrot.slane %v5216, 5
      %v5686 = vsel %vm1414, %v5684, %v5685
      %v5687 = vrot.slane %v5617, 5
      %v5688 = vrot.slane %v5687, 4
      %v5689 = vrot.slane %v5187, 5
      %v5690 = vsel %vm1414, %v5688, %v5689
      %v5691 = vrot.slane %v5689, 4
      %v5692 = vrot.slane %v5217, 5
      %v5693 = vsel %vm1414, %v5691, %v5692
      %v5694 = vrot.slane %v5618, 5
      %v5695 = vrot.slane %v5694, 4
      %v5696 = vrot.slane %v5189, 5
      %v5697 = vsel %vm1414, %v5695, %v5696
      %v5698 = vrot.slane %v5696, 4
      %v5699 = vrot.slane %v5218, 5
      %v5700 = vsel %vm1414, %v5698, %v5699
      %v5701 = vrot.slane %v5619, 5
      %v5702 = vrot.slane %v5701, 4
      %v5703 = vrot.slane %v5191, 5
      %v5704 = vsel %vm1414, %v5702, %v5703
      %v5705 = vrot.slane %v5703, 4
      %v5706 = vrot.slane %v5219, 5
      %v5707 = vsel %vm1414, %v5705, %v5706
      %v5708 = vrot.slane %v5620, 5
      %v5709 = vrot.slane %v5708, 4
      %v5710 = vrot.slane %v5193, 5
      %v5711 = vsel %vm1414, %v5709, %v5710
      %v5712 = vrot.slane %v5710, 4
      %v5713 = vrot.slane %v5220, 5
      %v5714 = vsel %vm1414, %v5712, %v5713
      %v5715 = vrot.slane %v5621, 5
      %v5716 = vrot.slane %v5715, 4
      %v5717 = vrot.slane %v5195, 5
      %v5718 = vsel %vm1414, %v5716, %v5717
      %v5719 = vrot.slane %v5717, 4
      %v5720 = vrot.slane %v5221, 5
      %v5721 = vsel %vm1414, %v5719, %v5720
      %v5722 = vrot.slane %v5622, 5
      %v5723 = vrot.slane %v5722, 4
      %v5724 = vrot.slane %v5197, 5
      %v5725 = vsel %vm1414, %v5723, %v5724
      %v5726 = vrot.slane %v5724, 4
      %v5727 = vrot.slane %v5222, 5
      %v5728 = vsel %vm1414, %v5726, %v5727
      %v5729 = vrot.slane %v5623, 5
      %v5730 = vrot.slane %v5729, 4
      %v5731 = vrot.slane %v5199, 5
      %v5732 = vsel %vm1414, %v5730, %v5731
      %v5733 = vrot.slane %v5731, 4
      %v5734 = vrot.slane %v5223, 5
      %v5735 = vsel %vm1414, %v5733, %v5734
      %v5736 = vrot.slane %v5624, 5
      %v5737 = vrot.slane %v5736, 4
      %v5738 = vrot.slane %v5201, 5
      %v5739 = vsel %vm1414, %v5737, %v5738
      %v5740 = vrot.slane %v5738, 4
      %v5741 = vrot.slane %v5224, 5
      %v5742 = vsel %vm1414, %v5740, %v5741
      %v5743 = vrot.slane %v5625, 5
      %v5744 = vrot.slane %v5743, 4
      %v5745 = vrot.slane %v5203, 5
      %v5746 = vsel %vm1414, %v5744, %v5745
      %v5747 = vrot.slane %v5745, 4
      %v5748 = vrot.slane %v5225, 5
      %v5749 = vsel %vm1414, %v5747, %v5748
      %v5750 = vrot.slane %v5626, 5
      %v5751 = vrot.slane %v5750, 4
      %v5752 = vrot.slane %v5205, 5
      %v5753 = vsel %vm1414, %v5751, %v5752
      %v5754 = vrot.slane %v5752, 4
      %v5755 = vrot.slane %v5226, 5
      %v5756 = vsel %vm1414, %v5754, %v5755
      %v5757 = vrot.slane %v5627, 5
      %v5758 = vrot.slane %v5757, 4
      %v5759 = vrot.slane %v5207, 5
      %v5760 = vsel %vm1414, %v5758, %v5759
      %v5761 = vrot.slane %v5759, 4
      %v5762 = vrot.slane %v5227, 5
      %v5763 = vsel %vm1414, %v5761, %v5762
      %v5764 = vrot.slane %v5628, 5
      %v5765 = vrot.slane %v5764, 4
      %v5766 = vrot.slane %v5209, 5
      %v5767 = vsel %vm1414, %v5765, %v5766
      %v5768 = vrot.slane %v5766, 4
      %v5769 = vrot.slane %v5228, 5
      %v5770 = vsel %vm1414, %v5768, %v5769
      %v5771 = vrot.slane %v5629, 5
      %v5772 = vrot.slane %v5771, 4
      %v5773 = vrot.slane %v5211, 5
      %v5774 = vsel %vm1414, %v5772, %v5773
      %v5775 = vrot.slane %v5773, 4
      %v5776 = vrot.slane %v5229, 5
      %v5777 = vsel %vm1414, %v5775, %v5776
      %v5778 = vrot.slane %v5630, 5
      %v5779 = vrot.slane %v5778, 4
      %v5780 = vrot.slane %v5213, 5
      %v5781 = vsel %vm1414, %v5779, %v5780
      %v5782 = vrot.slane %v5780, 4
      %v5783 = vrot.slane %v5230, 5
      %v5784 = vsel %vm1414, %v5782, %v5783
      %v5785 = vrot.slane %v5631, 5
      %v5786 = vrot.slane %v5785, 4
      %v5787 = vrot.slane %v5215, 5
      %v5788 = vsel %vm1414, %v5786, %v5787
      %v5789 = vrot.slane %v5787, 4
      %v5790 = vrot.slane %v5231, 5
      %v5791 = vsel %vm1414, %v5789, %v5790
      %v5792 = vld [vmem:[%s2135] sm:$0xf]
      %v5793 = vld [vmem:[%s2135 + $0x4] sm:$0xf]
      %v5794 = vld [vmem:[%s2135 + $0xc] sm:$0xf]
      %v5795 = vld [vmem:[%s2135 + $0x10] sm:$0xf]
      %v5796 = vld [vmem:[%s2135 + $0x18] sm:$0xf]
      %v5797 = vld [vmem:[%s2135 + $0x1c] sm:$0xf]
      %v5798 = vld [vmem:[%s2135 + $0x24] sm:$0xf]
      %v5799 = vld [vmem:[%s2135 + $0x28] sm:$0xf]
      %v5800 = vld [vmem:[%s2135 + $0x30] sm:$0xf]
      %v5801 = vld [vmem:[%s2135 + $0x34] sm:$0xf]
      %v5802 = vld [vmem:[%s2135 + $0x3c] sm:$0xf]
      %v5803 = vld [vmem:[%s2135 + $0x40] sm:$0xf]
      %v5804 = vld [vmem:[%s2135 + $0x48] sm:$0xf]
      %v5805 = vld [vmem:[%s2135 + $0x4c] sm:$0xf]
      %v5806 = vld [vmem:[%s2135 + $0x54] sm:$0xf]
      %v5807 = vld [vmem:[%s2135 + $0x58] sm:$0xf]
      %v5808 = vld [vmem:[%s2135 + $0x60] sm:$0xf]
      %v5809 = vld [vmem:[%s2135 + $0x64] sm:$0xf]
      %v5810 = vld [vmem:[%s2135 + $0x6c] sm:$0xf]
      %v5811 = vld [vmem:[%s2135 + $0x70] sm:$0xf]
      %v5812 = vld [vmem:[%s2135 + $0x78] sm:$0xf]
      %v5813 = vld [vmem:[%s2135 + $0x7c] sm:$0xf]
      %v5814 = vld [vmem:[%s2135 + $0x84] sm:$0xf]
      %v5815 = vld [vmem:[%s2135 + $0x88] sm:$0xf]
      %v5816 = vld [vmem:[%s2135 + $0x90] sm:$0xf]
      %v5817 = vld [vmem:[%s2135 + $0x94] sm:$0xf]
      %v5818 = vld [vmem:[%s2135 + $0x9c] sm:$0xf]
      %v5819 = vld [vmem:[%s2135 + $0xa0] sm:$0xf]
      %v5820 = vld [vmem:[%s2135 + $0xa8] sm:$0xf]
      %v5821 = vld [vmem:[%s2135 + $0xac] sm:$0xf]
      %v5822 = vld [vmem:[%s2135 + $0xb4] sm:$0xf]
      %v5823 = vld [vmem:[%s2135 + $0xb8] sm:$0xf]
      %v5824 = vld [vmem:[%s2135 + $0x8] sm:$0x1]
      %v5825 = vld [vmem:[%s2135 + $0x14] sm:$0x1]
      %v5826 = vld [vmem:[%s2135 + $0x20] sm:$0x1]
      %v5827 = vld [vmem:[%s2135 + $0x2c] sm:$0x1]
      %v5828 = vld [vmem:[%s2135 + $0x38] sm:$0x1]
      %v5829 = vld [vmem:[%s2135 + $0x44] sm:$0x1]
      %v5830 = vld [vmem:[%s2135 + $0x50] sm:$0x1]
      %v5831 = vld [vmem:[%s2135 + $0x5c] sm:$0x1]
      %v5832 = vld [vmem:[%s2135 + $0x68] sm:$0x1]
      %v5833 = vld [vmem:[%s2135 + $0x74] sm:$0x1]
      %v5834 = vld [vmem:[%s2135 + $0x80] sm:$0x1]
      %v5835 = vld [vmem:[%s2135 + $0x8c] sm:$0x1]
      %v5836 = vld [vmem:[%s2135 + $0x98] sm:$0x1]
      %v5837 = vld [vmem:[%s2135 + $0xa4] sm:$0x1]
      %v5838 = vld [vmem:[%s2135 + $0xb0] sm:$0x1]
      %v5839 = vld [vmem:[%s2135 + $0xbc] sm:$0x1]
      %v5841 = vshrl.u32 %v5792, 16
      %v5843 = vrot.slane %v5841, 4
      %v5844 = vshll.u32 %v5792, 16
      %v5846 = vrot.slane %v5844, 5
      %v5847 = vor.u32 %v5843, %v5846
      %v5848 = vrot.slane %v5847, 4
      %v5850 = vshll.u32 %v5793, 16
      %v5852 = vrot.slane %v5850, 5
      %v5853 = vsel %vm963, %v5848, %v5852
      %v5854 = vshrl.u32 %v5793, 16
      %v5856 = vrot.slane %v5854, 4
      %v5857 = vor.u32 %v5856, %v5852
      %v5858 = vrot.slane %v5857, 4
      %v5860 = vshll.u32 %v5824, 16
      %v5862 = vrot.slane %v5860, 5
      %v5863 = vsel %vm963, %v5858, %v5862
      %v5865 = vshrl.u32 %v5794, 16
      %v5867 = vrot.slane %v5865, 4
      %v5868 = vshll.u32 %v5794, 16
      %v5870 = vrot.slane %v5868, 5
      %v5871 = vor.u32 %v5867, %v5870
      %v5872 = vrot.slane %v5871, 4
      %v5874 = vshll.u32 %v5795, 16
      %v5876 = vrot.slane %v5874, 5
      %v5877 = vsel %vm963, %v5872, %v5876
      %v5878 = vshrl.u32 %v5795, 16
      %v5880 = vrot.slane %v5878, 4
      %v5881 = vor.u32 %v5880, %v5876
      %v5882 = vrot.slane %v5881, 4
      %v5884 = vshll.u32 %v5825, 16
      %v5886 = vrot.slane %v5884, 5
      %v5887 = vsel %vm963, %v5882, %v5886
      %v5889 = vshrl.u32 %v5796, 16
      %v5891 = vrot.slane %v5889, 4
      %v5892 = vshll.u32 %v5796, 16
      %v5894 = vrot.slane %v5892, 5
      %v5895 = vor.u32 %v5891, %v5894
      %v5896 = vrot.slane %v5895, 4
      %v5898 = vshll.u32 %v5797, 16
      %v5900 = vrot.slane %v5898, 5
      %v5901 = vsel %vm963, %v5896, %v5900
      %v5902 = vshrl.u32 %v5797, 16
      %v5904 = vrot.slane %v5902, 4
      %v5905 = vor.u32 %v5904, %v5900
      %v5906 = vrot.slane %v5905, 4
      %v5908 = vshll.u32 %v5826, 16
      %v5910 = vrot.slane %v5908, 5
      %v5911 = vsel %vm963, %v5906, %v5910
      %v5913 = vshrl.u32 %v5798, 16
      %v5915 = vrot.slane %v5913, 4
      %v5916 = vshll.u32 %v5798, 16
      %v5918 = vrot.slane %v5916, 5
      %v5919 = vor.u32 %v5915, %v5918
      %v5920 = vrot.slane %v5919, 4
      %v5922 = vshll.u32 %v5799, 16
      %v5924 = vrot.slane %v5922, 5
      %v5925 = vsel %vm963, %v5920, %v5924
      %v5926 = vshrl.u32 %v5799, 16
      %v5928 = vrot.slane %v5926, 4
      %v5929 = vor.u32 %v5928, %v5924
      %v5930 = vrot.slane %v5929, 4
      %v5932 = vshll.u32 %v5827, 16
      %v5934 = vrot.slane %v5932, 5
      %v5935 = vsel %vm963, %v5930, %v5934
      %v5937 = vshrl.u32 %v5800, 16
      %v5939 = vrot.slane %v5937, 4
      %v5940 = vshll.u32 %v5800, 16
      %v5942 = vrot.slane %v5940, 5
      %v5943 = vor.u32 %v5939, %v5942
      %v5944 = vrot.slane %v5943, 4
      %v5946 = vshll.u32 %v5801, 16
      %v5948 = vrot.slane %v5946, 5
      %v5949 = vsel %vm963, %v5944, %v5948
      %v5950 = vshrl.u32 %v5801, 16
      %v5952 = vrot.slane %v5950, 4
      %v5953 = vor.u32 %v5952, %v5948
      %v5954 = vrot.slane %v5953, 4
      %v5956 = vshll.u32 %v5828, 16
      %v5958 = vrot.slane %v5956, 5
      %v5959 = vsel %vm963, %v5954, %v5958
      %v5961 = vshrl.u32 %v5802, 16
      %v5963 = vrot.slane %v5961, 4
      %v5964 = vshll.u32 %v5802, 16
      %v5966 = vrot.slane %v5964, 5
      %v5967 = vor.u32 %v5963, %v5966
      %v5968 = vrot.slane %v5967, 4
      %v5970 = vshll.u32 %v5803, 16
      %v5972 = vrot.slane %v5970, 5
      %v5973 = vsel %vm963, %v5968, %v5972
      %v5974 = vshrl.u32 %v5803, 16
      %v5976 = vrot.slane %v5974, 4
      %v5977 = vor.u32 %v5976, %v5972
      %v5978 = vrot.slane %v5977, 4
      %v5980 = vshll.u32 %v5829, 16
      %v5982 = vrot.slane %v5980, 5
      %v5983 = vsel %vm963, %v5978, %v5982
      %v5985 = vshrl.u32 %v5804, 16
      %v5987 = vrot.slane %v5985, 4
      %v5988 = vshll.u32 %v5804, 16
      %v5990 = vrot.slane %v5988, 5
      %v5991 = vor.u32 %v5987, %v5990
      %v5992 = vrot.slane %v5991, 4
      %v5994 = vshll.u32 %v5805, 16
      %v5996 = vrot.slane %v5994, 5
      %v5997 = vsel %vm963, %v5992, %v5996
      %v5998 = vshrl.u32 %v5805, 16
      %v6000 = vrot.slane %v5998, 4
      %v6001 = vor.u32 %v6000, %v5996
      %v6002 = vrot.slane %v6001, 4
      %v6004 = vshll.u32 %v5830, 16
      %v6006 = vrot.slane %v6004, 5
      %v6007 = vsel %vm963, %v6002, %v6006
      %v6009 = vshrl.u32 %v5806, 16
      %v6011 = vrot.slane %v6009, 4
      %v6012 = vshll.u32 %v5806, 16
      %v6014 = vrot.slane %v6012, 5
      %v6015 = vor.u32 %v6011, %v6014
      %v6016 = vrot.slane %v6015, 4
      %v6018 = vshll.u32 %v5807, 16
      %v6020 = vrot.slane %v6018, 5
      %v6021 = vsel %vm963, %v6016, %v6020
      %v6022 = vshrl.u32 %v5807, 16
      %v6024 = vrot.slane %v6022, 4
      %v6025 = vor.u32 %v6024, %v6020
      %v6026 = vrot.slane %v6025, 4
      %v6028 = vshll.u32 %v5831, 16
      %v6030 = vrot.slane %v6028, 5
      %v6031 = vsel %vm963, %v6026, %v6030
      %v6033 = vshrl.u32 %v5808, 16
      %v6035 = vrot.slane %v6033, 4
      %v6036 = vshll.u32 %v5808, 16
      %v6038 = vrot.slane %v6036, 5
      %v6039 = vor.u32 %v6035, %v6038
      %v6040 = vrot.slane %v6039, 4
      %v6042 = vshll.u32 %v5809, 16
      %v6044 = vrot.slane %v6042, 5
      %v6045 = vsel %vm963, %v6040, %v6044
      %v6046 = vshrl.u32 %v5809, 16
      %v6048 = vrot.slane %v6046, 4
      %v6049 = vor.u32 %v6048, %v6044
      %v6050 = vrot.slane %v6049, 4
      %v6052 = vshll.u32 %v5832, 16
      %v6054 = vrot.slane %v6052, 5
      %v6055 = vsel %vm963, %v6050, %v6054
      %v6057 = vshrl.u32 %v5810, 16
      %v6059 = vrot.slane %v6057, 4
      %v6060 = vshll.u32 %v5810, 16
      %v6062 = vrot.slane %v6060, 5
      %v6063 = vor.u32 %v6059, %v6062
      %v6064 = vrot.slane %v6063, 4
      %v6066 = vshll.u32 %v5811, 16
      %v6068 = vrot.slane %v6066, 5
      %v6069 = vsel %vm963, %v6064, %v6068
      %v6070 = vshrl.u32 %v5811, 16
      %v6072 = vrot.slane %v6070, 4
      %v6073 = vor.u32 %v6072, %v6068
      %v6074 = vrot.slane %v6073, 4
      %v6076 = vshll.u32 %v5833, 16
      %v6078 = vrot.slane %v6076, 5
      %v6079 = vsel %vm963, %v6074, %v6078
      %v6081 = vshrl.u32 %v5812, 16
      %v6083 = vrot.slane %v6081, 4
      %v6084 = vshll.u32 %v5812, 16
      %v6086 = vrot.slane %v6084, 5
      %v6087 = vor.u32 %v6083, %v6086
      %v6088 = vrot.slane %v6087, 4
      %v6090 = vshll.u32 %v5813, 16
      %v6092 = vrot.slane %v6090, 5
      %v6093 = vsel %vm963, %v6088, %v6092
      %v6094 = vshrl.u32 %v5813, 16
      %v6096 = vrot.slane %v6094, 4
      %v6097 = vor.u32 %v6096, %v6092
      %v6098 = vrot.slane %v6097, 4
      %v6100 = vshll.u32 %v5834, 16
      %v6102 = vrot.slane %v6100, 5
      %v6103 = vsel %vm963, %v6098, %v6102
      %v6105 = vshrl.u32 %v5814, 16
      %v6107 = vrot.slane %v6105, 4
      %v6108 = vshll.u32 %v5814, 16
      %v6110 = vrot.slane %v6108, 5
      %v6111 = vor.u32 %v6107, %v6110
      %v6112 = vrot.slane %v6111, 4
      %v6114 = vshll.u32 %v5815, 16
      %v6116 = vrot.slane %v6114, 5
      %v6117 = vsel %vm963, %v6112, %v6116
      %v6118 = vshrl.u32 %v5815, 16
      %v6120 = vrot.slane %v6118, 4
      %v6121 = vor.u32 %v6120, %v6116
      %v6122 = vrot.slane %v6121, 4
      %v6124 = vshll.u32 %v5835, 16
      %v6126 = vrot.slane %v6124, 5
      %v6127 = vsel %vm963, %v6122, %v6126
      %v6129 = vshrl.u32 %v5816, 16
      %v6131 = vrot.slane %v6129, 4
      %v6132 = vshll.u32 %v5816, 16
      %v6134 = vrot.slane %v6132, 5
      %v6135 = vor.u32 %v6131, %v6134
      %v6136 = vrot.slane %v6135, 4
      %v6138 = vshll.u32 %v5817, 16
      %v6140 = vrot.slane %v6138, 5
      %v6141 = vsel %vm963, %v6136, %v6140
      %v6142 = vshrl.u32 %v5817, 16
      %v6144 = vrot.slane %v6142, 4
      %v6145 = vor.u32 %v6144, %v6140
      %v6146 = vrot.slane %v6145, 4
      %v6148 = vshll.u32 %v5836, 16
      %v6150 = vrot.slane %v6148, 5
      %v6151 = vsel %vm963, %v6146, %v6150
      %v6153 = vshrl.u32 %v5818, 16
      %v6155 = vrot.slane %v6153, 4
      %v6156 = vshll.u32 %v5818, 16
      %v6158 = vrot.slane %v6156, 5
      %v6159 = vor.u32 %v6155, %v6158
      %v6160 = vrot.slane %v6159, 4
      %v6162 = vshll.u32 %v5819, 16
      %v6164 = vrot.slane %v6162, 5
      %v6165 = vsel %vm963, %v6160, %v6164
      %v6166 = vshrl.u32 %v5819, 16
      %v6168 = vrot.slane %v6166, 4
      %v6169 = vor.u32 %v6168, %v6164
      %v6170 = vrot.slane %v6169, 4
      %v6172 = vshll.u32 %v5837, 16
      %v6174 = vrot.slane %v6172, 5
      %v6175 = vsel %vm963, %v6170, %v6174
      %v6177 = vshrl.u32 %v5820, 16
      %v6179 = vrot.slane %v6177, 4
      %v6180 = vshll.u32 %v5820, 16
      %v6182 = vrot.slane %v6180, 5
      %v6183 = vor.u32 %v6179, %v6182
      %v6184 = vrot.slane %v6183, 4
      %v6186 = vshll.u32 %v5821, 16
      %v6188 = vrot.slane %v6186, 5
      %v6189 = vsel %vm963, %v6184, %v6188
      %v6190 = vshrl.u32 %v5821, 16
      %v6192 = vrot.slane %v6190, 4
      %v6193 = vor.u32 %v6192, %v6188
      %v6194 = vrot.slane %v6193, 4
      %v6196 = vshll.u32 %v5838, 16
      %v6198 = vrot.slane %v6196, 5
      %v6199 = vsel %vm963, %v6194, %v6198
      %v6201 = vshrl.u32 %v5822, 16
      %v6203 = vrot.slane %v6201, 4
      %v6204 = vshll.u32 %v5822, 16
      %v6206 = vrot.slane %v6204, 5
      %v6207 = vor.u32 %v6203, %v6206
      %v6208 = vrot.slane %v6207, 4
      %v6210 = vshll.u32 %v5823, 16
      %v6212 = vrot.slane %v6210, 5
      %v6213 = vsel %vm963, %v6208, %v6212
      %v6214 = vshrl.u32 %v5823, 16
      %v6216 = vrot.slane %v6214, 4
      %v6217 = vor.u32 %v6216, %v6212
      %v6218 = vrot.slane %v6217, 4
      %v6220 = vshll.u32 %v5839, 16
      %v6222 = vrot.slane %v6220, 5
      %v6223 = vsel %vm963, %v6218, %v6222
      %v6224 = vld [vmem:[%s2135] sm:$0xe]
      %v6225 = vld [vmem:[%s2135 + $0xc] sm:$0xe]
      %v6226 = vld [vmem:[%s2135 + $0x18] sm:$0xe]
      %v6227 = vld [vmem:[%s2135 + $0x24] sm:$0xe]
      %v6228 = vld [vmem:[%s2135 + $0x30] sm:$0xe]
      %v6229 = vld [vmem:[%s2135 + $0x3c] sm:$0xe]
      %v6230 = vld [vmem:[%s2135 + $0x48] sm:$0xe]
      %v6231 = vld [vmem:[%s2135 + $0x54] sm:$0xe]
      %v6232 = vld [vmem:[%s2135 + $0x60] sm:$0xe]
      %v6233 = vld [vmem:[%s2135 + $0x6c] sm:$0xe]
      %v6234 = vld [vmem:[%s2135 + $0x78] sm:$0xe]
      %v6235 = vld [vmem:[%s2135 + $0x84] sm:$0xe]
      %v6236 = vld [vmem:[%s2135 + $0x90] sm:$0xe]
      %v6237 = vld [vmem:[%s2135 + $0x9c] sm:$0xe]
      %v6238 = vld [vmem:[%s2135 + $0xa8] sm:$0xe]
      %v6239 = vld [vmem:[%s2135 + $0xb4] sm:$0xe]
      %v6288 = vrot.slane %v6224, 5
      %v6289 = vrot.slane %v6288, 4
      %v6290 = vrot.slane %v5793, 5
      %v6291 = vsel %vm1414, %v6289, %v6290
      %v6292 = vrot.slane %v6290, 4
      %v6293 = vrot.slane %v5824, 5
      %v6294 = vsel %vm1414, %v6292, %v6293
      %v6295 = vrot.slane %v6225, 5
      %v6296 = vrot.slane %v6295, 4
      %v6297 = vrot.slane %v5795, 5
      %v6298 = vsel %vm1414, %v6296, %v6297
      %v6299 = vrot.slane %v6297, 4
      %v6300 = vrot.slane %v5825, 5
      %v6301 = vsel %vm1414, %v6299, %v6300
      %v6302 = vrot.slane %v6226, 5
      %v6303 = vrot.slane %v6302, 4
      %v6304 = vrot.slane %v5797, 5
      %v6305 = vsel %vm1414, %v6303, %v6304
      %v6306 = vrot.slane %v6304, 4
      %v6307 = vrot.slane %v5826, 5
      %v6308 = vsel %vm1414, %v6306, %v6307
      %v6309 = vrot.slane %v6227, 5
      %v6310 = vrot.slane %v6309, 4
      %v6311 = vrot.slane %v5799, 5
      %v6312 = vsel %vm1414, %v6310, %v6311
      %v6313 = vrot.slane %v6311, 4
      %v6314 = vrot.slane %v5827, 5
      %v6315 = vsel %vm1414, %v6313, %v6314
      %v6316 = vrot.slane %v6228, 5
      %v6317 = vrot.slane %v6316, 4
      %v6318 = vrot.slane %v5801, 5
      %v6319 = vsel %vm1414, %v6317, %v6318
      %v6320 = vrot.slane %v6318, 4
      %v6321 = vrot.slane %v5828, 5
      %v6322 = vsel %vm1414, %v6320, %v6321
      %v6323 = vrot.slane %v6229, 5
      %v6324 = vrot.slane %v6323, 4
      %v6325 = vrot.slane %v5803, 5
      %v6326 = vsel %vm1414, %v6324, %v6325
      %v6327 = vrot.slane %v6325, 4
      %v6328 = vrot.slane %v5829, 5
      %v6329 = vsel %vm1414, %v6327, %v6328
      %v6330 = vrot.slane %v6230, 5
      %v6331 = vrot.slane %v6330, 4
      %v6332 = vrot.slane %v5805, 5
      %v6333 = vsel %vm1414, %v6331, %v6332
      %v6334 = vrot.slane %v6332, 4
      %v6335 = vrot.slane %v5830, 5
      %v6336 = vsel %vm1414, %v6334, %v6335
      %v6337 = vrot.slane %v6231, 5
      %v6338 = vrot.slane %v6337, 4
      %v6339 = vrot.slane %v5807, 5
      %v6340 = vsel %vm1414, %v6338, %v6339
      %v6341 = vrot.slane %v6339, 4
      %v6342 = vrot.slane %v5831, 5
      %v6343 = vsel %vm1414, %v6341, %v6342
      %v6344 = vrot.slane %v6232, 5
      %v6345 = vrot.slane %v6344, 4
      %v6346 = vrot.slane %v5809, 5
      %v6347 = vsel %vm1414, %v6345, %v6346
      %v6348 = vrot.slane %v6346, 4
      %v6349 = vrot.slane %v5832, 5
      %v6350 = vsel %vm1414, %v6348, %v6349
      %v6351 = vrot.slane %v6233, 5
      %v6352 = vrot.slane %v6351, 4
      %v6353 = vrot.slane %v5811, 5
      %v6354 = vsel %vm1414, %v6352, %v6353
      %v6355 = vrot.slane %v6353, 4
      %v6356 = vrot.slane %v5833, 5
      %v6357 = vsel %vm1414, %v6355, %v6356
      %v6358 = vrot.slane %v6234, 5
      %v6359 = vrot.slane %v6358, 4
      %v6360 = vrot.slane %v5813, 5
      %v6361 = vsel %vm1414, %v6359, %v6360
      %v6362 = vrot.slane %v6360, 4
      %v6363 = vrot.slane %v5834, 5
      %v6364 = vsel %vm1414, %v6362, %v6363
      %v6365 = vrot.slane %v6235, 5
      %v6366 = vrot.slane %v6365, 4
      %v6367 = vrot.slane %v5815, 5
      %v6368 = vsel %vm1414, %v6366, %v6367
      %v6369 = vrot.slane %v6367, 4
      %v6370 = vrot.slane %v5835, 5
      %v6371 = vsel %vm1414, %v6369, %v6370
      %v6372 = vrot.slane %v6236, 5
      %v6373 = vrot.slane %v6372, 4
      %v6374 = vrot.slane %v5817, 5
      %v6375 = vsel %vm1414, %v6373, %v6374
      %v6376 = vrot.slane %v6374, 4
      %v6377 = vrot.slane %v5836, 5
      %v6378 = vsel %vm1414, %v6376, %v6377
      %v6379 = vrot.slane %v6237, 5
      %v6380 = vrot.slane %v6379, 4
      %v6381 = vrot.slane %v5819, 5
      %v6382 = vsel %vm1414, %v6380, %v6381
      %v6383 = vrot.slane %v6381, 4
      %v6384 = vrot.slane %v5837, 5
      %v6385 = vsel %vm1414, %v6383, %v6384
      %v6386 = vrot.slane %v6238, 5
      %v6387 = vrot.slane %v6386, 4
      %v6388 = vrot.slane %v5821, 5
      %v6389 = vsel %vm1414, %v6387, %v6388
      %v6390 = vrot.slane %v6388, 4
      %v6391 = vrot.slane %v5838, 5
      %v6392 = vsel %vm1414, %v6390, %v6391
      %v6393 = vrot.slane %v6239, 5
      %v6394 = vrot.slane %v6393, 4
      %v6395 = vrot.slane %v5823, 5
      %v6396 = vsel %vm1414, %v6394, %v6395
      %v6397 = vrot.slane %v6395, 4
      %v6398 = vrot.slane %v5839, 5
      %v6399 = vsel %vm1414, %v6397, %v6398
      %v6416 = vunpack.c.l.b16 %v4576
      %v6417 = vunpack.c.l.b16 %v4577
      %v6418 = vunpack.c.l.b16 %v4578
      %v6419 = vunpack.c.l.b16 %v4579
      %v6420 = vunpack.c.l.b16 %v4580
      %v6421 = vunpack.c.l.b16 %v4581
      %v6422 = vunpack.c.l.b16 %v4582
      %v6423 = vunpack.c.l.b16 %v4583
      %v6424 = vunpack.c.l.b16 %v4584
      %v6425 = vunpack.c.l.b16 %v4585
      %v6426 = vunpack.c.l.b16 %v4586
      %v6427 = vunpack.c.l.b16 %v4587
      %v6428 = vunpack.c.l.b16 %v4588
      %v6429 = vunpack.c.l.b16 %v4589
      %v6430 = vunpack.c.l.b16 %v4590
      %v6431 = vunpack.c.l.b16 %v4591
      %v6432 = vunpack.c.l.b16 %v4592
      %v6433 = vunpack.c.l.b16 %v4593
      %v6434 = vunpack.c.l.b16 %v4594
      %v6435 = vunpack.c.l.b16 %v4595
      %v6436 = vunpack.c.l.b16 %v4596
      %v6437 = vunpack.c.l.b16 %v4597
      %v6438 = vunpack.c.l.b16 %v4598
      %v6439 = vunpack.c.l.b16 %v4599
      %v6440 = vunpack.c.l.b16 %v4600
      %v6441 = vunpack.c.l.b16 %v4601
      %v6442 = vunpack.c.l.b16 %v4602
      %v6443 = vunpack.c.l.b16 %v4603
      %v6444 = vunpack.c.l.b16 %v4604
      %v6445 = vunpack.c.l.b16 %v4605
      %v6446 = vunpack.c.l.b16 %v4606
      %v6447 = vunpack.c.l.b16 %v4607
      %v6448 = vpack.c.b16 %v6417, %v6416
      %v6449 = vpack.c.b16 %v6419, %v6418
      %v6450 = vpack.c.b16 %v6421, %v6420
      %v6451 = vpack.c.b16 %v6423, %v6422
      %v6452 = vpack.c.b16 %v6425, %v6424
      %v6453 = vpack.c.b16 %v6427, %v6426
      %v6454 = vpack.c.b16 %v6429, %v6428
      %v6455 = vpack.c.b16 %v6431, %v6430
      %v6456 = vpack.c.b16 %v6433, %v6432
      %v6457 = vpack.c.b16 %v6435, %v6434
      %v6458 = vpack.c.b16 %v6437, %v6436
      %v6459 = vpack.c.b16 %v6439, %v6438
      %v6460 = vpack.c.b16 %v6441, %v6440
      %v6461 = vpack.c.b16 %v6443, %v6442
      %v6462 = vpack.c.b16 %v6445, %v6444
      %v6463 = vpack.c.b16 %v6447, %v6446
      %v6464 = vunpack.c.l.b16 %v4637
      %v6465 = vunpack.c.l.b16 %v4647
      %v6466 = vunpack.c.l.b16 %v4661
      %v6467 = vunpack.c.l.b16 %v4671
      %v6468 = vunpack.c.l.b16 %v4685
      %v6469 = vunpack.c.l.b16 %v4695
      %v6470 = vunpack.c.l.b16 %v4709
      %v6471 = vunpack.c.l.b16 %v4719
      %v6472 = vunpack.c.l.b16 %v4733
      %v6473 = vunpack.c.l.b16 %v4743
      %v6474 = vunpack.c.l.b16 %v4757
      %v6475 = vunpack.c.l.b16 %v4767
      %v6476 = vunpack.c.l.b16 %v4781
      %v6477 = vunpack.c.l.b16 %v4791
      %v6478 = vunpack.c.l.b16 %v4805
      %v6479 = vunpack.c.l.b16 %v4815
      %v6480 = vunpack.c.l.b16 %v4829
      %v6481 = vunpack.c.l.b16 %v4839
      %v6482 = vunpack.c.l.b16 %v4853
      %v6483 = vunpack.c.l.b16 %v4863
      %v6484 = vunpack.c.l.b16 %v4877
      %v6485 = vunpack.c.l.b16 %v4887
      %v6486 = vunpack.c.l.b16 %v4901
      %v6487 = vunpack.c.l.b16 %v4911
      %v6488 = vunpack.c.l.b16 %v4925
      %v6489 = vunpack.c.l.b16 %v4935
      %v6490 = vunpack.c.l.b16 %v4949
      %v6491 = vunpack.c.l.b16 %v4959
      %v6492 = vunpack.c.l.b16 %v4973
      %v6493 = vunpack.c.l.b16 %v4983
      %v6494 = vunpack.c.l.b16 %v4997
      %v6495 = vunpack.c.l.b16 %v5007
      %v6496 = vpack.c.b16 %v6465, %v6464
      %v6497 = vpack.c.b16 %v6467, %v6466
      %v6498 = vpack.c.b16 %v6469, %v6468
      %v6499 = vpack.c.b16 %v6471, %v6470
      %v6500 = vpack.c.b16 %v6473, %v6472
      %v6501 = vpack.c.b16 %v6475, %v6474
      %v6502 = vpack.c.b16 %v6477, %v6476
      %v6503 = vpack.c.b16 %v6479, %v6478
      %v6504 = vpack.c.b16 %v6481, %v6480
      %v6505 = vpack.c.b16 %v6483, %v6482
      %v6506 = vpack.c.b16 %v6485, %v6484
      %v6507 = vpack.c.b16 %v6487, %v6486
      %v6508 = vpack.c.b16 %v6489, %v6488
      %v6509 = vpack.c.b16 %v6491, %v6490
      %v6510 = vpack.c.b16 %v6493, %v6492
      %v6511 = vpack.c.b16 %v6495, %v6494
      %6512 = vrot.lane.b32.xlu0 %v6496, 4
      %v6513 = vpop.permute.xlu0 %6512
      %6514 = vrot.lane.b32.xlu0 %v6497, 4
      %v6515 = vpop.permute.xlu0 %6514
      %6516 = vrot.lane.b32.xlu0 %v6498, 4
      %v6517 = vpop.permute.xlu0 %6516
      %6518 = vrot.lane.b32.xlu0 %v6499, 4
      %v6519 = vpop.permute.xlu0 %6518
      %6520 = vrot.lane.b32.xlu0 %v6500, 4
      %v6521 = vpop.permute.xlu0 %6520
      %6522 = vrot.lane.b32.xlu0 %v6501, 4
      %v6523 = vpop.permute.xlu0 %6522
      %6524 = vrot.lane.b32.xlu0 %v6502, 4
      %v6525 = vpop.permute.xlu0 %6524
      %6526 = vrot.lane.b32.xlu0 %v6503, 4
      %v6527 = vpop.permute.xlu0 %6526
      %6528 = vrot.lane.b32.xlu0 %v6504, 4
      %v6529 = vpop.permute.xlu0 %6528
      %6530 = vrot.lane.b32.xlu0 %v6505, 4
      %v6531 = vpop.permute.xlu0 %6530
      %6532 = vrot.lane.b32.xlu0 %v6506, 4
      %v6533 = vpop.permute.xlu0 %6532
      %6534 = vrot.lane.b32.xlu0 %v6507, 4
      %v6535 = vpop.permute.xlu0 %6534
      %6536 = vrot.lane.b32.xlu0 %v6508, 4
      %v6537 = vpop.permute.xlu0 %6536
      %6538 = vrot.lane.b32.xlu0 %v6509, 4
      %v6539 = vpop.permute.xlu0 %6538
      %6540 = vrot.lane.b32.xlu0 %v6510, 4
      %v6541 = vpop.permute.xlu0 %6540
      %6542 = vrot.lane.b32.xlu0 %v6511, 4
      %v6543 = vpop.permute.xlu0 %6542
      %v6544 = vunpack.c.l.b16 %v5075
      %v6545 = vunpack.c.l.b16 %v5078
      %v6546 = vunpack.c.l.b16 %v5082
      %v6547 = vunpack.c.l.b16 %v5085
      %v6548 = vunpack.c.l.b16 %v5089
      %v6549 = vunpack.c.l.b16 %v5092
      %v6550 = vunpack.c.l.b16 %v5096
      %v6551 = vunpack.c.l.b16 %v5099
      %v6552 = vunpack.c.l.b16 %v5103
      %v6553 = vunpack.c.l.b16 %v5106
      %v6554 = vunpack.c.l.b16 %v5110
      %v6555 = vunpack.c.l.b16 %v5113
      %v6556 = vunpack.c.l.b16 %v5117
      %v6557 = vunpack.c.l.b16 %v5120
      %v6558 = vunpack.c.l.b16 %v5124
      %v6559 = vunpack.c.l.b16 %v5127
      %v6560 = vunpack.c.l.b16 %v5131
      %v6561 = vunpack.c.l.b16 %v5134
      %v6562 = vunpack.c.l.b16 %v5138
      %v6563 = vunpack.c.l.b16 %v5141
      %v6564 = vunpack.c.l.b16 %v5145
      %v6565 = vunpack.c.l.b16 %v5148
      %v6566 = vunpack.c.l.b16 %v5152
      %v6567 = vunpack.c.l.b16 %v5155
      %v6568 = vunpack.c.l.b16 %v5159
      %v6569 = vunpack.c.l.b16 %v5162
      %v6570 = vunpack.c.l.b16 %v5166
      %v6571 = vunpack.c.l.b16 %v5169
      %v6572 = vunpack.c.l.b16 %v5173
      %v6573 = vunpack.c.l.b16 %v5176
      %v6574 = vunpack.c.l.b16 %v5180
      %v6575 = vunpack.c.l.b16 %v5183
      %v6576 = vpack.c.b16 %v6545, %v6544
      %v6577 = vpack.c.b16 %v6547, %v6546
      %v6578 = vpack.c.b16 %v6549, %v6548
      %v6579 = vpack.c.b16 %v6551, %v6550
      %v6580 = vpack.c.b16 %v6553, %v6552
      %v6581 = vpack.c.b16 %v6555, %v6554
      %v6582 = vpack.c.b16 %v6557, %v6556
      %v6583 = vpack.c.b16 %v6559, %v6558
      %v6584 = vpack.c.b16 %v6561, %v6560
      %v6585 = vpack.c.b16 %v6563, %v6562
      %v6586 = vpack.c.b16 %v6565, %v6564
      %v6587 = vpack.c.b16 %v6567, %v6566
      %v6588 = vpack.c.b16 %v6569, %v6568
      %v6589 = vpack.c.b16 %v6571, %v6570
      %v6590 = vpack.c.b16 %v6573, %v6572
      %v6591 = vpack.c.b16 %v6575, %v6574
      %6592 = vrot.lane.b32.xlu0 %v6576, 8
      %v6593 = vpop.permute.xlu0 %6592
      %6594 = vrot.lane.b32.xlu0 %v6577, 8
      %v6595 = vpop.permute.xlu0 %6594
      %6596 = vrot.lane.b32.xlu0 %v6578, 8
      %v6597 = vpop.permute.xlu0 %6596
      %6598 = vrot.lane.b32.xlu0 %v6579, 8
      %v6599 = vpop.permute.xlu0 %6598
      %6600 = vrot.lane.b32.xlu0 %v6580, 8
      %v6601 = vpop.permute.xlu0 %6600
      %6602 = vrot.lane.b32.xlu0 %v6581, 8
      %v6603 = vpop.permute.xlu0 %6602
      %6604 = vrot.lane.b32.xlu0 %v6582, 8
      %v6605 = vpop.permute.xlu0 %6604
      %6606 = vrot.lane.b32.xlu0 %v6583, 8
      %v6607 = vpop.permute.xlu0 %6606
      %6608 = vrot.lane.b32.xlu0 %v6584, 8
      %v6609 = vpop.permute.xlu0 %6608
      %6610 = vrot.lane.b32.xlu0 %v6585, 8
      %v6611 = vpop.permute.xlu0 %6610
      %6612 = vrot.lane.b32.xlu0 %v6586, 8
      %v6613 = vpop.permute.xlu0 %6612
      %6614 = vrot.lane.b32.xlu0 %v6587, 8
      %v6615 = vpop.permute.xlu0 %6614
      %6616 = vrot.lane.b32.xlu0 %v6588, 8
      %v6617 = vpop.permute.xlu0 %6616
      %6618 = vrot.lane.b32.xlu0 %v6589, 8
      %v6619 = vpop.permute.xlu0 %6618
      %6620 = vrot.lane.b32.xlu0 %v6590, 8
      %v6621 = vpop.permute.xlu0 %6620
      %6622 = vrot.lane.b32.xlu0 %v6591, 8
      %v6623 = vpop.permute.xlu0 %6622
      %v6640 = vunpack.c.l.b16 %v5184
      %v6641 = vunpack.c.l.b16 %v5185
      %v6642 = vunpack.c.l.b16 %v5186
      %v6643 = vunpack.c.l.b16 %v5187
      %v6644 = vunpack.c.l.b16 %v5188
      %v6645 = vunpack.c.l.b16 %v5189
      %v6646 = vunpack.c.l.b16 %v5190
      %v6647 = vunpack.c.l.b16 %v5191
      %v6648 = vunpack.c.l.b16 %v5192
      %v6649 = vunpack.c.l.b16 %v5193
      %v6650 = vunpack.c.l.b16 %v5194
      %v6651 = vunpack.c.l.b16 %v5195
      %v6652 = vunpack.c.l.b16 %v5196
      %v6653 = vunpack.c.l.b16 %v5197
      %v6654 = vunpack.c.l.b16 %v5198
      %v6655 = vunpack.c.l.b16 %v5199
      %v6656 = vunpack.c.l.b16 %v5200
      %v6657 = vunpack.c.l.b16 %v5201
      %v6658 = vunpack.c.l.b16 %v5202
      %v6659 = vunpack.c.l.b16 %v5203
      %v6660 = vunpack.c.l.b16 %v5204
      %v6661 = vunpack.c.l.b16 %v5205
      %v6662 = vunpack.c.l.b16 %v5206
      %v6663 = vunpack.c.l.b16 %v5207
      %v6664 = vunpack.c.l.b16 %v5208
      %v6665 = vunpack.c.l.b16 %v5209
      %v6666 = vunpack.c.l.b16 %v5210
      %v6667 = vunpack.c.l.b16 %v5211
      %v6668 = vunpack.c.l.b16 %v5212
      %v6669 = vunpack.c.l.b16 %v5213
      %v6670 = vunpack.c.l.b16 %v5214
      %v6671 = vunpack.c.l.b16 %v5215
      %v6672 = vpack.c.b16 %v6641, %v6640
      %v6673 = vpack.c.b16 %v6643, %v6642
      %v6674 = vpack.c.b16 %v6645, %v6644
      %v6675 = vpack.c.b16 %v6647, %v6646
      %v6676 = vpack.c.b16 %v6649, %v6648
      %v6677 = vpack.c.b16 %v6651, %v6650
      %v6678 = vpack.c.b16 %v6653, %v6652
      %v6679 = vpack.c.b16 %v6655, %v6654
      %v6680 = vpack.c.b16 %v6657, %v6656
      %v6681 = vpack.c.b16 %v6659, %v6658
      %v6682 = vpack.c.b16 %v6661, %v6660
      %v6683 = vpack.c.b16 %v6663, %v6662
      %v6684 = vpack.c.b16 %v6665, %v6664
      %v6685 = vpack.c.b16 %v6667, %v6666
      %v6686 = vpack.c.b16 %v6669, %v6668
      %v6687 = vpack.c.b16 %v6671, %v6670
      %6688 = vrot.lane.b32.xlu0 %v6672, 12
      %v6689 = vpop.permute.xlu0 %6688
      %6690 = vrot.lane.b32.xlu0 %v6673, 12
      %v6691 = vpop.permute.xlu0 %6690
      %6692 = vrot.lane.b32.xlu0 %v6674, 12
      %v6693 = vpop.permute.xlu0 %6692
      %6694 = vrot.lane.b32.xlu0 %v6675, 12
      %v6695 = vpop.permute.xlu0 %6694
      %6696 = vrot.lane.b32.xlu0 %v6676, 12
      %v6697 = vpop.permute.xlu0 %6696
      %6698 = vrot.lane.b32.xlu0 %v6677, 12
      %v6699 = vpop.permute.xlu0 %6698
      %6700 = vrot.lane.b32.xlu0 %v6678, 12
      %v6701 = vpop.permute.xlu0 %6700
      %6702 = vrot.lane.b32.xlu0 %v6679, 12
      %v6703 = vpop.permute.xlu0 %6702
      %6704 = vrot.lane.b32.xlu0 %v6680, 12
      %v6705 = vpop.permute.xlu0 %6704
      %6706 = vrot.lane.b32.xlu0 %v6681, 12
      %v6707 = vpop.permute.xlu0 %6706
      %6708 = vrot.lane.b32.xlu0 %v6682, 12
      %v6709 = vpop.permute.xlu0 %6708
      %6710 = vrot.lane.b32.xlu0 %v6683, 12
      %v6711 = vpop.permute.xlu0 %6710
      %6712 = vrot.lane.b32.xlu0 %v6684, 12
      %v6713 = vpop.permute.xlu0 %6712
      %6714 = vrot.lane.b32.xlu0 %v6685, 12
      %v6715 = vpop.permute.xlu0 %6714
      %6716 = vrot.lane.b32.xlu0 %v6686, 12
      %v6717 = vpop.permute.xlu0 %6716
      %6718 = vrot.lane.b32.xlu0 %v6687, 12
      %v6719 = vpop.permute.xlu0 %6718
      %v6720 = vunpack.c.l.b16 %v5245
      %v6721 = vunpack.c.l.b16 %v5255
      %v6722 = vunpack.c.l.b16 %v5269
      %v6723 = vunpack.c.l.b16 %v5279
      %v6724 = vunpack.c.l.b16 %v5293
      %v6725 = vunpack.c.l.b16 %v5303
      %v6726 = vunpack.c.l.b16 %v5317
      %v6727 = vunpack.c.l.b16 %v5327
      %v6728 = vunpack.c.l.b16 %v5341
      %v6729 = vunpack.c.l.b16 %v5351
      %v6730 = vunpack.c.l.b16 %v5365
      %v6731 = vunpack.c.l.b16 %v5375
      %v6732 = vunpack.c.l.b16 %v5389
      %v6733 = vunpack.c.l.b16 %v5399
      %v6734 = vunpack.c.l.b16 %v5413
      %v6735 = vunpack.c.l.b16 %v5423
      %v6736 = vunpack.c.l.b16 %v5437
      %v6737 = vunpack.c.l.b16 %v5447
      %v6738 = vunpack.c.l.b16 %v5461
      %v6739 = vunpack.c.l.b16 %v5471
      %v6740 = vunpack.c.l.b16 %v5485
      %v6741 = vunpack.c.l.b16 %v5495
      %v6742 = vunpack.c.l.b16 %v5509
      %v6743 = vunpack.c.l.b16 %v5519
      %v6744 = vunpack.c.l.b16 %v5533
      %v6745 = vunpack.c.l.b16 %v5543
      %v6746 = vunpack.c.l.b16 %v5557
      %v6747 = vunpack.c.l.b16 %v5567
      %v6748 = vunpack.c.l.b16 %v5581
      %v6749 = vunpack.c.l.b16 %v5591
      %v6750 = vunpack.c.l.b16 %v5605
      %v6751 = vunpack.c.l.b16 %v5615
      %v6752 = vpack.c.b16 %v6721, %v6720
      %v6753 = vpack.c.b16 %v6723, %v6722
      %v6754 = vpack.c.b16 %v6725, %v6724
      %v6755 = vpack.c.b16 %v6727, %v6726
      %v6756 = vpack.c.b16 %v6729, %v6728
      %v6757 = vpack.c.b16 %v6731, %v6730
      %v6758 = vpack.c.b16 %v6733, %v6732
      %v6759 = vpack.c.b16 %v6735, %v6734
      %v6760 = vpack.c.b16 %v6737, %v6736
      %v6761 = vpack.c.b16 %v6739, %v6738
      %v6762 = vpack.c.b16 %v6741, %v6740
      %v6763 = vpack.c.b16 %v6743, %v6742
      %v6764 = vpack.c.b16 %v6745, %v6744
      %v6765 = vpack.c.b16 %v6747, %v6746
      %v6766 = vpack.c.b16 %v6749, %v6748
      %v6767 = vpack.c.b16 %v6751, %v6750
      %6768 = vrot.lane.b32.xlu0 %v6752, 16
      %v6769 = vpop.permute.xlu0 %6768
      %6770 = vrot.lane.b32.xlu0 %v6753, 16
      %v6771 = vpop.permute.xlu0 %6770
      %6772 = vrot.lane.b32.xlu0 %v6754, 16
      %v6773 = vpop.permute.xlu0 %6772
      %6774 = vrot.lane.b32.xlu0 %v6755, 16
      %v6775 = vpop.permute.xlu0 %6774
      %6776 = vrot.lane.b32.xlu0 %v6756, 16
      %v6777 = vpop.permute.xlu0 %6776
      %6778 = vrot.lane.b32.xlu0 %v6757, 16
      %v6779 = vpop.permute.xlu0 %6778
      %6780 = vrot.lane.b32.xlu0 %v6758, 16
      %v6781 = vpop.permute.xlu0 %6780
      %6782 = vrot.lane.b32.xlu0 %v6759, 16
      %v6783 = vpop.permute.xlu0 %6782
      %6784 = vrot.lane.b32.xlu0 %v6760, 16
      %v6785 = vpop.permute.xlu0 %6784
      %6786 = vrot.lane.b32.xlu0 %v6761, 16
      %v6787 = vpop.permute.xlu0 %6786
      %6788 = vrot.lane.b32.xlu0 %v6762, 16
      %v6789 = vpop.permute.xlu0 %6788
      %6790 = vrot.lane.b32.xlu0 %v6763, 16
      %v6791 = vpop.permute.xlu0 %6790
      %6792 = vrot.lane.b32.xlu0 %v6764, 16
      %v6793 = vpop.permute.xlu0 %6792
      %6794 = vrot.lane.b32.xlu0 %v6765, 16
      %v6795 = vpop.permute.xlu0 %6794
      %6796 = vrot.lane.b32.xlu0 %v6766, 16
      %v6797 = vpop.permute.xlu0 %6796
      %6798 = vrot.lane.b32.xlu0 %v6767, 16
      %v6799 = vpop.permute.xlu0 %6798
      %v6800 = vunpack.c.l.b16 %v5683
      %v6801 = vunpack.c.l.b16 %v5686
      %v6802 = vunpack.c.l.b16 %v5690
      %v6803 = vunpack.c.l.b16 %v5693
      %v6804 = vunpack.c.l.b16 %v5697
      %v6805 = vunpack.c.l.b16 %v5700
      %v6806 = vunpack.c.l.b16 %v5704
      %v6807 = vunpack.c.l.b16 %v5707
      %v6808 = vunpack.c.l.b16 %v5711
      %v6809 = vunpack.c.l.b16 %v5714
      %v6810 = vunpack.c.l.b16 %v5718
      %v6811 = vunpack.c.l.b16 %v5721
      %v6812 = vunpack.c.l.b16 %v5725
      %v6813 = vunpack.c.l.b16 %v5728
      %v6814 = vunpack.c.l.b16 %v5732
      %v6815 = vunpack.c.l.b16 %v5735
      %v6816 = vunpack.c.l.b16 %v5739
      %v6817 = vunpack.c.l.b16 %v5742
      %v6818 = vunpack.c.l.b16 %v5746
      %v6819 = vunpack.c.l.b16 %v5749
      %v6820 = vunpack.c.l.b16 %v5753
      %v6821 = vunpack.c.l.b16 %v5756
      %v6822 = vunpack.c.l.b16 %v5760
      %v6823 = vunpack.c.l.b16 %v5763
      %v6824 = vunpack.c.l.b16 %v5767
      %v6825 = vunpack.c.l.b16 %v5770
      %v6826 = vunpack.c.l.b16 %v5774
      %v6827 = vunpack.c.l.b16 %v5777
      %v6828 = vunpack.c.l.b16 %v5781
      %v6829 = vunpack.c.l.b16 %v5784
      %v6830 = vunpack.c.l.b16 %v5788
      %v6831 = vunpack.c.l.b16 %v5791
      %v6832 = vpack.c.b16 %v6801, %v6800
      %v6833 = vpack.c.b16 %v6803, %v6802
      %v6834 = vpack.c.b16 %v6805, %v6804
      %v6835 = vpack.c.b16 %v6807, %v6806
      %v6836 = vpack.c.b16 %v6809, %v6808
      %v6837 = vpack.c.b16 %v6811, %v6810
      %v6838 = vpack.c.b16 %v6813, %v6812
      %v6839 = vpack.c.b16 %v6815, %v6814
      %v6840 = vpack.c.b16 %v6817, %v6816
      %v6841 = vpack.c.b16 %v6819, %v6818
      %v6842 = vpack.c.b16 %v6821, %v6820
      %v6843 = vpack.c.b16 %v6823, %v6822
      %v6844 = vpack.c.b16 %v6825, %v6824
      %v6845 = vpack.c.b16 %v6827, %v6826
      %v6846 = vpack.c.b16 %v6829, %v6828
      %v6847 = vpack.c.b16 %v6831, %v6830
      %6848 = vrot.lane.b32.xlu0 %v6832, 20
      %v6849 = vpop.permute.xlu0 %6848
      %6850 = vrot.lane.b32.xlu0 %v6833, 20
      %v6851 = vpop.permute.xlu0 %6850
      %6852 = vrot.lane.b32.xlu0 %v6834, 20
      %v6853 = vpop.permute.xlu0 %6852
      %6854 = vrot.lane.b32.xlu0 %v6835, 20
      %v6855 = vpop.permute.xlu0 %6854
      %6856 = vrot.lane.b32.xlu0 %v6836, 20
      %v6857 = vpop.permute.xlu0 %6856
      %6858 = vrot.lane.b32.xlu0 %v6837, 20
      %v6859 = vpop.permute.xlu0 %6858
      %6860 = vrot.lane.b32.xlu0 %v6838, 20
      %v6861 = vpop.permute.xlu0 %6860
      %6862 = vrot.lane.b32.xlu0 %v6839, 20
      %v6863 = vpop.permute.xlu0 %6862
      %6864 = vrot.lane.b32.xlu0 %v6840, 20
      %v6865 = vpop.permute.xlu0 %6864
      %6866 = vrot.lane.b32.xlu0 %v6841, 20
      %v6867 = vpop.permute.xlu0 %6866
      %6868 = vrot.lane.b32.xlu0 %v6842, 20
      %v6869 = vpop.permute.xlu0 %6868
      %6870 = vrot.lane.b32.xlu0 %v6843, 20
      %v6871 = vpop.permute.xlu0 %6870
      %6872 = vrot.lane.b32.xlu0 %v6844, 20
      %v6873 = vpop.permute.xlu0 %6872
      %6874 = vrot.lane.b32.xlu0 %v6845, 20
      %v6875 = vpop.permute.xlu0 %6874
      %6876 = vrot.lane.b32.xlu0 %v6846, 20
      %v6877 = vpop.permute.xlu0 %6876
      %6878 = vrot.lane.b32.xlu0 %v6847, 20
      %v6879 = vpop.permute.xlu0 %6878
      %v6896 = vunpack.c.l.b16 %v5792
      %v6897 = vunpack.c.l.b16 %v5793
      %v6898 = vunpack.c.l.b16 %v5794
      %v6899 = vunpack.c.l.b16 %v5795
      %v6900 = vunpack.c.l.b16 %v5796
      %v6901 = vunpack.c.l.b16 %v5797
      %v6902 = vunpack.c.l.b16 %v5798
      %v6903 = vunpack.c.l.b16 %v5799
      %v6904 = vunpack.c.l.b16 %v5800
      %v6905 = vunpack.c.l.b16 %v5801
      %v6906 = vunpack.c.l.b16 %v5802
      %v6907 = vunpack.c.l.b16 %v5803
      %v6908 = vunpack.c.l.b16 %v5804
      %v6909 = vunpack.c.l.b16 %v5805
      %v6910 = vunpack.c.l.b16 %v5806
      %v6911 = vunpack.c.l.b16 %v5807
      %v6912 = vunpack.c.l.b16 %v5808
      %v6913 = vunpack.c.l.b16 %v5809
      %v6914 = vunpack.c.l.b16 %v5810
      %v6915 = vunpack.c.l.b16 %v5811
      %v6916 = vunpack.c.l.b16 %v5812
      %v6917 = vunpack.c.l.b16 %v5813
      %v6918 = vunpack.c.l.b16 %v5814
      %v6919 = vunpack.c.l.b16 %v5815
      %v6920 = vunpack.c.l.b16 %v5816
      %v6921 = vunpack.c.l.b16 %v5817
      %v6922 = vunpack.c.l.b16 %v5818
      %v6923 = vunpack.c.l.b16 %v5819
      %v6924 = vunpack.c.l.b16 %v5820
      %v6925 = vunpack.c.l.b16 %v5821
      %v6926 = vunpack.c.l.b16 %v5822
      %v6927 = vunpack.c.l.b16 %v5823
      %v6928 = vpack.c.b16 %v6897, %v6896
      %v6929 = vpack.c.b16 %v6899, %v6898
      %v6930 = vpack.c.b16 %v6901, %v6900
      %v6931 = vpack.c.b16 %v6903, %v6902
      %v6932 = vpack.c.b16 %v6905, %v6904
      %v6933 = vpack.c.b16 %v6907, %v6906
      %v6934 = vpack.c.b16 %v6909, %v6908
      %v6935 = vpack.c.b16 %v6911, %v6910
      %v6936 = vpack.c.b16 %v6913, %v6912
      %v6937 = vpack.c.b16 %v6915, %v6914
      %v6938 = vpack.c.b16 %v6917, %v6916
      %v6939 = vpack.c.b16 %v6919, %v6918
      %v6940 = vpack.c.b16 %v6921, %v6920
      %v6941 = vpack.c.b16 %v6923, %v6922
      %v6942 = vpack.c.b16 %v6925, %v6924
      %v6943 = vpack.c.b16 %v6927, %v6926
      %6944 = vrot.lane.b32.xlu0 %v6928, 24
      %v6945 = vpop.permute.xlu0 %6944
      %6946 = vrot.lane.b32.xlu0 %v6929, 24
      %v6947 = vpop.permute.xlu0 %6946
      %6948 = vrot.lane.b32.xlu0 %v6930, 24
      %v6949 = vpop.permute.xlu0 %6948
      %6950 = vrot.lane.b32.xlu0 %v6931, 24
      %v6951 = vpop.permute.xlu0 %6950
      %6952 = vrot.lane.b32.xlu0 %v6932, 24
      %v6953 = vpop.permute.xlu0 %6952
      %6954 = vrot.lane.b32.xlu0 %v6933, 24
      %v6955 = vpop.permute.xlu0 %6954
      %6956 = vrot.lane.b32.xlu0 %v6934, 24
      %v6957 = vpop.permute.xlu0 %6956
      %6958 = vrot.lane.b32.xlu0 %v6935, 24
      %v6959 = vpop.permute.xlu0 %6958
      %6960 = vrot.lane.b32.xlu0 %v6936, 24
      %v6961 = vpop.permute.xlu0 %6960
      %6962 = vrot.lane.b32.xlu0 %v6937, 24
      %v6963 = vpop.permute.xlu0 %6962
      %6964 = vrot.lane.b32.xlu0 %v6938, 24
      %v6965 = vpop.permute.xlu0 %6964
      %6966 = vrot.lane.b32.xlu0 %v6939, 24
      %v6967 = vpop.permute.xlu0 %6966
      %6968 = vrot.lane.b32.xlu0 %v6940, 24
      %v6969 = vpop.permute.xlu0 %6968
      %6970 = vrot.lane.b32.xlu0 %v6941, 24
      %v6971 = vpop.permute.xlu0 %6970
      %6972 = vrot.lane.b32.xlu0 %v6942, 24
      %v6973 = vpop.permute.xlu0 %6972
      %6974 = vrot.lane.b32.xlu0 %v6943, 24
      %v6975 = vpop.permute.xlu0 %6974
      %v6976 = vunpack.c.l.b16 %v5853
      %v6977 = vunpack.c.l.b16 %v5863
      %v6978 = vunpack.c.l.b16 %v5877
      %v6979 = vunpack.c.l.b16 %v5887
      %v6980 = vunpack.c.l.b16 %v5901
      %v6981 = vunpack.c.l.b16 %v5911
      %v6982 = vunpack.c.l.b16 %v5925
      %v6983 = vunpack.c.l.b16 %v5935
      %v6984 = vunpack.c.l.b16 %v5949
      %v6985 = vunpack.c.l.b16 %v5959
      %v6986 = vunpack.c.l.b16 %v5973
      %v6987 = vunpack.c.l.b16 %v5983
      %v6988 = vunpack.c.l.b16 %v5997
      %v6989 = vunpack.c.l.b16 %v6007
      %v6990 = vunpack.c.l.b16 %v6021
      %v6991 = vunpack.c.l.b16 %v6031
      %v6992 = vunpack.c.l.b16 %v6045
      %v6993 = vunpack.c.l.b16 %v6055
      %v6994 = vunpack.c.l.b16 %v6069
      %v6995 = vunpack.c.l.b16 %v6079
      %v6996 = vunpack.c.l.b16 %v6093
      %v6997 = vunpack.c.l.b16 %v6103
      %v6998 = vunpack.c.l.b16 %v6117
      %v6999 = vunpack.c.l.b16 %v6127
      %v7000 = vunpack.c.l.b16 %v6141
      %v7001 = vunpack.c.l.b16 %v6151
      %v7002 = vunpack.c.l.b16 %v6165
      %v7003 = vunpack.c.l.b16 %v6175
      %v7004 = vunpack.c.l.b16 %v6189
      %v7005 = vunpack.c.l.b16 %v6199
      %v7006 = vunpack.c.l.b16 %v6213
      %v7007 = vunpack.c.l.b16 %v6223
      %v7008 = vpack.c.b16 %v6977, %v6976
      %v7009 = vpack.c.b16 %v6979, %v6978
      %v7010 = vpack.c.b16 %v6981, %v6980
      %v7011 = vpack.c.b16 %v6983, %v6982
      %v7012 = vpack.c.b16 %v6985, %v6984
      %v7013 = vpack.c.b16 %v6987, %v6986
      %v7014 = vpack.c.b16 %v6989, %v6988
      %v7015 = vpack.c.b16 %v6991, %v6990
      %v7016 = vpack.c.b16 %v6993, %v6992
      %v7017 = vpack.c.b16 %v6995, %v6994
      %v7018 = vpack.c.b16 %v6997, %v6996
      %v7019 = vpack.c.b16 %v6999, %v6998
      %v7020 = vpack.c.b16 %v7001, %v7000
      %v7021 = vpack.c.b16 %v7003, %v7002
      %v7022 = vpack.c.b16 %v7005, %v7004
      %v7023 = vpack.c.b16 %v7007, %v7006
      %7024 = vrot.lane.b32.xlu0 %v7008, 28
      %v7025 = vpop.permute.xlu0 %7024
      %7026 = vrot.lane.b32.xlu0 %v7009, 28
      %v7027 = vpop.permute.xlu0 %7026
      %7028 = vrot.lane.b32.xlu0 %v7010, 28
      %v7029 = vpop.permute.xlu0 %7028
      %7030 = vrot.lane.b32.xlu0 %v7011, 28
      %v7031 = vpop.permute.xlu0 %7030
      %7032 = vrot.lane.b32.xlu0 %v7012, 28
      %v7033 = vpop.permute.xlu0 %7032
      %7034 = vrot.lane.b32.xlu0 %v7013, 28
      %v7035 = vpop.permute.xlu0 %7034
      %7036 = vrot.lane.b32.xlu0 %v7014, 28
      %v7037 = vpop.permute.xlu0 %7036
      %7038 = vrot.lane.b32.xlu0 %v7015, 28
      %v7039 = vpop.permute.xlu0 %7038
      %7040 = vrot.lane.b32.xlu0 %v7016, 28
      %v7041 = vpop.permute.xlu0 %7040
      %7042 = vrot.lane.b32.xlu0 %v7017, 28
      %v7043 = vpop.permute.xlu0 %7042
      %7044 = vrot.lane.b32.xlu0 %v7018, 28
      %v7045 = vpop.permute.xlu0 %7044
      %7046 = vrot.lane.b32.xlu0 %v7019, 28
      %v7047 = vpop.permute.xlu0 %7046
      %7048 = vrot.lane.b32.xlu0 %v7020, 28
      %v7049 = vpop.permute.xlu0 %7048
      %7050 = vrot.lane.b32.xlu0 %v7021, 28
      %v7051 = vpop.permute.xlu0 %7050
      %7052 = vrot.lane.b32.xlu0 %v7022, 28
      %v7053 = vpop.permute.xlu0 %7052
      %7054 = vrot.lane.b32.xlu0 %v7023, 28
      %v7055 = vpop.permute.xlu0 %7054
      %v7056 = vunpack.c.l.b16 %v6291
      %v7057 = vunpack.c.l.b16 %v6294
      %v7058 = vunpack.c.l.b16 %v6298
      %v7059 = vunpack.c.l.b16 %v6301
      %v7060 = vunpack.c.l.b16 %v6305
      %v7061 = vunpack.c.l.b16 %v6308
      %v7062 = vunpack.c.l.b16 %v6312
      %v7063 = vunpack.c.l.b16 %v6315
      %v7064 = vunpack.c.l.b16 %v6319
      %v7065 = vunpack.c.l.b16 %v6322
      %v7066 = vunpack.c.l.b16 %v6326
      %v7067 = vunpack.c.l.b16 %v6329
      %v7068 = vunpack.c.l.b16 %v6333
      %v7069 = vunpack.c.l.b16 %v6336
      %v7070 = vunpack.c.l.b16 %v6340
      %v7071 = vunpack.c.l.b16 %v6343
      %v7072 = vunpack.c.l.b16 %v6347
      %v7073 = vunpack.c.l.b16 %v6350
      %v7074 = vunpack.c.l.b16 %v6354
      %v7075 = vunpack.c.l.b16 %v6357
      %v7076 = vunpack.c.l.b16 %v6361
      %v7077 = vunpack.c.l.b16 %v6364
      %v7078 = vunpack.c.l.b16 %v6368
      %v7079 = vunpack.c.l.b16 %v6371
      %v7080 = vunpack.c.l.b16 %v6375
      %v7081 = vunpack.c.l.b16 %v6378
      %v7082 = vunpack.c.l.b16 %v6382
      %v7083 = vunpack.c.l.b16 %v6385
      %v7084 = vunpack.c.l.b16 %v6389
      %v7085 = vunpack.c.l.b16 %v6392
      %v7086 = vunpack.c.l.b16 %v6396
      %v7087 = vunpack.c.l.b16 %v6399
      %v7088 = vpack.c.b16 %v7057, %v7056
      %v7089 = vpack.c.b16 %v7059, %v7058
      %v7090 = vpack.c.b16 %v7061, %v7060
      %v7091 = vpack.c.b16 %v7063, %v7062
      %v7092 = vpack.c.b16 %v7065, %v7064
      %v7093 = vpack.c.b16 %v7067, %v7066
      %v7094 = vpack.c.b16 %v7069, %v7068
      %v7095 = vpack.c.b16 %v7071, %v7070
      %v7096 = vpack.c.b16 %v7073, %v7072
      %v7097 = vpack.c.b16 %v7075, %v7074
      %v7098 = vpack.c.b16 %v7077, %v7076
      %v7099 = vpack.c.b16 %v7079, %v7078
      %v7100 = vpack.c.b16 %v7081, %v7080
      %v7101 = vpack.c.b16 %v7083, %v7082
      %v7102 = vpack.c.b16 %v7085, %v7084
      %v7103 = vpack.c.b16 %v7087, %v7086
      %7104 = vrot.lane.b32.xlu0 %v7088, 32
      %v7105 = vpop.permute.xlu0 %7104
      %7106 = vrot.lane.b32.xlu0 %v7089, 32
      %v7107 = vpop.permute.xlu0 %7106
      %7108 = vrot.lane.b32.xlu0 %v7090, 32
      %v7109 = vpop.permute.xlu0 %7108
      %7110 = vrot.lane.b32.xlu0 %v7091, 32
      %v7111 = vpop.permute.xlu0 %7110
      %7112 = vrot.lane.b32.xlu0 %v7092, 32
      %v7113 = vpop.permute.xlu0 %7112
      %7114 = vrot.lane.b32.xlu0 %v7093, 32
      %v7115 = vpop.permute.xlu0 %7114
      %7116 = vrot.lane.b32.xlu0 %v7094, 32
      %v7117 = vpop.permute.xlu0 %7116
      %7118 = vrot.lane.b32.xlu0 %v7095, 32
      %v7119 = vpop.permute.xlu0 %7118
      %7120 = vrot.lane.b32.xlu0 %v7096, 32
      %v7121 = vpop.permute.xlu0 %7120
      %7122 = vrot.lane.b32.xlu0 %v7097, 32
      %v7123 = vpop.permute.xlu0 %7122
      %7124 = vrot.lane.b32.xlu0 %v7098, 32
      %v7125 = vpop.permute.xlu0 %7124
      %7126 = vrot.lane.b32.xlu0 %v7099, 32
      %v7127 = vpop.permute.xlu0 %7126
      %7128 = vrot.lane.b32.xlu0 %v7100, 32
      %v7129 = vpop.permute.xlu0 %7128
      %7130 = vrot.lane.b32.xlu0 %v7101, 32
      %v7131 = vpop.permute.xlu0 %7130
      %7132 = vrot.lane.b32.xlu0 %v7102, 32
      %v7133 = vpop.permute.xlu0 %7132
      %7134 = vrot.lane.b32.xlu0 %v7103, 32
      %v7135 = vpop.permute.xlu0 %7134
      %v7138 = vsel %vm3480, %v6448, %v6513
      %v7141 = vsel %vm3480, %v6449, %v6515
      %v7144 = vsel %vm3480, %v6450, %v6517
      %v7147 = vsel %vm3480, %v6451, %v6519
      %v7150 = vsel %vm3480, %v6452, %v6521
      %v7153 = vsel %vm3480, %v6453, %v6523
      %v7156 = vsel %vm3480, %v6454, %v6525
      %v7159 = vsel %vm3480, %v6455, %v6527
      %v7162 = vsel %vm3480, %v6456, %v6529
      %v7165 = vsel %vm3480, %v6457, %v6531
      %v7168 = vsel %vm3480, %v6458, %v6533
      %v7171 = vsel %vm3480, %v6459, %v6535
      %v7174 = vsel %vm3480, %v6460, %v6537
      %v7177 = vsel %vm3480, %v6461, %v6539
      %v7180 = vsel %vm3480, %v6462, %v6541
      %v7183 = vsel %vm3480, %v6463, %v6543
      %v7185 = vsel %vm3529, %v7138, %v6593
      %v7187 = vsel %vm3529, %v7141, %v6595
      %v7189 = vsel %vm3529, %v7144, %v6597
      %v7191 = vsel %vm3529, %v7147, %v6599
      %v7193 = vsel %vm3529, %v7150, %v6601
      %v7195 = vsel %vm3529, %v7153, %v6603
      %v7197 = vsel %vm3529, %v7156, %v6605
      %v7199 = vsel %vm3529, %v7159, %v6607
      %v7201 = vsel %vm3529, %v7162, %v6609
      %v7203 = vsel %vm3529, %v7165, %v6611
      %v7205 = vsel %vm3529, %v7168, %v6613
      %v7207 = vsel %vm3529, %v7171, %v6615
      %v7209 = vsel %vm3529, %v7174, %v6617
      %v7211 = vsel %vm3529, %v7177, %v6619
      %v7213 = vsel %vm3529, %v7180, %v6621
      %v7215 = vsel %vm3529, %v7183, %v6623
      %v7217 = vsel %vm3562, %v7185, %v6689
      %v7219 = vsel %vm3562, %v7187, %v6691
      %v7221 = vsel %vm3562, %v7189, %v6693
      %v7223 = vsel %vm3562, %v7191, %v6695
      %v7225 = vsel %vm3562, %v7193, %v6697
      %v7227 = vsel %vm3562, %v7195, %v6699
      %v7229 = vsel %vm3562, %v7197, %v6701
      %v7231 = vsel %vm3562, %v7199, %v6703
      %v7233 = vsel %vm3562, %v7201, %v6705
      %v7235 = vsel %vm3562, %v7203, %v6707
      %v7237 = vsel %vm3562, %v7205, %v6709
      %v7239 = vsel %vm3562, %v7207, %v6711
      %v7241 = vsel %vm3562, %v7209, %v6713
      %v7243 = vsel %vm3562, %v7211, %v6715
      %v7245 = vsel %vm3562, %v7213, %v6717
      %v7247 = vsel %vm3562, %v7215, %v6719
      %v7249 = vsel %vm3595, %v7217, %v6769
      %v7251 = vsel %vm3595, %v7219, %v6771
      %v7253 = vsel %vm3595, %v7221, %v6773
      %v7255 = vsel %vm3595, %v7223, %v6775
      %v7257 = vsel %vm3595, %v7225, %v6777
      %v7259 = vsel %vm3595, %v7227, %v6779
      %v7261 = vsel %vm3595, %v7229, %v6781
      %v7263 = vsel %vm3595, %v7231, %v6783
      %v7265 = vsel %vm3595, %v7233, %v6785
      %v7267 = vsel %vm3595, %v7235, %v6787
      %v7269 = vsel %vm3595, %v7237, %v6789
      %v7271 = vsel %vm3595, %v7239, %v6791
      %v7273 = vsel %vm3595, %v7241, %v6793
      %v7275 = vsel %vm3595, %v7243, %v6795
      %v7277 = vsel %vm3595, %v7245, %v6797
      %v7279 = vsel %vm3595, %v7247, %v6799
      %v7281 = vsel %vm3628, %v7249, %v6849
      %v7283 = vsel %vm3628, %v7251, %v6851
      %v7285 = vsel %vm3628, %v7253, %v6853
      %v7287 = vsel %vm3628, %v7255, %v6855
      %v7289 = vsel %vm3628, %v7257, %v6857
      %v7291 = vsel %vm3628, %v7259, %v6859
      %v7293 = vsel %vm3628, %v7261, %v6861
      %v7295 = vsel %vm3628, %v7263, %v6863
      %v7297 = vsel %vm3628, %v7265, %v6865
      %v7299 = vsel %vm3628, %v7267, %v6867
      %v7301 = vsel %vm3628, %v7269, %v6869
      %v7303 = vsel %vm3628, %v7271, %v6871
      %v7305 = vsel %vm3628, %v7273, %v6873
      %v7307 = vsel %vm3628, %v7275, %v6875
      %v7309 = vsel %vm3628, %v7277, %v6877
      %v7311 = vsel %vm3628, %v7279, %v6879
      %v7313 = vsel %vm3661, %v7281, %v6945
      %v7315 = vsel %vm3661, %v7283, %v6947
      %v7317 = vsel %vm3661, %v7285, %v6949
      %v7319 = vsel %vm3661, %v7287, %v6951
      %v7321 = vsel %vm3661, %v7289, %v6953
      %v7323 = vsel %vm3661, %v7291, %v6955
      %v7325 = vsel %vm3661, %v7293, %v6957
      %v7327 = vsel %vm3661, %v7295, %v6959
      %v7329 = vsel %vm3661, %v7297, %v6961
      %v7331 = vsel %vm3661, %v7299, %v6963
      %v7333 = vsel %vm3661, %v7301, %v6965
      %v7335 = vsel %vm3661, %v7303, %v6967
      %v7337 = vsel %vm3661, %v7305, %v6969
      %v7339 = vsel %vm3661, %v7307, %v6971
      %v7341 = vsel %vm3661, %v7309, %v6973
      %v7343 = vsel %vm3661, %v7311, %v6975
      %v7345 = vsel %vm3694, %v7313, %v7025
      %v7347 = vsel %vm3694, %v7315, %v7027
      %v7349 = vsel %vm3694, %v7317, %v7029
      %v7351 = vsel %vm3694, %v7319, %v7031
      %v7353 = vsel %vm3694, %v7321, %v7033
      %v7355 = vsel %vm3694, %v7323, %v7035
      %v7357 = vsel %vm3694, %v7325, %v7037
      %v7359 = vsel %vm3694, %v7327, %v7039
      %v7361 = vsel %vm3694, %v7329, %v7041
      %v7363 = vsel %vm3694, %v7331, %v7043
      %v7365 = vsel %vm3694, %v7333, %v7045
      %v7367 = vsel %vm3694, %v7335, %v7047
      %v7369 = vsel %vm3694, %v7337, %v7049
      %v7371 = vsel %vm3694, %v7339, %v7051
      %v7373 = vsel %vm3694, %v7341, %v7053
      %v7375 = vsel %vm3694, %v7343, %v7055
      %v7377 = vsel %vm3727, %v7345, %v7105
      %v7379 = vsel %vm3727, %v7347, %v7107
      %v7381 = vsel %vm3727, %v7349, %v7109
      %v7383 = vsel %vm3727, %v7351, %v7111
      %v7385 = vsel %vm3727, %v7353, %v7113
      %v7387 = vsel %vm3727, %v7355, %v7115
      %v7389 = vsel %vm3727, %v7357, %v7117
      %v7391 = vsel %vm3727, %v7359, %v7119
      %v7393 = vsel %vm3727, %v7361, %v7121
      %v7395 = vsel %vm3727, %v7363, %v7123
      %v7397 = vsel %vm3727, %v7365, %v7125
      %v7399 = vsel %vm3727, %v7367, %v7127
      %v7401 = vsel %vm3727, %v7369, %v7129
      %v7403 = vsel %vm3727, %v7371, %v7131
      %v7405 = vsel %vm3727, %v7373, %v7133
      %v7407 = vsel %vm3727, %v7375, %v7135
      %v7408 = vld [vmem:[%s3] sm:$0xf]
      %v7409 = vld [vmem:[%s3 + $0x4] sm:$0xf]
      %v7410 = vld [vmem:[%s3 + $0x8] sm:$0xf]
      %v7411 = vld [vmem:[%s3 + $0xc] sm:$0xf]
      %v7412 = vld [vmem:[%s3 + $0x10] sm:$0x3]
      %v7413 = vld [vmem:[%s4] sm:$0x1]
      %v7415 = vlaneseq
      %v7416 = vshrl.u32 %v7415, 7
      %v7417 = vsub.s32 0, %v7416
      %v7418 = vrot.slane %v7413, %v7417
      %v7425 = vunpack.c.l.b16 %v7408
      %v7426 = vunpack.c.l.b16 %v7409
      %v7427 = vunpack.c.l.b16 %v7410
      %v7428 = vunpack.c.l.b16 %v7411
      %v7429 = vunpack.c.l.b16 %v7412
      %v7430 = vpack.c.b16 %v7426, %v7425
      %v7431 = vpack.c.b16 %v7428, %v7427
      %v7432 = vpack.c.b16 %v7429, %v7429
      %v7435 = vsel %vm3787, %v7377, 0
      %v7437 = vsel %vm3787, %v7379, 0
      %v7439 = vsel %vm3787, %v7381, 0
      %v7441 = vsel %vm3787, %v7383, 0
      %v7443 = vsel %vm3787, %v7385, 0
      %v7445 = vsel %vm3787, %v7387, 0
      %v7447 = vsel %vm3787, %v7389, 0
      %v7449 = vsel %vm3787, %v7391, 0
      %v7451 = vsel %vm3787, %v7393, 0
      %v7453 = vsel %vm3787, %v7395, 0
      %v7455 = vsel %vm3787, %v7397, 0
      %v7457 = vsel %vm3787, %v7399, 0
      %v7459 = vsel %vm3787, %v7401, 0
      %v7461 = vsel %vm3787, %v7403, 0
      %v7463 = vsel %vm3787, %v7405, 0
      %v7465 = vsel %vm3787, %v7407, 0
      %v7468 = vsel %vm3820, %v7432, 0
      %7470 = vmatprep.subr.bf16.mxu0 0
      %7471 = vmatpush1.bf16.msra.mxu0 %v7430
      %7472 = vmatprep.subr.bf16.mxu0 0
      %7473 = vmatpush1.bf16.msra.mxu0 %v7431
      %7474 = vmatprep.subr.bf16.mxu0 0
      %7475 = vmatpush1.bf16.msra.mxu0 %v7468
      %7476 = vmatprep.subr.bf16.mxu0 0
      %7477 = vmatpush1.bf16.msra.mxu0 0
      %7478 = vmatprep.subr.bf16.mxu0 0
      %7479 = vmatpush1.bf16.msra.mxu0 0
      %7480 = vmatprep.subr.bf16.mxu0 0
      %7481 = vmatpush1.bf16.msra.mxu0 0
      %7482 = vmatprep.subr.bf16.mxu0 0
      %7483 = vmatpush1.bf16.msra.mxu0 0
      %7484 = vmatprep.subr.bf16.mxu0 0
      %7485 = vmatpush1.bf16.msra.mxu0 0
      %7486 = vmatprep.subr.bf16.mxu0 0
      %7487 = vmatpush1.bf16.msra.mxu0 0
      %7488 = vmatprep.subr.bf16.mxu0 0
      %7489 = vmatpush1.bf16.msra.mxu0 0
      %7490 = vmatprep.subr.bf16.mxu0 0
      %7491 = vmatpush1.bf16.msra.mxu0 0
      %7492 = vmatprep.subr.bf16.mxu0 0
      %7493 = vmatpush1.bf16.msra.mxu0 0
      %7494 = vmatprep.subr.bf16.mxu0 0
      %7495 = vmatpush1.bf16.msra.mxu0 0
      %7496 = vmatprep.subr.bf16.mxu0 0
      %7497 = vmatpush1.bf16.msra.mxu0 0
      %7498 = vmatprep.subr.bf16.mxu0 0
      %7499 = vmatpush1.bf16.msra.mxu0 0
      %7500 = vmatprep.subr.bf16.mxu0 0
      %7501 = vmatpush1.bf16.msra.mxu0 0
      %7502 = vmatprep.mubr.bf16.mxu0 0
      %7503 = vmatmul.mubr.bf16.gmra.mrb[0].mxu0 %v7435
      %v7504 = vpop.f32.mrb[0].mxu0
      %v7505 = vadd.f32 %v7418, %v7504
      %v7506 = vpop.f32.mrb[0].mxu0
      %v7507 = vpop.f32.mrb[0].mxu0
      %v7508 = vadd.f32 %v7418, %v7507
      %v7509 = vpop.f32.mrb[0].mxu0
      %7510 = vmatprep.mubr.bf16.mxu0 0
      %7511 = vmatmul.mubr.bf16.gmra.mrb[0].mxu0 %v7437
      %v7512 = vpop.f32.mrb[0].mxu0
      %v7513 = vadd.f32 %v7418, %v7512
      %v7514 = vpop.f32.mrb[0].mxu0
      %v7515 = vpop.f32.mrb[0].mxu0
      %v7516 = vadd.f32 %v7418, %v7515
      %v7517 = vpop.f32.mrb[0].mxu0
      %7518 = vmatprep.mubr.bf16.mxu0 0
      %7519 = vmatmul.mubr.bf16.gmra.mrb[0].mxu0 %v7439
      %v7520 = vpop.f32.mrb[0].mxu0
      %v7521 = vadd.f32 %v7418, %v7520
      %v7522 = vpop.f32.mrb[0].mxu0
      %v7523 = vpop.f32.mrb[0].mxu0
      %v7524 = vadd.f32 %v7418, %v7523
      %v7525 = vpop.f32.mrb[0].mxu0
      %7526 = vmatprep.mubr.bf16.mxu0 0
      %7527 = vmatmul.mubr.bf16.gmra.mrb[0].mxu0 %v7441
      %v7528 = vpop.f32.mrb[0].mxu0
      %v7529 = vadd.f32 %v7418, %v7528
      %v7530 = vpop.f32.mrb[0].mxu0
      %v7531 = vpop.f32.mrb[0].mxu0
      %v7532 = vadd.f32 %v7418, %v7531
      %v7533 = vpop.f32.mrb[0].mxu0
      %7534 = vmatprep.mubr.bf16.mxu0 0
      %7535 = vmatmul.mubr.bf16.gmra.mrb[0].mxu0 %v7443
      %v7536 = vpop.f32.mrb[0].mxu0
      %v7537 = vadd.f32 %v7418, %v7536
      %v7538 = vpop.f32.mrb[0].mxu0
      %v7539 = vpop.f32.mrb[0].mxu0
      %v7540 = vadd.f32 %v7418, %v7539
      %v7541 = vpop.f32.mrb[0].mxu0
      %7542 = vmatprep.mubr.bf16.mxu0 0
      %7543 = vmatmul.mubr.bf16.gmra.mrb[0].mxu0 %v7445
      %v7544 = vpop.f32.mrb[0].mxu0
      %v7545 = vadd.f32 %v7418, %v7544
      %v7546 = vpop.f32.mrb[0].mxu0
      %v7547 = vpop.f32.mrb[0].mxu0
      %v7548 = vadd.f32 %v7418, %v7547
      %v7549 = vpop.f32.mrb[0].mxu0
      %7550 = vmatprep.mubr.bf16.mxu0 0
      %7551 = vmatmul.mubr.bf16.gmra.mrb[0].mxu0 %v7447
      %v7552 = vpop.f32.mrb[0].mxu0
      %v7553 = vadd.f32 %v7418, %v7552
      %v7554 = vpop.f32.mrb[0].mxu0
      %v7555 = vpop.f32.mrb[0].mxu0
      %v7556 = vadd.f32 %v7418, %v7555
      %v7557 = vpop.f32.mrb[0].mxu0
      %7558 = vmatprep.mubr.bf16.mxu0 0
      %7559 = vmatmul.mubr.bf16.gmra.mrb[0].mxu0 %v7449
      %v7560 = vpop.f32.mrb[0].mxu0
      %v7561 = vadd.f32 %v7418, %v7560
      %v7562 = vpop.f32.mrb[0].mxu0
      %v7563 = vpop.f32.mrb[0].mxu0
      %v7564 = vadd.f32 %v7418, %v7563
      %v7565 = vpop.f32.mrb[0].mxu0
      %7566 = vmatprep.mubr.bf16.mxu0 0
      %7567 = vmatmul.mubr.bf16.gmra.mrb[0].mxu0 %v7451
      %v7568 = vpop.f32.mrb[0].mxu0
      %v7569 = vadd.f32 %v7418, %v7568
      %v7570 = vpop.f32.mrb[0].mxu0
      %v7571 = vpop.f32.mrb[0].mxu0
      %v7572 = vadd.f32 %v7418, %v7571
      %v7573 = vpop.f32.mrb[0].mxu0
      %7574 = vmatprep.mubr.bf16.mxu0 0
      %7575 = vmatmul.mubr.bf16.gmra.mrb[0].mxu0 %v7453
      %v7576 = vpop.f32.mrb[0].mxu0
      %v7577 = vadd.f32 %v7418, %v7576
      %v7578 = vpop.f32.mrb[0].mxu0
      %v7579 = vpop.f32.mrb[0].mxu0
      %v7580 = vadd.f32 %v7418, %v7579
      %v7581 = vpop.f32.mrb[0].mxu0
      %7582 = vmatprep.mubr.bf16.mxu0 0
      %7583 = vmatmul.mubr.bf16.gmra.mrb[0].mxu0 %v7455
      %v7584 = vpop.f32.mrb[0].mxu0
      %v7585 = vadd.f32 %v7418, %v7584
      %v7586 = vpop.f32.mrb[0].mxu0
      %v7587 = vpop.f32.mrb[0].mxu0
      %v7588 = vadd.f32 %v7418, %v7587
      %v7589 = vpop.f32.mrb[0].mxu0
      %7590 = vmatprep.mubr.bf16.mxu0 0
      %7591 = vmatmul.mubr.bf16.gmra.mrb[0].mxu0 %v7457
      %v7592 = vpop.f32.mrb[0].mxu0
      %v7593 = vadd.f32 %v7418, %v7592
      %v7594 = vpop.f32.mrb[0].mxu0
      %v7595 = vpop.f32.mrb[0].mxu0
      %v7596 = vadd.f32 %v7418, %v7595
      %v7597 = vpop.f32.mrb[0].mxu0
      %7598 = vmatprep.mubr.bf16.mxu0 0
      %7599 = vmatmul.mubr.bf16.gmra.mrb[0].mxu0 %v7459
      %v7600 = vpop.f32.mrb[0].mxu0
      %v7601 = vadd.f32 %v7418, %v7600
      %v7602 = vpop.f32.mrb[0].mxu0
      %v7603 = vpop.f32.mrb[0].mxu0
      %v7604 = vadd.f32 %v7418, %v7603
      %v7605 = vpop.f32.mrb[0].mxu0
      %7606 = vmatprep.mubr.bf16.mxu0 0
      %7607 = vmatmul.mubr.bf16.gmra.mrb[0].mxu0 %v7461
      %v7608 = vpop.f32.mrb[0].mxu0
      %v7609 = vadd.f32 %v7418, %v7608
      %v7610 = vpop.f32.mrb[0].mxu0
      %v7611 = vpop.f32.mrb[0].mxu0
      %v7612 = vadd.f32 %v7418, %v7611
      %v7613 = vpop.f32.mrb[0].mxu0
      %7614 = vmatprep.mubr.bf16.mxu0 0
      %7615 = vmatmul.mubr.bf16.gmra.mrb[0].mxu0 %v7463
      %v7616 = vpop.f32.mrb[0].mxu0
      %v7617 = vadd.f32 %v7418, %v7616
      %v7618 = vpop.f32.mrb[0].mxu0
      %v7619 = vpop.f32.mrb[0].mxu0
      %v7620 = vadd.f32 %v7418, %v7619
      %v7621 = vpop.f32.mrb[0].mxu0
      %7622 = vmatprep.mubr.bf16.mxu0 0
      %7623 = vmatmul.mubr.bf16.gmra.mrb[0].mxu0 %v7465
      %v7624 = vpop.f32.mrb[0].mxu0
      %v7625 = vadd.f32 %v7418, %v7624
      %v7626 = vpop.f32.mrb[0].mxu0
      %v7627 = vpop.f32.mrb[0].mxu0
      %v7628 = vadd.f32 %v7418, %v7627
      %v7629 = vpop.f32.mrb[0].mxu0
      %7630 = vdwg.mxu0
      %v7631 = vadd.f32 %v7505, %v4544
      %v7632 = vadd.f32 %v7508, %v4545
      %v7633 = vadd.f32 %v7513, %v4546
      %v7634 = vadd.f32 %v7516, %v4547
      %v7635 = vadd.f32 %v7521, %v4548
      %v7636 = vadd.f32 %v7524, %v4549
      %v7637 = vadd.f32 %v7529, %v4550
      %v7638 = vadd.f32 %v7532, %v4551
      %v7639 = vadd.f32 %v7537, %v4552
      %v7640 = vadd.f32 %v7540, %v4553
      %v7641 = vadd.f32 %v7545, %v4554
      %v7642 = vadd.f32 %v7548, %v4555
      %v7643 = vadd.f32 %v7553, %v4556
      %v7644 = vadd.f32 %v7556, %v4557
      %v7645 = vadd.f32 %v7561, %v4558
      %v7646 = vadd.f32 %v7564, %v4559
      %v7647 = vadd.f32 %v7569, %v4560
      %v7648 = vadd.f32 %v7572, %v4561
      %v7649 = vadd.f32 %v7577, %v4562
      %v7650 = vadd.f32 %v7580, %v4563
      %v7651 = vadd.f32 %v7585, %v4564
      %v7652 = vadd.f32 %v7588, %v4565
      %v7653 = vadd.f32 %v7593, %v4566
      %v7654 = vadd.f32 %v7596, %v4567
      %v7655 = vadd.f32 %v7601, %v4568
      %v7656 = vadd.f32 %v7604, %v4569
      %v7657 = vadd.f32 %v7609, %v4570
      %v7658 = vadd.f32 %v7612, %v4571
      %v7659 = vadd.f32 %v7617, %v4572
      %v7660 = vadd.f32 %v7620, %v4573
      %v7661 = vadd.f32 %v7625, %v4574
      %v7662 = vadd.f32 %v7628, %v4575
      %v7663 = vmax.f32 %v7631, 0.0
      %v7664 = vmax.f32 %v7632, 0.0
      %v7665 = vmax.f32 %v7633, 0.0
      %v7666 = vmax.f32 %v7634, 0.0
      %v7667 = vmax.f32 %v7635, 0.0
      %v7668 = vmax.f32 %v7636, 0.0
      %v7669 = vmax.f32 %v7637, 0.0
      %v7670 = vmax.f32 %v7638, 0.0
      %v7671 = vmax.f32 %v7639, 0.0
      %v7672 = vmax.f32 %v7640, 0.0
      %v7673 = vmax.f32 %v7641, 0.0
      %v7674 = vmax.f32 %v7642, 0.0
      %v7675 = vmax.f32 %v7643, 0.0
      %v7676 = vmax.f32 %v7644, 0.0
      %v7677 = vmax.f32 %v7645, 0.0
      %v7678 = vmax.f32 %v7646, 0.0
      %v7679 = vmax.f32 %v7647, 0.0
      %v7680 = vmax.f32 %v7648, 0.0
      %v7681 = vmax.f32 %v7649, 0.0
      %v7682 = vmax.f32 %v7650, 0.0
      %v7683 = vmax.f32 %v7651, 0.0
      %v7684 = vmax.f32 %v7652, 0.0
      %v7685 = vmax.f32 %v7653, 0.0
      %v7686 = vmax.f32 %v7654, 0.0
      %v7687 = vmax.f32 %v7655, 0.0
      %v7688 = vmax.f32 %v7656, 0.0
      %v7689 = vmax.f32 %v7657, 0.0
      %v7690 = vmax.f32 %v7658, 0.0
      %v7691 = vmax.f32 %v7659, 0.0
      %v7692 = vmax.f32 %v7660, 0.0
      %v7693 = vmax.f32 %v7661, 0.0
      %v7694 = vmax.f32 %v7662, 0.0
      %7695 = vst.msk [vmem:[%s224] sm:$0xff] %vm3480, %v7663
      %7696 = vst.msk [vmem:[%s224 + $0x8] sm:$0xff] %vm3480, %v7664
      %7697 = vst.msk [vmem:[%s224 + $0x10] sm:$0xff] %vm3480, %v7665
      %7698 = vst.msk [vmem:[%s224 + $0x18] sm:$0xff] %vm3480, %v7666
      %7699 = vst.msk [vmem:[%s224 + $0x20] sm:$0xff] %vm3480, %v7667
      %7700 = vst.msk [vmem:[%s224 + $0x28] sm:$0xff] %vm3480, %v7668
      %7701 = vst.msk [vmem:[%s224 + $0x30] sm:$0xff] %vm3480, %v7669
      %7702 = vst.msk [vmem:[%s224 + $0x38] sm:$0xff] %vm3480, %v7670
      %7703 = vst.msk [vmem:[%s224 + $0x40] sm:$0xff] %vm3480, %v7671
      %7704 = vst.msk [vmem:[%s224 + $0x48] sm:$0xff] %vm3480, %v7672
      %7705 = vst.msk [vmem:[%s224 + $0x50] sm:$0xff] %vm3480, %v7673
      %7706 = vst.msk [vmem:[%s224 + $0x58] sm:$0xff] %vm3480, %v7674
      %7707 = vst.msk [vmem:[%s224 + $0x60] sm:$0xff] %vm3480, %v7675
      %7708 = vst.msk [vmem:[%s224 + $0x68] sm:$0xff] %vm3480, %v7676
      %7709 = vst.msk [vmem:[%s224 + $0x70] sm:$0xff] %vm3480, %v7677
      %7710 = vst.msk [vmem:[%s224 + $0x78] sm:$0xff] %vm3480, %v7678
      %7711 = vst.msk [vmem:[%s224 + $0x80] sm:$0xff] %vm3480, %v7679
      %7712 = vst.msk [vmem:[%s224 + $0x88] sm:$0xff] %vm3480, %v7680
      %7713 = vst.msk [vmem:[%s224 + $0x90] sm:$0xff] %vm3480, %v7681
      %7714 = vst.msk [vmem:[%s224 + $0x98] sm:$0xff] %vm3480, %v7682
      %7715 = vst.msk [vmem:[%s224 + $0xa0] sm:$0xff] %vm3480, %v7683
      %7716 = vst.msk [vmem:[%s224 + $0xa8] sm:$0xff] %vm3480, %v7684
      %7717 = vst.msk [vmem:[%s224 + $0xb0] sm:$0xff] %vm3480, %v7685
      %7718 = vst.msk [vmem:[%s224 + $0xb8] sm:$0xff] %vm3480, %v7686
      %7719 = vst.msk [vmem:[%s224 + $0xc0] sm:$0xff] %vm3480, %v7687
      %7720 = vst.msk [vmem:[%s224 + $0xc8] sm:$0xff] %vm3480, %v7688
      %7721 = vst.msk [vmem:[%s224 + $0xd0] sm:$0xff] %vm3480, %v7689
      %7722 = vst.msk [vmem:[%s224 + $0xd8] sm:$0xff] %vm3480, %v7690
      %7723 = vst.msk [vmem:[%s224 + $0xe0] sm:$0xff] %vm3480, %v7691
      %7724 = vst.msk [vmem:[%s224 + $0xe8] sm:$0xff] %vm3480, %v7692
      %7725 = vst.msk [vmem:[%s224 + $0xf0] sm:$0xff] %vm3480, %v7693
      %7726 = vst.msk [vmem:[%s224 + $0xf8] sm:$0xff] %vm3480, %v7694
      %p7727 = scmp.lt.s32.totalorder %s16, 1
      %s7728 = scalar_select %p7727, %s16, 1
      %s7729 = smul.addr %s7728, 32
      %s7730 = smul.addr %s7729, 8
      %s7731 = scalar_lea.vmem %s5, %s7730
      // Predicated region
      $region41: #{basic_block.1} parent=39 // pred_check
        %p7732 = pneg %p144
      $region42: #{basic_block.1} parent=39 // pred_check_branch
        %7734 = sbr.rel (%p7732) target = $region44
      $region43: #{basic_block.1} parent=39 // pred_region
        _
      $region44: #{basic_block.1} parent=39 // pred_fallthru
        _
    $region40: #{basic_block.1} parent=5 // pred_fallthru
      _
    %p7735 = scmp.le.s32.totalorder 2, %s11
    // Predicated region
    $region45: #{basic_block.1} parent=5 // pred_check
      %p7736 = pneg %p7735
    $region46: #{basic_block.1} parent=5 // pred_check_branch
      %7738 = sbr.rel (%p7736) target = $region48
    $region47: #{basic_block.1} parent=5 // pred_region
      %s7739 = ssub.s32 %s11, 2
      // Predicated region
      $region49: #{basic_block.1} parent=47 // pred_check
        %p7740 = pneg %p150
      $region50: #{basic_block.1} parent=47 // pred_check_branch
        %7742 = sbr.rel (%p7740) target = $region52
      $region51: #{basic_block.1} parent=47 // pred_region
        %p7743 = scmp.lt.s32.totalorder %s17, 1
        %s7744 = scalar_select %p7743, %s17, 1
        %s7745 = smul.addr %s7744, 32
        %s7746 = smul.addr %s7745, 8
        %s7747 = scalar_lea.vmem %s5, %s7746
      $region52: #{basic_block.1} parent=47 // pred_fallthru
        _
    $region48: #{basic_block.1} parent=5 // pred_fallthru
      _
  $region6: #{basic_block.1} parent=0 // loop_footer
    %s15 = sadd.s32 1, %s11
  $region7: #{basic_block.1} parent=0 // loop_footer_branch
    %10 = sbr.rel target = $region3
  $region8: #{basic_block.1} parent=0 // loop_exit
    _

</llo_original>
